<compile_context>
chip_gen: v6e
topology: v6e:2x2x1
jax: 0.10.0
libtpu: 0.0.40
codegen_flags: <defaults>
</compile_context>

<pallas_src>
import jax
import jax.numpy as jnp
from jax.experimental import pallas as pl
from jax.experimental.pallas import tpu as pltpu

MATMUL_DTYPE = jnp.bfloat16   # MXU operand dtype; accumulation stays f32.


# ---------------------------------------------------------------------------
# Kernel 1: fused embedding + layer-0 input projection (time-parallel).
#   gates_x = ((x @ We^T + be) @ Wih^T) + (b_ih + b_hh)
# ---------------------------------------------------------------------------
def _embed_proj_kernel(x_ref, we_ref, be_ref, wih_ref, b_ref, o_ref):
    emb = jnp.dot(x_ref[...].astype(we_ref.dtype), we_ref[...],
                  preferred_element_type=jnp.float32) + be_ref[...]
    # Dropout between embedding and LSTM: identity (inference).
    o_ref[...] = (jnp.dot(emb.astype(wih_ref.dtype), wih_ref[...],
                          preferred_element_type=jnp.float32)
                  + b_ref[...]).astype(o_ref.dtype)


def embed_and_project(x, we_t, be, wih_t, bias, *, tile=512):
    """x: (N, I).  we_t: (I, E) bf16.  wih_t: (E, 4H) bf16.  -> (N, 4H) f32."""
    n, in_dim = x.shape
    e = we_t.shape[1]
    four_h = wih_t.shape[1]
    tile = min(tile, n)
    return pl.pallas_call(
        _embed_proj_kernel,
        out_shape=jax.ShapeDtypeStruct((n, four_h), jnp.float32),
        grid_spec=pltpu.PrefetchScalarGridSpec(
            num_scalar_prefetch=0,
            grid=(pl.cdiv(n, tile),),
            in_specs=[
                pl.BlockSpec((tile, in_dim), lambda i: (i, 0)),
                pl.BlockSpec((in_dim, e), lambda i: (0, 0)),
                pl.BlockSpec((1, e), lambda i: (0, 0)),
                pl.BlockSpec((e, four_h), lambda i: (0, 0)),
                pl.BlockSpec((1, four_h), lambda i: (0, 0)),
            ],
            out_specs=pl.BlockSpec((tile, four_h), lambda i: (i, 0)),
        ),
        compiler_params=pltpu.CompilerParams(
            dimension_semantics=("parallel",)),
        cost_estimate=pl.CostEstimate(
            flops=2 * n * in_dim * e + 2 * n * e * four_h,
            transcendentals=0,
            bytes_accessed=(n * in_dim * 4 + in_dim * e * 2
                            + e * four_h * 2 + n * four_h * 4)),
    )(x, we_t, be, wih_t, bias)


# ---------------------------------------------------------------------------
# Kernel 2: plain input projection for layers > 0 (time-parallel).
#   gates_x = x @ Wih^T + (b_ih + b_hh)
# ---------------------------------------------------------------------------
def _proj_kernel(x_ref, w_ref, b_ref, o_ref):
    o_ref[...] = (jnp.dot(x_ref[...].astype(w_ref.dtype), w_ref[...],
                          preferred_element_type=jnp.float32)
                  + b_ref[...]).astype(o_ref.dtype)


def project(x, w_t, bias, *, tile=512):
    """x: (N, H) f32.  w_t: (H, 4H) bf16.  -> (N, 4H) f32."""
    n, in_dim = x.shape
    four_h = w_t.shape[1]
    tile = min(tile, n)
    return pl.pallas_call(
        _proj_kernel,
        out_shape=jax.ShapeDtypeStruct((n, four_h), jnp.float32),
        grid_spec=pltpu.PrefetchScalarGridSpec(
            num_scalar_prefetch=0,
            grid=(pl.cdiv(n, tile),),
            in_specs=[
                pl.BlockSpec((tile, in_dim), lambda i: (i, 0)),
                pl.BlockSpec((in_dim, four_h), lambda i: (0, 0)),
                pl.BlockSpec((1, four_h), lambda i: (0, 0)),
            ],
            out_specs=pl.BlockSpec((tile, four_h), lambda i: (i, 0)),
        ),
        compiler_params=pltpu.CompilerParams(
            dimension_semantics=("parallel",)),
        cost_estimate=pl.CostEstimate(
            flops=2 * n * in_dim * four_h,
            transcendentals=0,
            bytes_accessed=(n * in_dim * 4 + in_dim * four_h * 2
                            + n * four_h * 4)),
    )(x, w_t, bias)


# ---------------------------------------------------------------------------
# Kernel 3: recurrent part of one LSTM layer, time-major gates_x (S, B, 4H).
# One grid step = T_CHUNK timesteps; only h @ W_hh^T is on the serial path.
# Gate order follows PyTorch: [i, f, g, o]; bias already folded into gates_x.
# ---------------------------------------------------------------------------
def _lstm_recurrent_kernel(gx_ref, whh_hbm, out_ref, h_out_ref, c_out_ref,
                           w_sc, h_sc, c_sc, dma_sem):
    step = pl.program_id(0)

    @pl.when(step == 0)
    def _init():
        # Copy the constant recurrent weight into VMEM exactly once; the
        # scratch persists across grid steps (no per-step double buffering).
        cp = pltpu.make_async_copy(whh_hbm, w_sc, dma_sem)
        cp.start()
        cp.wait()
        h_sc[...] = jnp.zeros_like(h_sc)
        c_sc[...] = jnp.zeros_like(c_sc)

    hid = h_sc.shape[-1]
    w = w_sc[...]                       # (H, 4H) bf16, hoisted out of the loop
    t_chunk = out_ref.shape[0]

    def step_fn(t, carry):
        h, c = carry
        gates = gx_ref[t] + jnp.dot(h.astype(w.dtype), w,
                                    preferred_element_type=jnp.float32)
        i_g = jax.nn.sigmoid(gates[:, 0 * hid:1 * hid])
        f_g = jax.nn.sigmoid(gates[:, 1 * hid:2 * hid])
        g_g = jnp.tanh(gates[:, 2 * hid:3 * hid])
        o_g = jax.nn.sigmoid(gates[:, 3 * hid:4 * hid])
        c_new = f_g * c + i_g * g_g
        h_new = o_g * jnp.tanh(c_new)
        out_ref[t] = h_new.astype(out_ref.dtype)
        return h_new, c_new

    h_f, c_f = jax.lax.fori_loop(0, t_chunk, step_fn,
                                 (h_sc[...], c_sc[...]), unroll=True)
    h_sc[...] = h_f
    c_sc[...] = c_f

    @pl.when(step == pl.num_programs(0) - 1)
    def _finalize():
        h_out_ref[...] = h_f.astype(h_out_ref.dtype)
        c_out_ref[...] = c_f.astype(c_out_ref.dtype)


def lstm_recurrent(gates_x_tm, w_hh_t, *, t_chunk):
    """gates_x_tm: (S, B, 4H) f32 time-major (bias already included).
    w_hh_t: (H, 4H) bf16.  Returns (out (S,B,H) f32, h_T (B,H), c_T (B,H))."""
    s, b, four_h = gates_x_tm.shape
    hid = w_hh_t.shape[0]
    assert four_h == 4 * hid and s % t_chunk == 0

    cost = pl.CostEstimate(
        flops=2 * s * b * hid * four_h + 10 * s * b * four_h,
        transcendentals=5 * s * b * hid,
        bytes_accessed=(s * b * four_h * 4 + s * b * hid * 4
                        + hid * four_h * int(w_hh_t.dtype.itemsize)),
    )
    return pl.pallas_call(
        _lstm_recurrent_kernel,
        out_shape=(
            jax.ShapeDtypeStruct((s, b, hid), jnp.float32),
            jax.ShapeDtypeStruct((b, hid), jnp.float32),
            jax.ShapeDtypeStruct((b, hid), jnp.float32),
        ),
        grid_spec=pltpu.PrefetchScalarGridSpec(
            num_scalar_prefetch=0,
            grid=(s // t_chunk,),
            in_specs=[
                pl.BlockSpec((t_chunk, b, four_h), lambda i: (i, 0, 0)),
                pl.BlockSpec(memory_space=pl.ANY),      # W_hh^T stays in HBM
            ],
            out_specs=[
                pl.BlockSpec((t_chunk, b, hid), lambda i: (i, 0, 0)),
                pl.BlockSpec((b, hid), lambda i: (0, 0)),
                pl.BlockSpec((b, hid), lambda i: (0, 0)),
            ],
            scratch_shapes=[
                pltpu.VMEM((hid, four_h), w_hh_t.dtype),   # resident W_hh^T
                pltpu.VMEM((b, hid), jnp.float32),          # h carry
                pltpu.VMEM((b, hid), jnp.float32),          # c carry
                pltpu.SemaphoreType.DMA,
            ],
        ),
        compiler_params=pltpu.CompilerParams(
            dimension_semantics=("arbitrary",)),   # sequential recurrence
        cost_estimate=cost,
    )(gates_x_tm, w_hh_t)


# ---------------------------------------------------------------------------
# Parameters (PyTorch-style init), one-time layout/dtype prep, forward.
# ---------------------------------------------------------------------------
def init_encoder_params(key, input_dim, emb_dim, hid_dim, n_layers):
    params = {}
    k_emb_w, k_emb_b, key = jax.random.split(key, 3)
    bound_e = 1.0 / jnp.sqrt(input_dim)
    params["emb_w"] = jax.random.uniform(
        k_emb_w, (emb_dim, input_dim), jnp.float32, -bound_e, bound_e)
    params["emb_b"] = jax.random.uniform(
        k_emb_b, (emb_dim,), jnp.float32, -bound_e, bound_e)

    bound_h = 1.0 / jnp.sqrt(hid_dim)
    params["lstm"] = []
    for layer in range(n_layers):
        in_size = emb_dim if layer == 0 else hid_dim
        key, k1, k2, k3, k4 = jax.random.split(key, 5)
        params["lstm"].append({
            "w_ih": jax.random.uniform(k1, (4 * hid_dim, in_size),
                                       jnp.float32, -bound_h, bound_h),
            "w_hh": jax.random.uniform(k2, (4 * hid_dim, hid_dim),
                                       jnp.float32, -bound_h, bound_h),
            "b_ih": jax.random.uniform(k3, (4 * hid_dim,),
                                       jnp.float32, -bound_h, bound_h),
            "b_hh": jax.random.uniform(k4, (4 * hid_dim,),
                                       jnp.float32, -bound_h, bound_h),
        })
    return params


def prepare_encoder_params(params, matmul_dtype=MATMUL_DTYPE):
    """One-time prep: transpose weights, fold LSTM biases, cast MXU operands
    to bf16 (gate math / accumulation stay f32)."""
    prep = {
        "emb_w_t": params["emb_w"].T.astype(matmul_dtype),            # (I, E)
        "emb_b": params["emb_b"].reshape(1, -1).astype(jnp.float32),  # (1, E)
        "layers": [],
    }
    for p in params["lstm"]:
        prep["layers"].append({
            "w_ih_t": p["w_ih"].T.astype(matmul_dtype),               # (in, 4H)
            "w_hh_t": p["w_hh"].T.astype(matmul_dtype),               # (H, 4H)
            "bias": (p["b_ih"] + p["b_hh"]).reshape(1, -1).astype(jnp.float32),
        })
    return prep


def _pick_time_chunk(seq, max_chunk=16):
    c = min(seq, max_chunk)
    while seq % c:
        c -= 1
    return c


@jax.jit
def encoder_forward(src, prep):
    """src: (batch, seq, input_dim) -> (hidden, cell), each (n_layers, batch, hid)."""
    batch, seq, input_dim = src.shape
    hid = prep["layers"][0]["w_hh_t"].shape[0]
    t_chunk = _pick_time_chunk(seq)

    # One time-major transpose on the raw input (cheaper than transposing
    # the embedded tensor; the embedded tensor never round-trips HBM at all).
    x_tm = jnp.transpose(src, (1, 0, 2)).reshape(seq * batch, input_dim)

    hiddens, cells = [], []
    layer_in = None
    for li, p in enumerate(prep["layers"]):
        if li == 0:
            gx = embed_and_project(x_tm, prep["emb_w_t"], prep["emb_b"],
                                   p["w_ih_t"], p["bias"])
        else:
            gx = project(layer_in, p["w_ih_t"], p["bias"])
        gx = gx.reshape(seq, batch, 4 * hid)
        out, h_t, c_t = lstm_recurrent(gx, p["w_hh_t"], t_chunk=t_chunk)
        # Inter-layer dropout: identity (inference).
        layer_in = out.reshape(seq * batch, hid)
        hiddens.append(h_t)
        cells.append(c_t)

    return jnp.stack(hiddens, 0), jnp.stack(cells, 0)


# ---------------------------------------------------------------------------
# Pure-JAX reference mirroring the kernel dtype flow (for self-check).
# ---------------------------------------------------------------------------
def encoder_reference(src, prep):
    batch, seq, input_dim = src.shape
    x = src.reshape(batch * seq, input_dim)
    emb = jnp.dot(x.astype(prep["emb_w_t"].dtype), prep["emb_w_t"],
                  preferred_element_type=jnp.float32) + prep["emb_b"]
    layer_in = emb.reshape(batch, seq, -1)
    h_list, c_list = [], []
    for p in prep["layers"]:
        hid = p["w_hh_t"].shape[0]
        gx = jnp.dot(layer_in.reshape(batch * seq, -1).astype(p["w_ih_t"].dtype),
                     p["w_ih_t"], preferred_element_type=jnp.float32) + p["bias"]
        gx = gx.reshape(batch, seq, 4 * hid)
        h = jnp.zeros((batch, hid), jnp.float32)
        c = jnp.zeros((batch, hid), jnp.float32)
        outs = []
        for t in range(seq):
            gates = gx[:, t] + jnp.dot(h.astype(p["w_hh_t"].dtype), p["w_hh_t"],
                                       preferred_element_type=jnp.float32)
            i_g = jax.nn.sigmoid(gates[:, 0 * hid:1 * hid])
            f_g = jax.nn.sigmoid(gates[:, 1 * hid:2 * hid])
            g_g = jnp.tanh(gates[:, 2 * hid:3 * hid])
            o_g = jax.nn.sigmoid(gates[:, 3 * hid:4 * hid])
            c = f_g * c + i_g * g_g
            h = o_g * jnp.tanh(c)
            outs.append(h)
        layer_in = jnp.stack(outs, axis=1)
        h_list.append(h)
        c_list.append(c)
    return jnp.stack(h_list, 0), jnp.stack(c_list, 0)


if __name__ == "__main__":
    INPUT_DIM, EMB_DIM, HID_DIM, N_LAYERS = 16, 32, 32, 2
    BATCH, SEQ = 2, 8

    key = jax.random.PRNGKey(0)
    k_params, k_src = jax.random.split(key)
    params = init_encoder_params(k_params, INPUT_DIM, EMB_DIM, HID_DIM, N_LAYERS)
    prep = prepare_encoder_params(params)
    src = jax.random.normal(k_src, (BATCH, SEQ, INPUT_DIM), jnp.float32)

    hidden, cell = encoder_forward(src, prep)
    jax.block_until_ready((hidden, cell))

    assert hidden.shape == (N_LAYERS, BATCH, HID_DIM)
    assert cell.shape == (N_LAYERS, BATCH, HID_DIM)

    h_ref, c_ref = encoder_reference(src, prep)
    assert jnp.allclose(hidden, h_ref, atol=1e-2), "hidden mismatch vs reference"
    assert jnp.allclose(cell, c_ref, atol=2e-2), "cell mismatch vs reference"

    print("KERNEL_OK")
</pallas_src>

<mosaic_0001>
module attributes {stable_mosaic.version = 11 : i64} {
  func.func @_proj_kernel(%arg0: i32, %arg1: memref<16x32xf32, #tpu.memory_space<vmem>>, %arg2: memref<32x128xbf16, #tpu.memory_space<vmem>>, %arg3: memref<1x128xf32, #tpu.memory_space<vmem>>, %arg4: memref<16x128xf32, #tpu.memory_space<vmem>>) attributes {dimension_semantics = [#tpu.dimension_semantics<parallel>], iteration_bounds = array<i64: 1>, scalar_prefetch = 0 : i64, scratch_operands = 0 : i64, tpu.core_type = #tpu.core_type<tc>, window_params = [{transform_indices = @transform_0, window_bounds = array<i64: 16, 32>}, {pipeline_mode = #tpu.pipeline_mode<synchronous>, transform_indices = @transform_1, window_bounds = array<i64: 32, 128>}, {pipeline_mode = #tpu.pipeline_mode<synchronous>, transform_indices = @transform_2, window_bounds = array<i64: 1, 128>}, {transform_indices = @transform_3, window_bounds = array<i64: 16, 128>}]} {
    %c0 = arith.constant 0 : index
    %c0_0 = arith.constant 0 : index
    %0 = vector.load %arg1[%c0, %c0_0] : memref<16x32xf32, #tpu.memory_space<vmem>>, vector<16x32xf32>
    %1 = arith.truncf %0 : vector<16x32xf32> to vector<16x32xbf16>
    %c0_1 = arith.constant 0 : index
    %c0_2 = arith.constant 0 : index
    %2 = vector.load %arg2[%c0_1, %c0_2] : memref<32x128xbf16, #tpu.memory_space<vmem>>, vector<32x128xbf16>
    %cst = arith.constant dense<0.000000e+00> : vector<16x128xf32>
    %3 = tpu.matmul %1, %2, %cst {dimension_numbers = #tpu.dot_dimension_numbers<[1], [0], [0], [1], [0, 0, 1, 1], [], []>} : vector<16x32xbf16>, vector<32x128xbf16>, vector<16x128xf32> -> vector<16x128xf32>
    %c0_3 = arith.constant 0 : index
    %c0_4 = arith.constant 0 : index
    %4 = vector.load %arg3[%c0_3, %c0_4] : memref<1x128xf32, #tpu.memory_space<vmem>>, vector<1x128xf32>
    %5 = vector.broadcast %4 : vector<1x128xf32> to vector<16x128xf32>
    %6 = arith.addf %3, %5 : vector<16x128xf32>
    %c0_5 = arith.constant 0 : index
    %c0_6 = arith.constant 0 : index
    %7 = vector.load %arg4[%c0_5, %c0_6] : memref<16x128xf32, #tpu.memory_space<vmem>>, vector<16x128xf32>
    tpu.vector_store %arg4[%c0_5, %c0_6], %6 {strides = array<i32>} : memref<16x128xf32, #tpu.memory_space<vmem>>, vector<16x128xf32>,
    return
  }
  func.func @transform_0(%arg0: i32) -> (i32, i32) {
    %c0_i32 = arith.constant 0 : i32
    %c0_i32_0 = arith.constant 0 : i32
    return %arg0, %c0_i32 : i32, i32
  }
  func.func @transform_1(%arg0: i32) -> (i32, i32) {
    %c0_i32 = arith.constant 0 : i32
    %c0_i32_0 = arith.constant 0 : i32
    %c0_i32_1 = arith.constant 0 : i32
    return %c0_i32, %c0_i32_0 : i32, i32
  }
  func.func @transform_2(%arg0: i32) -> (i32, i32) {
    %c0_i32 = arith.constant 0 : i32
    %c0_i32_0 = arith.constant 0 : i32
    %c0_i32_1 = arith.constant 0 : i32
    return %c0_i32, %c0_i32_0 : i32, i32
  }
  func.func @transform_3(%arg0: i32) -> (i32, i32) {
    %c0_i32 = arith.constant 0 : i32
    %c0_i32_0 = arith.constant 0 : i32
    return %arg0, %c0_i32 : i32, i32
  }
}

module attributes {stable_mosaic.version = 11 : i64} {
  func.func @_embed_proj_kernel(%arg0: i32, %arg1: memref<16x16xf32, #tpu.memory_space<vmem>>, %arg2: memref<16x32xbf16, #tpu.memory_space<vmem>>, %arg3: memref<1x32xf32, #tpu.memory_space<vmem>>, %arg4: memref<32x128xbf16, #tpu.memory_space<vmem>>, %arg5: memref<1x128xf32, #tpu.memory_space<vmem>>, %arg6: memref<16x128xf32, #tpu.memory_space<vmem>>) attributes {dimension_semantics = [#tpu.dimension_semantics<parallel>], iteration_bounds = array<i64: 1>, scalar_prefetch = 0 : i64, scratch_operands = 0 : i64, tpu.core_type = #tpu.core_type<tc>, window_params = [{transform_indices = @transform_0, window_bounds = array<i64: 16, 16>}, {pipeline_mode = #tpu.pipeline_mode<synchronous>, transform_indices = @transform_1, window_bounds = array<i64: 16, 32>}, {pipeline_mode = #tpu.pipeline_mode<synchronous>, transform_indices = @transform_2, window_bounds = array<i64: 1, 32>}, {pipeline_mode = #tpu.pipeline_mode<synchronous>, transform_indices = @transform_3, window_bounds = array<i64: 32, 128>}, {pipeline_mode = #tpu.pipeline_mode<synchronous>, transform_indices = @transform_4, window_bounds = array<i64: 1, 128>}, {transform_indices = @transform_5, window_bounds = array<i64: 16, 128>}]} {
    %c0 = arith.constant 0 : index
    %c0_0 = arith.constant 0 : index
    %0 = vector.load %arg1[%c0, %c0_0] : memref<16x16xf32, #tpu.memory_space<vmem>>, vector<16x16xf32>
    %1 = arith.truncf %0 : vector<16x16xf32> to vector<16x16xbf16>
    %c0_1 = arith.constant 0 : index
    %c0_2 = arith.constant 0 : index
    %2 = vector.load %arg2[%c0_1, %c0_2] : memref<16x32xbf16, #tpu.memory_space<vmem>>, vector<16x32xbf16>
    %cst = arith.constant dense<0.000000e+00> : vector<16x32xf32>
    %3 = tpu.matmul %1, %2, %cst {dimension_numbers = #tpu.dot_dimension_numbers<[1], [0], [0], [1], [0, 0, 1, 1], [], []>} : vector<16x16xbf16>, vector<16x32xbf16>, vector<16x32xf32> -> vector<16x32xf32>
    %c0_3 = arith.constant 0 : index
    %c0_4 = arith.constant 0 : index
    %4 = vector.load %arg3[%c0_3, %c0_4] : memref<1x32xf32, #tpu.memory_space<vmem>>, vector<1x32xf32>
    %5 = vector.broadcast %4 : vector<1x32xf32> to vector<16x32xf32>
    %6 = arith.addf %3, %5 : vector<16x32xf32>
    %7 = arith.truncf %6 : vector<16x32xf32> to vector<16x32xbf16>
    %c0_5 = arith.constant 0 : index
    %c0_6 = arith.constant 0 : index
    %8 = vector.load %arg4[%c0_5, %c0_6] : memref<32x128xbf16, #tpu.memory_space<vmem>>, vector<32x128xbf16>
    %cst_7 = arith.constant dense<0.000000e+00> : vector<16x128xf32>
    %9 = tpu.matmul %7, %8, %cst_7 {dimension_numbers = #tpu.dot_dimension_numbers<[1], [0], [0], [1], [0, 0, 1, 1], [], []>} : vector<16x32xbf16>, vector<32x128xbf16>, vector<16x128xf32> -> vector<16x128xf32>
    %c0_8 = arith.constant 0 : index
    %c0_9 = arith.constant 0 : index
    %10 = vector.load %arg5[%c0_8, %c0_9] : memref<1x128xf32, #tpu.memory_space<vmem>>, vector<1x128xf32>
    %11 = vector.broadcast %10 : vector<1x128xf32> to vector<16x128xf32>
    %12 = arith.addf %9, %11 : vector<16x128xf32>
    %c0_10 = arith.constant 0 : index
    %c0_11 = arith.constant 0 : index
    %13 = vector.load %arg6[%c0_10, %c0_11] : memref<16x128xf32, #tpu.memory_space<vmem>>, vector<16x128xf32>
    tpu.vector_store %arg6[%c0_10, %c0_11], %12 {strides = array<i32>} : memref<16x128xf32, #tpu.memory_space<vmem>>, vector<16x128xf32>,
    return
  }
  func.func @transform_0(%arg0: i32) -> (i32, i32) {
    %c0_i32 = arith.constant 0 : i32
    %c0_i32_0 = arith.constant 0 : i32
    return %arg0, %c0_i32 : i32, i32
  }
  func.func @transform_1(%arg0: i32) -> (i32, i32) {
    %c0_i32 = arith.constant 0 : i32
    %c0_i32_0 = arith.constant 0 : i32
    %c0_i32_1 = arith.constant 0 : i32
    return %c0_i32, %c0_i32_0 : i32, i32
  }
  func.func @transform_2(%arg0: i32) -> (i32, i32) {
    %c0_i32 = arith.constant 0 : i32
    %c0_i32_0 = arith.constant 0 : i32
    %c0_i32_1 = arith.constant 0 : i32
    return %c0_i32, %c0_i32_0 : i32, i32
  }
  func.func @transform_3(%arg0: i32) -> (i32, i32) {
    %c0_i32 = arith.constant 0 : i32
    %c0_i32_0 = arith.constant 0 : i32
    %c0_i32_1 = arith.constant 0 : i32
    return %c0_i32, %c0_i32_0 : i32, i32
  }
  func.func @transform_4(%arg0: i32) -> (i32, i32) {
    %c0_i32 = arith.constant 0 : i32
    %c0_i32_0 = arith.constant 0 : i32
    %c0_i32_1 = arith.constant 0 : i32
    return %c0_i32, %c0_i32_0 : i32, i32
  }
  func.func @transform_5(%arg0: i32) -> (i32, i32) {
    %c0_i32 = arith.constant 0 : i32
    %c0_i32_0 = arith.constant 0 : i32
    return %arg0, %c0_i32 : i32, i32
  }
}

module attributes {stable_mosaic.version = 11 : i64} {
  func.func @_lstm_recurrent_kernel(%arg0: i32, %arg1: memref<8x2x128xf32, #tpu.memory_space<vmem>>, %arg2: memref<32x128xbf16, #tpu.memory_space<any>>, %arg3: memref<8x2x32xf32, #tpu.memory_space<vmem>>, %arg4: memref<2x32xf32, #tpu.memory_space<vmem>>, %arg5: memref<2x32xf32, #tpu.memory_space<vmem>>, %arg6: memref<32x128xbf16, #tpu.memory_space<vmem>>, %arg7: memref<2x32xf32, #tpu.memory_space<vmem>>, %arg8: memref<2x32xf32, #tpu.memory_space<vmem>>, %arg9: memref<!tpu.dma_semaphore, #tpu.memory_space<semaphore_mem>>) attributes {dimension_semantics = [#tpu.dimension_semantics<arbitrary>], iteration_bounds = array<i64: 1>, scalar_prefetch = 0 : i64, scratch_operands = 4 : i64, tpu.core_type = #tpu.core_type<tc>, window_params = [{transform_indices = @transform_0, window_bounds = array<i64: 8, 2, 128>}, {}, {transform_indices = @transform_2, window_bounds = array<i64: 8, 2, 32>}, {pipeline_mode = #tpu.pipeline_mode<synchronous>, transform_indices = @transform_3, window_bounds = array<i64: 2, 32>}, {pipeline_mode = #tpu.pipeline_mode<synchronous>, transform_indices = @transform_4, window_bounds = array<i64: 2, 32>}]} {
    %c0_i32 = arith.constant 0 : i32
    %0 = arith.cmpi eq, %arg0, %c0_i32 : i32
    %1 = arith.extui %0 : i1 to i32
    %c0_i32_0 = arith.constant 0 : i32
    %2 = arith.cmpi ne, %1, %c0_i32_0 : i32
    scf.if %2 {
      tpu.enqueue_dma source(%arg2 : memref<32x128xbf16, #tpu.memory_space<any>>) target(%arg6 : memref<32x128xbf16, #tpu.memory_space<vmem>>) target_semaphore(%arg9 : memref<!tpu.dma_semaphore, #tpu.memory_space<semaphore_mem>>)
      tpu.wait_dma2 semaphore(%arg9 : memref<!tpu.dma_semaphore, #tpu.memory_space<semaphore_mem>>) src(%arg2 : memref<32x128xbf16, #tpu.memory_space<any>>) dst(%arg6 : memref<32x128xbf16, #tpu.memory_space<vmem>>)
      %cst_76 = arith.constant 0.000000e+00 : f32
      %291 = vector.broadcast %cst_76 : f32 to vector<2x32xf32>
      %c0_77 = arith.constant 0 : index
      %c0_78 = arith.constant 0 : index
      %292 = vector.load %arg7[%c0_77, %c0_78] : memref<2x32xf32, #tpu.memory_space<vmem>>, vector<2x32xf32>
      tpu.vector_store %arg7[%c0_77, %c0_78], %291 {strides = array<i32>} : memref<2x32xf32, #tpu.memory_space<vmem>>, vector<2x32xf32>,
      %cst_79 = arith.constant 0.000000e+00 : f32
      %293 = vector.broadcast %cst_79 : f32 to vector<2x32xf32>
      %c0_80 = arith.constant 0 : index
      %c0_81 = arith.constant 0 : index
      %294 = vector.load %arg8[%c0_80, %c0_81] : memref<2x32xf32, #tpu.memory_space<vmem>>, vector<2x32xf32>
      tpu.vector_store %arg8[%c0_80, %c0_81], %293 {strides = array<i32>} : memref<2x32xf32, #tpu.memory_space<vmem>>, vector<2x32xf32>,
    } else {
    }
    %c0 = arith.constant 0 : index
    %c0_1 = arith.constant 0 : index
    %3 = vector.load %arg6[%c0, %c0_1] : memref<32x128xbf16, #tpu.memory_space<vmem>>, vector<32x128xbf16>
    %c0_2 = arith.constant 0 : index
    %c0_3 = arith.constant 0 : index
    %4 = vector.load %arg7[%c0_2, %c0_3] : memref<2x32xf32, #tpu.memory_space<vmem>>, vector<2x32xf32>
    %c0_4 = arith.constant 0 : index
    %c0_5 = arith.constant 0 : index
    %5 = vector.load %arg8[%c0_4, %c0_5] : memref<2x32xf32, #tpu.memory_space<vmem>>, vector<2x32xf32>
    %c0_i32_6 = arith.constant 0 : i32
    %6 = arith.index_cast %c0_i32_6 : i32 to index
    %c0_7 = arith.constant 0 : index
    %c0_8 = arith.constant 0 : index
    %7 = vector.load %arg1[%6, %c0_7, %c0_8] : memref<8x2x128xf32, #tpu.memory_space<vmem>>, vector<1x2x128xf32>
    %8 = vector.shape_cast %7 : vector<1x2x128xf32> to vector<2x128xf32>
    %9 = arith.truncf %4 : vector<2x32xf32> to vector<2x32xbf16>
    %cst = arith.constant dense<0.000000e+00> : vector<2x128xf32>
    %10 = tpu.matmul %9, %3, %cst {dimension_numbers = #tpu.dot_dimension_numbers<[1], [0], [0], [1], [0, 0, 1, 1], [], []>} : vector<2x32xbf16>, vector<32x128xbf16>, vector<2x128xf32> -> vector<2x128xf32>
    %11 = arith.addf %8, %10 : vector<2x128xf32>
    %12 = vector.extract_strided_slice %11 {offsets = [0, 0], sizes = [2, 32], strides = [1, 1]} : vector<2x128xf32> to vector<2x32xf32>
    %13 = arith.negf %12 : vector<2x32xf32>
    %14 = math.exp %13 : vector<2x32xf32>
    %cst_9 = arith.constant 1.000000e+00 : f32
    %15 = vector.broadcast %cst_9 : f32 to vector<2x32xf32>
    %16 = arith.addf %15, %14 : vector<2x32xf32>
    %17 = arith.divf %15, %16 : vector<2x32xf32>
    %18 = vector.extract_strided_slice %11 {offsets = [0, 32], sizes = [2, 32], strides = [1, 1]} : vector<2x128xf32> to vector<2x32xf32>
    %19 = arith.negf %18 : vector<2x32xf32>
    %20 = math.exp %19 : vector<2x32xf32>
    %cst_10 = arith.constant 1.000000e+00 : f32
    %21 = vector.broadcast %cst_10 : f32 to vector<2x32xf32>
    %22 = arith.addf %21, %20 : vector<2x32xf32>
    %23 = arith.divf %21, %22 : vector<2x32xf32>
    %24 = vector.extract_strided_slice %11 {offsets = [0, 64], sizes = [2, 32], strides = [1, 1]} : vector<2x128xf32> to vector<2x32xf32>
    %25 = math.tanh %24 : vector<2x32xf32>
    %26 = vector.extract_strided_slice %11 {offsets = [0, 96], sizes = [2, 32], strides = [1, 1]} : vector<2x128xf32> to vector<2x32xf32>
    %27 = arith.negf %26 : vector<2x32xf32>
    %28 = math.exp %27 : vector<2x32xf32>
    %cst_11 = arith.constant 1.000000e+00 : f32
    %29 = vector.broadcast %cst_11 : f32 to vector<2x32xf32>
    %30 = arith.addf %29, %28 : vector<2x32xf32>
    %31 = arith.divf %29, %30 : vector<2x32xf32>
    %32 = arith.mulf %23, %5 : vector<2x32xf32>
    %33 = arith.mulf %17, %25 : vector<2x32xf32>
    %34 = arith.addf %32, %33 : vector<2x32xf32>
    %35 = math.tanh %34 : vector<2x32xf32>
    %36 = arith.mulf %31, %35 : vector<2x32xf32>
    %37 = arith.index_cast %c0_i32_6 : i32 to index
    %c0_12 = arith.constant 0 : index
    %c0_13 = arith.constant 0 : index
    %38 = vector.load %arg3[%37, %c0_12, %c0_13] : memref<8x2x32xf32, #tpu.memory_space<vmem>>, vector<1x2x32xf32>
    %39 = vector.shape_cast %38 : vector<1x2x32xf32> to vector<2x32xf32>
    %40 = vector.shape_cast %36 : vector<2x32xf32> to vector<1x2x32xf32>
    tpu.vector_store %arg3[%37, %c0_12, %c0_13], %40 {strides = array<i32>} : memref<8x2x32xf32, #tpu.memory_space<vmem>>, vector<1x2x32xf32>,
    %c1_i32 = arith.constant 1 : i32
    %41 = arith.index_cast %c1_i32 : i32 to index
    %c0_14 = arith.constant 0 : index
    %c0_15 = arith.constant 0 : index
    %42 = vector.load %arg1[%41, %c0_14, %c0_15] : memref<8x2x128xf32, #tpu.memory_space<vmem>>, vector<1x2x128xf32>
    %43 = vector.shape_cast %42 : vector<1x2x128xf32> to vector<2x128xf32>
    %44 = arith.truncf %36 : vector<2x32xf32> to vector<2x32xbf16>
    %cst_16 = arith.constant dense<0.000000e+00> : vector<2x128xf32>
    %45 = tpu.matmul %44, %3, %cst_16 {dimension_numbers = #tpu.dot_dimension_numbers<[1], [0], [0], [1], [0, 0, 1, 1], [], []>} : vector<2x32xbf16>, vector<32x128xbf16>, vector<2x128xf32> -> vector<2x128xf32>
    %46 = arith.addf %43, %45 : vector<2x128xf32>
    %47 = vector.extract_strided_slice %46 {offsets = [0, 0], sizes = [2, 32], strides = [1, 1]} : vector<2x128xf32> to vector<2x32xf32>
    %48 = arith.negf %47 : vector<2x32xf32>
    %49 = math.exp %48 : vector<2x32xf32>
    %cst_17 = arith.constant 1.000000e+00 : f32
    %50 = vector.broadcast %cst_17 : f32 to vector<2x32xf32>
    %51 = arith.addf %50, %49 : vector<2x32xf32>
    %52 = arith.divf %50, %51 : vector<2x32xf32>
    %53 = vector.extract_strided_slice %46 {offsets = [0, 32], sizes = [2, 32], strides = [1, 1]} : vector<2x128xf32> to vector<2x32xf32>
    %54 = arith.negf %53 : vector<2x32xf32>
    %55 = math.exp %54 : vector<2x32xf32>
    %cst_18 = arith.constant 1.000000e+00 : f32
    %56 = vector.broadcast %cst_18 : f32 to vector<2x32xf32>
    %57 = arith.addf %56, %55 : vector<2x32xf32>
    %58 = arith.divf %56, %57 : vector<2x32xf32>
    %59 = vector.extract_strided_slice %46 {offsets = [0, 64], sizes = [2, 32], strides = [1, 1]} : vector<2x128xf32> to vector<2x32xf32>
    %60 = math.tanh %59 : vector<2x32xf32>
    %61 = vector.extract_strided_slice %46 {offsets = [0, 96], sizes = [2, 32], strides = [1, 1]} : vector<2x128xf32> to vector<2x32xf32>
    %62 = arith.negf %61 : vector<2x32xf32>
    %63 = math.exp %62 : vector<2x32xf32>
    %cst_19 = arith.constant 1.000000e+00 : f32
    %64 = vector.broadcast %cst_19 : f32 to vector<2x32xf32>
    %65 = arith.addf %64, %63 : vector<2x32xf32>
    %66 = arith.divf %64, %65 : vector<2x32xf32>
    %67 = arith.mulf %58, %34 : vector<2x32xf32>
    %68 = arith.mulf %52, %60 : vector<2x32xf32>
    %69 = arith.addf %67, %68 : vector<2x32xf32>
    %70 = math.tanh %69 : vector<2x32xf32>
    %71 = arith.mulf %66, %70 : vector<2x32xf32>
    %72 = arith.index_cast %c1_i32 : i32 to index
    %c0_20 = arith.constant 0 : index
    %c0_21 = arith.constant 0 : index
    %73 = vector.load %arg3[%72, %c0_20, %c0_21] : memref<8x2x32xf32, #tpu.memory_space<vmem>>, vector<1x2x32xf32>
    %74 = vector.shape_cast %73 : vector<1x2x32xf32> to vector<2x32xf32>
    %75 = vector.shape_cast %71 : vector<2x32xf32> to vector<1x2x32xf32>
    tpu.vector_store %arg3[%72, %c0_20, %c0_21], %75 {strides = array<i32>} : memref<8x2x32xf32, #tpu.memory_space<vmem>>, vector<1x2x32xf32>,
    %c2_i32 = arith.constant 2 : i32
    %76 = arith.index_cast %c2_i32 : i32 to index
    %c0_22 = arith.constant 0 : index
    %c0_23 = arith.constant 0 : index
    %77 = vector.load %arg1[%76, %c0_22, %c0_23] : memref<8x2x128xf32, #tpu.memory_space<vmem>>, vector<1x2x128xf32>
    %78 = vector.shape_cast %77 : vector<1x2x128xf32> to vector<2x128xf32>
    %79 = arith.truncf %71 : vector<2x32xf32> to vector<2x32xbf16>
    %cst_24 = arith.constant dense<0.000000e+00> : vector<2x128xf32>
    %80 = tpu.matmul %79, %3, %cst_24 {dimension_numbers = #tpu.dot_dimension_numbers<[1], [0], [0], [1], [0, 0, 1, 1], [], []>} : vector<2x32xbf16>, vector<32x128xbf16>, vector<2x128xf32> -> vector<2x128xf32>
    %81 = arith.addf %78, %80 : vector<2x128xf32>
    %82 = vector.extract_strided_slice %81 {offsets = [0, 0], sizes = [2, 32], strides = [1, 1]} : vector<2x128xf32> to vector<2x32xf32>
    %83 = arith.negf %82 : vector<2x32xf32>
    %84 = math.exp %83 : vector<2x32xf32>
    %cst_25 = arith.constant 1.000000e+00 : f32
    %85 = vector.broadcast %cst_25 : f32 to vector<2x32xf32>
    %86 = arith.addf %85, %84 : vector<2x32xf32>
    %87 = arith.divf %85, %86 : vector<2x32xf32>
    %88 = vector.extract_strided_slice %81 {offsets = [0, 32], sizes = [2, 32], strides = [1, 1]} : vector<2x128xf32> to vector<2x32xf32>
    %89 = arith.negf %88 : vector<2x32xf32>
    %90 = math.exp %89 : vector<2x32xf32>
    %cst_26 = arith.constant 1.000000e+00 : f32
    %91 = vector.broadcast %cst_26 : f32 to vector<2x32xf32>
    %92 = arith.addf %91, %90 : vector<2x32xf32>
    %93 = arith.divf %91, %92 : vector<2x32xf32>
    %94 = vector.extract_strided_slice %81 {offsets = [0, 64], sizes = [2, 32], strides = [1, 1]} : vector<2x128xf32> to vector<2x32xf32>
    %95 = math.tanh %94 : vector<2x32xf32>
    %96 = vector.extract_strided_slice %81 {offsets = [0, 96], sizes = [2, 32], strides = [1, 1]} : vector<2x128xf32> to vector<2x32xf32>
    %97 = arith.negf %96 : vector<2x32xf32>
    %98 = math.exp %97 : vector<2x32xf32>
    %cst_27 = arith.constant 1.000000e+00 : f32
    %99 = vector.broadcast %cst_27 : f32 to vector<2x32xf32>
    %100 = arith.addf %99, %98 : vector<2x32xf32>
    %101 = arith.divf %99, %100 : vector<2x32xf32>
    %102 = arith.mulf %93, %69 : vector<2x32xf32>
    %103 = arith.mulf %87, %95 : vector<2x32xf32>
    %104 = arith.addf %102, %103 : vector<2x32xf32>
    %105 = math.tanh %104 : vector<2x32xf32>
    %106 = arith.mulf %101, %105 : vector<2x32xf32>
    %107 = arith.index_cast %c2_i32 : i32 to index
    %c0_28 = arith.constant 0 : index
    %c0_29 = arith.constant 0 : index
    %108 = vector.load %arg3[%107, %c0_28, %c0_29] : memref<8x2x32xf32, #tpu.memory_space<vmem>>, vector<1x2x32xf32>
    %109 = vector.shape_cast %108 : vector<1x2x32xf32> to vector<2x32xf32>
    %110 = vector.shape_cast %106 : vector<2x32xf32> to vector<1x2x32xf32>
    tpu.vector_store %arg3[%107, %c0_28, %c0_29], %110 {strides = array<i32>} : memref<8x2x32xf32, #tpu.memory_space<vmem>>, vector<1x2x32xf32>,
    %c3_i32 = arith.constant 3 : i32
    %111 = arith.index_cast %c3_i32 : i32 to index
    %c0_30 = arith.constant 0 : index
    %c0_31 = arith.constant 0 : index
    %112 = vector.load %arg1[%111, %c0_30, %c0_31] : memref<8x2x128xf32, #tpu.memory_space<vmem>>, vector<1x2x128xf32>
    %113 = vector.shape_cast %112 : vector<1x2x128xf32> to vector<2x128xf32>
    %114 = arith.truncf %106 : vector<2x32xf32> to vector<2x32xbf16>
    %cst_32 = arith.constant dense<0.000000e+00> : vector<2x128xf32>
    %115 = tpu.matmul %114, %3, %cst_32 {dimension_numbers = #tpu.dot_dimension_numbers<[1], [0], [0], [1], [0, 0, 1, 1], [], []>} : vector<2x32xbf16>, vector<32x128xbf16>, vector<2x128xf32> -> vector<2x128xf32>
    %116 = arith.addf %113, %115 : vector<2x128xf32>
    %117 = vector.extract_strided_slice %116 {offsets = [0, 0], sizes = [2, 32], strides = [1, 1]} : vector<2x128xf32> to vector<2x32xf32>
    %118 = arith.negf %117 : vector<2x32xf32>
    %119 = math.exp %118 : vector<2x32xf32>
    %cst_33 = arith.constant 1.000000e+00 : f32
    %120 = vector.broadcast %cst_33 : f32 to vector<2x32xf32>
    %121 = arith.addf %120, %119 : vector<2x32xf32>
    %122 = arith.divf %120, %121 : vector<2x32xf32>
    %123 = vector.extract_strided_slice %116 {offsets = [0, 32], sizes = [2, 32], strides = [1, 1]} : vector<2x128xf32> to vector<2x32xf32>
    %124 = arith.negf %123 : vector<2x32xf32>
    %125 = math.exp %124 : vector<2x32xf32>
    %cst_34 = arith.constant 1.000000e+00 : f32
    %126 = vector.broadcast %cst_34 : f32 to vector<2x32xf32>
    %127 = arith.addf %126, %125 : vector<2x32xf32>
    %128 = arith.divf %126, %127 : vector<2x32xf32>
    %129 = vector.extract_strided_slice %116 {offsets = [0, 64], sizes = [2, 32], strides = [1, 1]} : vector<2x128xf32> to vector<2x32xf32>
    %130 = math.tanh %129 : vector<2x32xf32>
    %131 = vector.extract_strided_slice %116 {offsets = [0, 96], sizes = [2, 32], strides = [1, 1]} : vector<2x128xf32> to vector<2x32xf32>
    %132 = arith.negf %131 : vector<2x32xf32>
    %133 = math.exp %132 : vector<2x32xf32>
    %cst_35 = arith.constant 1.000000e+00 : f32
    %134 = vector.broadcast %cst_35 : f32 to vector<2x32xf32>
    %135 = arith.addf %134, %133 : vector<2x32xf32>
    %136 = arith.divf %134, %135 : vector<2x32xf32>
    %137 = arith.mulf %128, %104 : vector<2x32xf32>
    %138 = arith.mulf %122, %130 : vector<2x32xf32>
    %139 = arith.addf %137, %138 : vector<2x32xf32>
    %140 = math.tanh %139 : vector<2x32xf32>
    %141 = arith.mulf %136, %140 : vector<2x32xf32>
    %142 = arith.index_cast %c3_i32 : i32 to index
    %c0_36 = arith.constant 0 : index
    %c0_37 = arith.constant 0 : index
    %143 = vector.load %arg3[%142, %c0_36, %c0_37] : memref<8x2x32xf32, #tpu.memory_space<vmem>>, vector<1x2x32xf32>
    %144 = vector.shape_cast %143 : vector<1x2x32xf32> to vector<2x32xf32>
    %145 = vector.shape_cast %141 : vector<2x32xf32> to vector<1x2x32xf32>
    tpu.vector_store %arg3[%142, %c0_36, %c0_37], %145 {strides = array<i32>} : memref<8x2x32xf32, #tpu.memory_space<vmem>>, vector<1x2x32xf32>,
    %c4_i32 = arith.constant 4 : i32
    %146 = arith.index_cast %c4_i32 : i32 to index
    %c0_38 = arith.constant 0 : index
    %c0_39 = arith.constant 0 : index
    %147 = vector.load %arg1[%146, %c0_38, %c0_39] : memref<8x2x128xf32, #tpu.memory_space<vmem>>, vector<1x2x128xf32>
    %148 = vector.shape_cast %147 : vector<1x2x128xf32> to vector<2x128xf32>
    %149 = arith.truncf %141 : vector<2x32xf32> to vector<2x32xbf16>
    %cst_40 = arith.constant dense<0.000000e+00> : vector<2x128xf32>
    %150 = tpu.matmul %149, %3, %cst_40 {dimension_numbers = #tpu.dot_dimension_numbers<[1], [0], [0], [1], [0, 0, 1, 1], [], []>} : vector<2x32xbf16>, vector<32x128xbf16>, vector<2x128xf32> -> vector<2x128xf32>
    %151 = arith.addf %148, %150 : vector<2x128xf32>
    %152 = vector.extract_strided_slice %151 {offsets = [0, 0], sizes = [2, 32], strides = [1, 1]} : vector<2x128xf32> to vector<2x32xf32>
    %153 = arith.negf %152 : vector<2x32xf32>
    %154 = math.exp %153 : vector<2x32xf32>
    %cst_41 = arith.constant 1.000000e+00 : f32
    %155 = vector.broadcast %cst_41 : f32 to vector<2x32xf32>
    %156 = arith.addf %155, %154 : vector<2x32xf32>
    %157 = arith.divf %155, %156 : vector<2x32xf32>
    %158 = vector.extract_strided_slice %151 {offsets = [0, 32], sizes = [2, 32], strides = [1, 1]} : vector<2x128xf32> to vector<2x32xf32>
    %159 = arith.negf %158 : vector<2x32xf32>
    %160 = math.exp %159 : vector<2x32xf32>
    %cst_42 = arith.constant 1.000000e+00 : f32
    %161 = vector.broadcast %cst_42 : f32 to vector<2x32xf32>
    %162 = arith.addf %161, %160 : vector<2x32xf32>
    %163 = arith.divf %161, %162 : vector<2x32xf32>
    %164 = vector.extract_strided_slice %151 {offsets = [0, 64], sizes = [2, 32], strides = [1, 1]} : vector<2x128xf32> to vector<2x32xf32>
    %165 = math.tanh %164 : vector<2x32xf32>
    %166 = vector.extract_strided_slice %151 {offsets = [0, 96], sizes = [2, 32], strides = [1, 1]} : vector<2x128xf32> to vector<2x32xf32>
    %167 = arith.negf %166 : vector<2x32xf32>
    %168 = math.exp %167 : vector<2x32xf32>
    %cst_43 = arith.constant 1.000000e+00 : f32
    %169 = vector.broadcast %cst_43 : f32 to vector<2x32xf32>
    %170 = arith.addf %169, %168 : vector<2x32xf32>
    %171 = arith.divf %169, %170 : vector<2x32xf32>
    %172 = arith.mulf %163, %139 : vector<2x32xf32>
    %173 = arith.mulf %157, %165 : vector<2x32xf32>
    %174 = arith.addf %172, %173 : vector<2x32xf32>
    %175 = math.tanh %174 : vector<2x32xf32>
    %176 = arith.mulf %171, %175 : vector<2x32xf32>
    %177 = arith.index_cast %c4_i32 : i32 to index
    %c0_44 = arith.constant 0 : index
    %c0_45 = arith.constant 0 : index
    %178 = vector.load %arg3[%177, %c0_44, %c0_45] : memref<8x2x32xf32, #tpu.memory_space<vmem>>, vector<1x2x32xf32>
    %179 = vector.shape_cast %178 : vector<1x2x32xf32> to vector<2x32xf32>
    %180 = vector.shape_cast %176 : vector<2x32xf32> to vector<1x2x32xf32>
    tpu.vector_store %arg3[%177, %c0_44, %c0_45], %180 {strides = array<i32>} : memref<8x2x32xf32, #tpu.memory_space<vmem>>, vector<1x2x32xf32>,
    %c5_i32 = arith.constant 5 : i32
    %181 = arith.index_cast %c5_i32 : i32 to index
    %c0_46 = arith.constant 0 : index
    %c0_47 = arith.constant 0 : index
    %182 = vector.load %arg1[%181, %c0_46, %c0_47] : memref<8x2x128xf32, #tpu.memory_space<vmem>>, vector<1x2x128xf32>
    %183 = vector.shape_cast %182 : vector<1x2x128xf32> to vector<2x128xf32>
    %184 = arith.truncf %176 : vector<2x32xf32> to vector<2x32xbf16>
    %cst_48 = arith.constant dense<0.000000e+00> : vector<2x128xf32>
    %185 = tpu.matmul %184, %3, %cst_48 {dimension_numbers = #tpu.dot_dimension_numbers<[1], [0], [0], [1], [0, 0, 1, 1], [], []>} : vector<2x32xbf16>, vector<32x128xbf16>, vector<2x128xf32> -> vector<2x128xf32>
    %186 = arith.addf %183, %185 : vector<2x128xf32>
    %187 = vector.extract_strided_slice %186 {offsets = [0, 0], sizes = [2, 32], strides = [1, 1]} : vector<2x128xf32> to vector<2x32xf32>
    %188 = arith.negf %187 : vector<2x32xf32>
    %189 = math.exp %188 : vector<2x32xf32>
    %cst_49 = arith.constant 1.000000e+00 : f32
    %190 = vector.broadcast %cst_49 : f32 to vector<2x32xf32>
    %191 = arith.addf %190, %189 : vector<2x32xf32>
    %192 = arith.divf %190, %191 : vector<2x32xf32>
    %193 = vector.extract_strided_slice %186 {offsets = [0, 32], sizes = [2, 32], strides = [1, 1]} : vector<2x128xf32> to vector<2x32xf32>
    %194 = arith.negf %193 : vector<2x32xf32>
    %195 = math.exp %194 : vector<2x32xf32>
    %cst_50 = arith.constant 1.000000e+00 : f32
    %196 = vector.broadcast %cst_50 : f32 to vector<2x32xf32>
    %197 = arith.addf %196, %195 : vector<2x32xf32>
    %198 = arith.divf %196, %197 : vector<2x32xf32>
    %199 = vector.extract_strided_slice %186 {offsets = [0, 64], sizes = [2, 32], strides = [1, 1]} : vector<2x128xf32> to vector<2x32xf32>
    %200 = math.tanh %199 : vector<2x32xf32>
    %201 = vector.extract_strided_slice %186 {offsets = [0, 96], sizes = [2, 32], strides = [1, 1]} : vector<2x128xf32> to vector<2x32xf32>
    %202 = arith.negf %201 : vector<2x32xf32>
    %203 = math.exp %202 : vector<2x32xf32>
    %cst_51 = arith.constant 1.000000e+00 : f32
    %204 = vector.broadcast %cst_51 : f32 to vector<2x32xf32>
    %205 = arith.addf %204, %203 : vector<2x32xf32>
    %206 = arith.divf %204, %205 : vector<2x32xf32>
    %207 = arith.mulf %198, %174 : vector<2x32xf32>
    %208 = arith.mulf %192, %200 : vector<2x32xf32>
    %209 = arith.addf %207, %208 : vector<2x32xf32>
    %210 = math.tanh %209 : vector<2x32xf32>
    %211 = arith.mulf %206, %210 : vector<2x32xf32>
    %212 = arith.index_cast %c5_i32 : i32 to index
    %c0_52 = arith.constant 0 : index
    %c0_53 = arith.constant 0 : index
    %213 = vector.load %arg3[%212, %c0_52, %c0_53] : memref<8x2x32xf32, #tpu.memory_space<vmem>>, vector<1x2x32xf32>
    %214 = vector.shape_cast %213 : vector<1x2x32xf32> to vector<2x32xf32>
    %215 = vector.shape_cast %211 : vector<2x32xf32> to vector<1x2x32xf32>
    tpu.vector_store %arg3[%212, %c0_52, %c0_53], %215 {strides = array<i32>} : memref<8x2x32xf32, #tpu.memory_space<vmem>>, vector<1x2x32xf32>,
    %c6_i32 = arith.constant 6 : i32
    %216 = arith.index_cast %c6_i32 : i32 to index
    %c0_54 = arith.constant 0 : index
    %c0_55 = arith.constant 0 : index
    %217 = vector.load %arg1[%216, %c0_54, %c0_55] : memref<8x2x128xf32, #tpu.memory_space<vmem>>, vector<1x2x128xf32>
    %218 = vector.shape_cast %217 : vector<1x2x128xf32> to vector<2x128xf32>
    %219 = arith.truncf %211 : vector<2x32xf32> to vector<2x32xbf16>
    %cst_56 = arith.constant dense<0.000000e+00> : vector<2x128xf32>
    %220 = tpu.matmul %219, %3, %cst_56 {dimension_numbers = #tpu.dot_dimension_numbers<[1], [0], [0], [1], [0, 0, 1, 1], [], []>} : vector<2x32xbf16>, vector<32x128xbf16>, vector<2x128xf32> -> vector<2x128xf32>
    %221 = arith.addf %218, %220 : vector<2x128xf32>
    %222 = vector.extract_strided_slice %221 {offsets = [0, 0], sizes = [2, 32], strides = [1, 1]} : vector<2x128xf32> to vector<2x32xf32>
    %223 = arith.negf %222 : vector<2x32xf32>
    %224 = math.exp %223 : vector<2x32xf32>
    %cst_57 = arith.constant 1.000000e+00 : f32
    %225 = vector.broadcast %cst_57 : f32 to vector<2x32xf32>
    %226 = arith.addf %225, %224 : vector<2x32xf32>
    %227 = arith.divf %225, %226 : vector<2x32xf32>
    %228 = vector.extract_strided_slice %221 {offsets = [0, 32], sizes = [2, 32], strides = [1, 1]} : vector<2x128xf32> to vector<2x32xf32>
    %229 = arith.negf %228 : vector<2x32xf32>
    %230 = math.exp %229 : vector<2x32xf32>
    %cst_58 = arith.constant 1.000000e+00 : f32
    %231 = vector.broadcast %cst_58 : f32 to vector<2x32xf32>
    %232 = arith.addf %231, %230 : vector<2x32xf32>
    %233 = arith.divf %231, %232 : vector<2x32xf32>
    %234 = vector.extract_strided_slice %221 {offsets = [0, 64], sizes = [2, 32], strides = [1, 1]} : vector<2x128xf32> to vector<2x32xf32>
    %235 = math.tanh %234 : vector<2x32xf32>
    %236 = vector.extract_strided_slice %221 {offsets = [0, 96], sizes = [2, 32], strides = [1, 1]} : vector<2x128xf32> to vector<2x32xf32>
    %237 = arith.negf %236 : vector<2x32xf32>
    %238 = math.exp %237 : vector<2x32xf32>
    %cst_59 = arith.constant 1.000000e+00 : f32
    %239 = vector.broadcast %cst_59 : f32 to vector<2x32xf32>
    %240 = arith.addf %239, %238 : vector<2x32xf32>
    %241 = arith.divf %239, %240 : vector<2x32xf32>
    %242 = arith.mulf %233, %209 : vector<2x32xf32>
    %243 = arith.mulf %227, %235 : vector<2x32xf32>
    %244 = arith.addf %242, %243 : vector<2x32xf32>
    %245 = math.tanh %244 : vector<2x32xf32>
    %246 = arith.mulf %241, %245 : vector<2x32xf32>
    %247 = arith.index_cast %c6_i32 : i32 to index
    %c0_60 = arith.constant 0 : index
    %c0_61 = arith.constant 0 : index
    %248 = vector.load %arg3[%247, %c0_60, %c0_61] : memref<8x2x32xf32, #tpu.memory_space<vmem>>, vector<1x2x32xf32>
    %249 = vector.shape_cast %248 : vector<1x2x32xf32> to vector<2x32xf32>
    %250 = vector.shape_cast %246 : vector<2x32xf32> to vector<1x2x32xf32>
    tpu.vector_store %arg3[%247, %c0_60, %c0_61], %250 {strides = array<i32>} : memref<8x2x32xf32, #tpu.memory_space<vmem>>, vector<1x2x32xf32>,
    %c7_i32 = arith.constant 7 : i32
    %251 = arith.index_cast %c7_i32 : i32 to index
    %c0_62 = arith.constant 0 : index
    %c0_63 = arith.constant 0 : index
    %252 = vector.load %arg1[%251, %c0_62, %c0_63] : memref<8x2x128xf32, #tpu.memory_space<vmem>>, vector<1x2x128xf32>
    %253 = vector.shape_cast %252 : vector<1x2x128xf32> to vector<2x128xf32>
    %254 = arith.truncf %246 : vector<2x32xf32> to vector<2x32xbf16>
    %cst_64 = arith.constant dense<0.000000e+00> : vector<2x128xf32>
    %255 = tpu.matmul %254, %3, %cst_64 {dimension_numbers = #tpu.dot_dimension_numbers<[1], [0], [0], [1], [0, 0, 1, 1], [], []>} : vector<2x32xbf16>, vector<32x128xbf16>, vector<2x128xf32> -> vector<2x128xf32>
    %256 = arith.addf %253, %255 : vector<2x128xf32>
    %257 = vector.extract_strided_slice %256 {offsets = [0, 0], sizes = [2, 32], strides = [1, 1]} : vector<2x128xf32> to vector<2x32xf32>
    %258 = arith.negf %257 : vector<2x32xf32>
    %259 = math.exp %258 : vector<2x32xf32>
    %cst_65 = arith.constant 1.000000e+00 : f32
    %260 = vector.broadcast %cst_65 : f32 to vector<2x32xf32>
    %261 = arith.addf %260, %259 : vector<2x32xf32>
    %262 = arith.divf %260, %261 : vector<2x32xf32>
    %263 = vector.extract_strided_slice %256 {offsets = [0, 32], sizes = [2, 32], strides = [1, 1]} : vector<2x128xf32> to vector<2x32xf32>
    %264 = arith.negf %263 : vector<2x32xf32>
    %265 = math.exp %264 : vector<2x32xf32>
    %cst_66 = arith.constant 1.000000e+00 : f32
    %266 = vector.broadcast %cst_66 : f32 to vector<2x32xf32>
    %267 = arith.addf %266, %265 : vector<2x32xf32>
    %268 = arith.divf %266, %267 : vector<2x32xf32>
    %269 = vector.extract_strided_slice %256 {offsets = [0, 64], sizes = [2, 32], strides = [1, 1]} : vector<2x128xf32> to vector<2x32xf32>
    %270 = math.tanh %269 : vector<2x32xf32>
    %271 = vector.extract_strided_slice %256 {offsets = [0, 96], sizes = [2, 32], strides = [1, 1]} : vector<2x128xf32> to vector<2x32xf32>
    %272 = arith.negf %271 : vector<2x32xf32>
    %273 = math.exp %272 : vector<2x32xf32>
    %cst_67 = arith.constant 1.000000e+00 : f32
    %274 = vector.broadcast %cst_67 : f32 to vector<2x32xf32>
    %275 = arith.addf %274, %273 : vector<2x32xf32>
    %276 = arith.divf %274, %275 : vector<2x32xf32>
    %277 = arith.mulf %268, %244 : vector<2x32xf32>
    %278 = arith.mulf %262, %270 : vector<2x32xf32>
    %279 = arith.addf %277, %278 : vector<2x32xf32>
    %280 = math.tanh %279 : vector<2x32xf32>
    %281 = arith.mulf %276, %280 : vector<2x32xf32>
    %282 = arith.index_cast %c7_i32 : i32 to index
    %c0_68 = arith.constant 0 : index
    %c0_69 = arith.constant 0 : index
    %283 = vector.load %arg3[%282, %c0_68, %c0_69] : memref<8x2x32xf32, #tpu.memory_space<vmem>>, vector<1x2x32xf32>
    %284 = vector.shape_cast %283 : vector<1x2x32xf32> to vector<2x32xf32>
    %285 = vector.shape_cast %281 : vector<2x32xf32> to vector<1x2x32xf32>
    tpu.vector_store %arg3[%282, %c0_68, %c0_69], %285 {strides = array<i32>} : memref<8x2x32xf32, #tpu.memory_space<vmem>>, vector<1x2x32xf32>,
    %c8_i32 = arith.constant 8 : i32
    %c0_70 = arith.constant 0 : index
    %c0_71 = arith.constant 0 : index
    %286 = vector.load %arg7[%c0_70, %c0_71] : memref<2x32xf32, #tpu.memory_space<vmem>>, vector<2x32xf32>
    tpu.vector_store %arg7[%c0_70, %c0_71], %281 {strides = array<i32>} : memref<2x32xf32, #tpu.memory_space<vmem>>, vector<2x32xf32>,
    %c0_72 = arith.constant 0 : index
    %c0_73 = arith.constant 0 : index
    %287 = vector.load %arg8[%c0_72, %c0_73] : memref<2x32xf32, #tpu.memory_space<vmem>>, vector<2x32xf32>
    tpu.vector_store %arg8[%c0_72, %c0_73], %279 {strides = array<i32>} : memref<2x32xf32, #tpu.memory_space<vmem>>, vector<2x32xf32>,
    %c0_i32_74 = arith.constant 0 : i32
    %288 = arith.cmpi eq, %arg0, %c0_i32_74 : i32
    %289 = arith.extui %288 : i1 to i32
    %c0_i32_75 = arith.constant 0 : i32
    %290 = arith.cmpi ne, %289, %c0_i32_75 : i32
    scf.if %290 {
      %c0_76 = arith.constant 0 : index
      %c0_77 = arith.constant 0 : index
      %291 = vector.load %arg4[%c0_76, %c0_77] : memref<2x32xf32, #tpu.memory_space<vmem>>, vector<2x32xf32>
      tpu.vector_store %arg4[%c0_76, %c0_77], %281 {strides = array<i32>} : memref<2x32xf32, #tpu.memory_space<vmem>>, vector<2x32xf32>,
      %c0_78 = arith.constant 0 : index
      %c0_79 = arith.constant 0 : index
      %292 = vector.load %arg5[%c0_78, %c0_79] : memref<2x32xf32, #tpu.memory_space<vmem>>, vector<2x32xf32>
      tpu.vector_store %arg5[%c0_78, %c0_79], %279 {strides = array<i32>} : memref<2x32xf32, #tpu.memory_space<vmem>>, vector<2x32xf32>,
    } else {
    }
    return
  }
  func.func @transform_0(%arg0: i32) -> (i32, i32, i32) {
    %c0_i32 = arith.constant 0 : i32
    %c0_i32_0 = arith.constant 0 : i32
    %c0_i32_1 = arith.constant 0 : i32
    return %arg0, %c0_i32, %c0_i32_0 : i32, i32, i32
  }
  func.func @transform_2(%arg0: i32) -> (i32, i32, i32) {
    %c0_i32 = arith.constant 0 : i32
    %c0_i32_0 = arith.constant 0 : i32
    %c0_i32_1 = arith.constant 0 : i32
    return %arg0, %c0_i32, %c0_i32_0 : i32, i32, i32
  }
  func.func @transform_3(%arg0: i32) -> (i32, i32) {
    %c0_i32 = arith.constant 0 : i32
    %c0_i32_0 = arith.constant 0 : i32
    %c0_i32_1 = arith.constant 0 : i32
    return %c0_i32, %c0_i32_0 : i32, i32
  }
  func.func @transform_4(%arg0: i32) -> (i32, i32) {
    %c0_i32 = arith.constant 0 : i32
    %c0_i32_0 = arith.constant 0 : i32
    %c0_i32_1 = arith.constant 0 : i32
    return %c0_i32, %c0_i32_0 : i32, i32
  }
}

module attributes {stable_mosaic.version = 11 : i64} {
  func.func @_lstm_recurrent_kernel(%arg0: i32, %arg1: memref<8x2x128xf32, #tpu.memory_space<vmem>>, %arg2: memref<32x128xbf16, #tpu.memory_space<any>>, %arg3: memref<8x2x32xf32, #tpu.memory_space<vmem>>, %arg4: memref<2x32xf32, #tpu.memory_space<vmem>>, %arg5: memref<2x32xf32, #tpu.memory_space<vmem>>, %arg6: memref<32x128xbf16, #tpu.memory_space<vmem>>, %arg7: memref<2x32xf32, #tpu.memory_space<vmem>>, %arg8: memref<2x32xf32, #tpu.memory_space<vmem>>, %arg9: memref<!tpu.dma_semaphore, #tpu.memory_space<semaphore_mem>>) attributes {dimension_semantics = [#tpu.dimension_semantics<arbitrary>], iteration_bounds = array<i64: 1>, scalar_prefetch = 0 : i64, scratch_operands = 4 : i64, tpu.core_type = #tpu.core_type<tc>, window_params = [{transform_indices = @transform_0, window_bounds = array<i64: 8, 2, 128>}, {}, {transform_indices = @transform_2, window_bounds = array<i64: 8, 2, 32>}, {pipeline_mode = #tpu.pipeline_mode<synchronous>, transform_indices = @transform_3, window_bounds = array<i64: 2, 32>}, {pipeline_mode = #tpu.pipeline_mode<synchronous>, transform_indices = @transform_4, window_bounds = array<i64: 2, 32>}]} {
    %c0_i32 = arith.constant 0 : i32
    %0 = arith.cmpi eq, %arg0, %c0_i32 : i32
    %1 = arith.extui %0 : i1 to i32
    %c0_i32_0 = arith.constant 0 : i32
    %2 = arith.cmpi ne, %1, %c0_i32_0 : i32
    scf.if %2 {
      tpu.enqueue_dma source(%arg2 : memref<32x128xbf16, #tpu.memory_space<any>>) target(%arg6 : memref<32x128xbf16, #tpu.memory_space<vmem>>) target_semaphore(%arg9 : memref<!tpu.dma_semaphore, #tpu.memory_space<semaphore_mem>>)
      tpu.wait_dma2 semaphore(%arg9 : memref<!tpu.dma_semaphore, #tpu.memory_space<semaphore_mem>>) src(%arg2 : memref<32x128xbf16, #tpu.memory_space<any>>) dst(%arg6 : memref<32x128xbf16, #tpu.memory_space<vmem>>)
      %cst_76 = arith.constant 0.000000e+00 : f32
      %291 = vector.broadcast %cst_76 : f32 to vector<2x32xf32>
      %c0_77 = arith.constant 0 : index
      %c0_78 = arith.constant 0 : index
      %292 = vector.load %arg7[%c0_77, %c0_78] : memref<2x32xf32, #tpu.memory_space<vmem>>, vector<2x32xf32>
      tpu.vector_store %arg7[%c0_77, %c0_78], %291 {strides = array<i32>} : memref<2x32xf32, #tpu.memory_space<vmem>>, vector<2x32xf32>,
      %cst_79 = arith.constant 0.000000e+00 : f32
      %293 = vector.broadcast %cst_79 : f32 to vector<2x32xf32>
      %c0_80 = arith.constant 0 : index
      %c0_81 = arith.constant 0 : index
      %294 = vector.load %arg8[%c0_80, %c0_81] : memref<2x32xf32, #tpu.memory_space<vmem>>, vector<2x32xf32>
      tpu.vector_store %arg8[%c0_80, %c0_81], %293 {strides = array<i32>} : memref<2x32xf32, #tpu.memory_space<vmem>>, vector<2x32xf32>,
    } else {
    }
    %c0 = arith.constant 0 : index
    %c0_1 = arith.constant 0 : index
    %3 = vector.load %arg6[%c0, %c0_1] : memref<32x128xbf16, #tpu.memory_space<vmem>>, vector<32x128xbf16>
    %c0_2 = arith.constant 0 : index
    %c0_3 = arith.constant 0 : index
    %4 = vector.load %arg7[%c0_2, %c0_3] : memref<2x32xf32, #tpu.memory_space<vmem>>, vector<2x32xf32>
    %c0_4 = arith.constant 0 : index
    %c0_5 = arith.constant 0 : index
    %5 = vector.load %arg8[%c0_4, %c0_5] : memref<2x32xf32, #tpu.memory_space<vmem>>, vector<2x32xf32>
    %c0_i32_6 = arith.constant 0 : i32
    %6 = arith.index_cast %c0_i32_6 : i32 to index
    %c0_7 = arith.constant 0 : index
    %c0_8 = arith.constant 0 : index
    %7 = vector.load %arg1[%6, %c0_7, %c0_8] : memref<8x2x128xf32, #tpu.memory_space<vmem>>, vector<1x2x128xf32>
    %8 = vector.shape_cast %7 : vector<1x2x128xf32> to vector<2x128xf32>
    %9 = arith.truncf %4 : vector<2x32xf32> to vector<2x32xbf16>
    %cst = arith.constant dense<0.000000e+00> : vector<2x128xf32>
    %10 = tpu.matmul %9, %3, %cst {dimension_numbers = #tpu.dot_dimension_numbers<[1], [0], [0], [1], [0, 0, 1, 1], [], []>} : vector<2x32xbf16>, vector<32x128xbf16>, vector<2x128xf32> -> vector<2x128xf32>
    %11 = arith.addf %8, %10 : vector<2x128xf32>
    %12 = vector.extract_strided_slice %11 {offsets = [0, 0], sizes = [2, 32], strides = [1, 1]} : vector<2x128xf32> to vector<2x32xf32>
    %13 = arith.negf %12 : vector<2x32xf32>
    %14 = math.exp %13 : vector<2x32xf32>
    %cst_9 = arith.constant 1.000000e+00 : f32
    %15 = vector.broadcast %cst_9 : f32 to vector<2x32xf32>
    %16 = arith.addf %15, %14 : vector<2x32xf32>
    %17 = arith.divf %15, %16 : vector<2x32xf32>
    %18 = vector.extract_strided_slice %11 {offsets = [0, 32], sizes = [2, 32], strides = [1, 1]} : vector<2x128xf32> to vector<2x32xf32>
    %19 = arith.negf %18 : vector<2x32xf32>
    %20 = math.exp %19 : vector<2x32xf32>
    %cst_10 = arith.constant 1.000000e+00 : f32
    %21 = vector.broadcast %cst_10 : f32 to vector<2x32xf32>
    %22 = arith.addf %21, %20 : vector<2x32xf32>
    %23 = arith.divf %21, %22 : vector<2x32xf32>
    %24 = vector.extract_strided_slice %11 {offsets = [0, 64], sizes = [2, 32], strides = [1, 1]} : vector<2x128xf32> to vector<2x32xf32>
    %25 = math.tanh %24 : vector<2x32xf32>
    %26 = vector.extract_strided_slice %11 {offsets = [0, 96], sizes = [2, 32], strides = [1, 1]} : vector<2x128xf32> to vector<2x32xf32>
    %27 = arith.negf %26 : vector<2x32xf32>
    %28 = math.exp %27 : vector<2x32xf32>
    %cst_11 = arith.constant 1.000000e+00 : f32
    %29 = vector.broadcast %cst_11 : f32 to vector<2x32xf32>
    %30 = arith.addf %29, %28 : vector<2x32xf32>
    %31 = arith.divf %29, %30 : vector<2x32xf32>
    %32 = arith.mulf %23, %5 : vector<2x32xf32>
    %33 = arith.mulf %17, %25 : vector<2x32xf32>
    %34 = arith.addf %32, %33 : vector<2x32xf32>
    %35 = math.tanh %34 : vector<2x32xf32>
    %36 = arith.mulf %31, %35 : vector<2x32xf32>
    %37 = arith.index_cast %c0_i32_6 : i32 to index
    %c0_12 = arith.constant 0 : index
    %c0_13 = arith.constant 0 : index
    %38 = vector.load %arg3[%37, %c0_12, %c0_13] : memref<8x2x32xf32, #tpu.memory_space<vmem>>, vector<1x2x32xf32>
    %39 = vector.shape_cast %38 : vector<1x2x32xf32> to vector<2x32xf32>
    %40 = vector.shape_cast %36 : vector<2x32xf32> to vector<1x2x32xf32>
    tpu.vector_store %arg3[%37, %c0_12, %c0_13], %40 {strides = array<i32>} : memref<8x2x32xf32, #tpu.memory_space<vmem>>, vector<1x2x32xf32>,
    %c1_i32 = arith.constant 1 : i32
    %41 = arith.index_cast %c1_i32 : i32 to index
    %c0_14 = arith.constant 0 : index
    %c0_15 = arith.constant 0 : index
    %42 = vector.load %arg1[%41, %c0_14, %c0_15] : memref<8x2x128xf32, #tpu.memory_space<vmem>>, vector<1x2x128xf32>
    %43 = vector.shape_cast %42 : vector<1x2x128xf32> to vector<2x128xf32>
    %44 = arith.truncf %36 : vector<2x32xf32> to vector<2x32xbf16>
    %cst_16 = arith.constant dense<0.000000e+00> : vector<2x128xf32>
    %45 = tpu.matmul %44, %3, %cst_16 {dimension_numbers = #tpu.dot_dimension_numbers<[1], [0], [0], [1], [0, 0, 1, 1], [], []>} : vector<2x32xbf16>, vector<32x128xbf16>, vector<2x128xf32> -> vector<2x128xf32>
    %46 = arith.addf %43, %45 : vector<2x128xf32>
    %47 = vector.extract_strided_slice %46 {offsets = [0, 0], sizes = [2, 32], strides = [1, 1]} : vector<2x128xf32> to vector<2x32xf32>
    %48 = arith.negf %47 : vector<2x32xf32>
    %49 = math.exp %48 : vector<2x32xf32>
    %cst_17 = arith.constant 1.000000e+00 : f32
    %50 = vector.broadcast %cst_17 : f32 to vector<2x32xf32>
    %51 = arith.addf %50, %49 : vector<2x32xf32>
    %52 = arith.divf %50, %51 : vector<2x32xf32>
    %53 = vector.extract_strided_slice %46 {offsets = [0, 32], sizes = [2, 32], strides = [1, 1]} : vector<2x128xf32> to vector<2x32xf32>
    %54 = arith.negf %53 : vector<2x32xf32>
    %55 = math.exp %54 : vector<2x32xf32>
    %cst_18 = arith.constant 1.000000e+00 : f32
    %56 = vector.broadcast %cst_18 : f32 to vector<2x32xf32>
    %57 = arith.addf %56, %55 : vector<2x32xf32>
    %58 = arith.divf %56, %57 : vector<2x32xf32>
    %59 = vector.extract_strided_slice %46 {offsets = [0, 64], sizes = [2, 32], strides = [1, 1]} : vector<2x128xf32> to vector<2x32xf32>
    %60 = math.tanh %59 : vector<2x32xf32>
    %61 = vector.extract_strided_slice %46 {offsets = [0, 96], sizes = [2, 32], strides = [1, 1]} : vector<2x128xf32> to vector<2x32xf32>
    %62 = arith.negf %61 : vector<2x32xf32>
    %63 = math.exp %62 : vector<2x32xf32>
    %cst_19 = arith.constant 1.000000e+00 : f32
    %64 = vector.broadcast %cst_19 : f32 to vector<2x32xf32>
    %65 = arith.addf %64, %63 : vector<2x32xf32>
    %66 = arith.divf %64, %65 : vector<2x32xf32>
    %67 = arith.mulf %58, %34 : vector<2x32xf32>
    %68 = arith.mulf %52, %60 : vector<2x32xf32>
    %69 = arith.addf %67, %68 : vector<2x32xf32>
    %70 = math.tanh %69 : vector<2x32xf32>
    %71 = arith.mulf %66, %70 : vector<2x32xf32>
    %72 = arith.index_cast %c1_i32 : i32 to index
    %c0_20 = arith.constant 0 : index
    %c0_21 = arith.constant 0 : index
    %73 = vector.load %arg3[%72, %c0_20, %c0_21] : memref<8x2x32xf32, #tpu.memory_space<vmem>>, vector<1x2x32xf32>
    %74 = vector.shape_cast %73 : vector<1x2x32xf32> to vector<2x32xf32>
    %75 = vector.shape_cast %71 : vector<2x32xf32> to vector<1x2x32xf32>
    tpu.vector_store %arg3[%72, %c0_20, %c0_21], %75 {strides = array<i32>} : memref<8x2x32xf32, #tpu.memory_space<vmem>>, vector<1x2x32xf32>,
    %c2_i32 = arith.constant 2 : i32
    %76 = arith.index_cast %c2_i32 : i32 to index
    %c0_22 = arith.constant 0 : index
    %c0_23 = arith.constant 0 : index
    %77 = vector.load %arg1[%76, %c0_22, %c0_23] : memref<8x2x128xf32, #tpu.memory_space<vmem>>, vector<1x2x128xf32>
    %78 = vector.shape_cast %77 : vector<1x2x128xf32> to vector<2x128xf32>
    %79 = arith.truncf %71 : vector<2x32xf32> to vector<2x32xbf16>
    %cst_24 = arith.constant dense<0.000000e+00> : vector<2x128xf32>
    %80 = tpu.matmul %79, %3, %cst_24 {dimension_numbers = #tpu.dot_dimension_numbers<[1], [0], [0], [1], [0, 0, 1, 1], [], []>} : vector<2x32xbf16>, vector<32x128xbf16>, vector<2x128xf32> -> vector<2x128xf32>
    %81 = arith.addf %78, %80 : vector<2x128xf32>
    %82 = vector.extract_strided_slice %81 {offsets = [0, 0], sizes = [2, 32], strides = [1, 1]} : vector<2x128xf32> to vector<2x32xf32>
    %83 = arith.negf %82 : vector<2x32xf32>
    %84 = math.exp %83 : vector<2x32xf32>
    %cst_25 = arith.constant 1.000000e+00 : f32
    %85 = vector.broadcast %cst_25 : f32 to vector<2x32xf32>
    %86 = arith.addf %85, %84 : vector<2x32xf32>
    %87 = arith.divf %85, %86 : vector<2x32xf32>
    %88 = vector.extract_strided_slice %81 {offsets = [0, 32], sizes = [2, 32], strides = [1, 1]} : vector<2x128xf32> to vector<2x32xf32>
    %89 = arith.negf %88 : vector<2x32xf32>
    %90 = math.exp %89 : vector<2x32xf32>
    %cst_26 = arith.constant 1.000000e+00 : f32
    %91 = vector.broadcast %cst_26 : f32 to vector<2x32xf32>
    %92 = arith.addf %91, %90 : vector<2x32xf32>
    %93 = arith.divf %91, %92 : vector<2x32xf32>
    %94 = vector.extract_strided_slice %81 {offsets = [0, 64], sizes = [2, 32], strides = [1, 1]} : vector<2x128xf32> to vector<2x32xf32>
    %95 = math.tanh %94 : vector<2x32xf32>
    %96 = vector.extract_strided_slice %81 {offsets = [0, 96], sizes = [2, 32], strides = [1, 1]} : vector<2x128xf32> to vector<2x32xf32>
    %97 = arith.negf %96 : vector<2x32xf32>
    %98 = math.exp %97 : vector<2x32xf32>
    %cst_27 = arith.constant 1.000000e+00 : f32
    %99 = vector.broadcast %cst_27 : f32 to vector<2x32xf32>
    %100 = arith.addf %99, %98 : vector<2x32xf32>
    %101 = arith.divf %99, %100 : vector<2x32xf32>
    %102 = arith.mulf %93, %69 : vector<2x32xf32>
    %103 = arith.mulf %87, %95 : vector<2x32xf32>
    %104 = arith.addf %102, %103 : vector<2x32xf32>
    %105 = math.tanh %104 : vector<2x32xf32>
    %106 = arith.mulf %101, %105 : vector<2x32xf32>
    %107 = arith.index_cast %c2_i32 : i32 to index
    %c0_28 = arith.constant 0 : index
    %c0_29 = arith.constant 0 : index
    %108 = vector.load %arg3[%107, %c0_28, %c0_29] : memref<8x2x32xf32, #tpu.memory_space<vmem>>, vector<1x2x32xf32>
    %109 = vector.shape_cast %108 : vector<1x2x32xf32> to vector<2x32xf32>
    %110 = vector.shape_cast %106 : vector<2x32xf32> to vector<1x2x32xf32>
    tpu.vector_store %arg3[%107, %c0_28, %c0_29], %110 {strides = array<i32>} : memref<8x2x32xf32, #tpu.memory_space<vmem>>, vector<1x2x32xf32>,
    %c3_i32 = arith.constant 3 : i32
    %111 = arith.index_cast %c3_i32 : i32 to index
    %c0_30 = arith.constant 0 : index
    %c0_31 = arith.constant 0 : index
    %112 = vector.load %arg1[%111, %c0_30, %c0_31] : memref<8x2x128xf32, #tpu.memory_space<vmem>>, vector<1x2x128xf32>
    %113 = vector.shape_cast %112 : vector<1x2x128xf32> to vector<2x128xf32>
    %114 = arith.truncf %106 : vector<2x32xf32> to vector<2x32xbf16>
    %cst_32 = arith.constant dense<0.000000e+00> : vector<2x128xf32>
    %115 = tpu.matmul %114, %3, %cst_32 {dimension_numbers = #tpu.dot_dimension_numbers<[1], [0], [0], [1], [0, 0, 1, 1], [], []>} : vector<2x32xbf16>, vector<32x128xbf16>, vector<2x128xf32> -> vector<2x128xf32>
    %116 = arith.addf %113, %115 : vector<2x128xf32>
    %117 = vector.extract_strided_slice %116 {offsets = [0, 0], sizes = [2, 32], strides = [1, 1]} : vector<2x128xf32> to vector<2x32xf32>
    %118 = arith.negf %117 : vector<2x32xf32>
    %119 = math.exp %118 : vector<2x32xf32>
    %cst_33 = arith.constant 1.000000e+00 : f32
    %120 = vector.broadcast %cst_33 : f32 to vector<2x32xf32>
    %121 = arith.addf %120, %119 : vector<2x32xf32>
    %122 = arith.divf %120, %121 : vector<2x32xf32>
    %123 = vector.extract_strided_slice %116 {offsets = [0, 32], sizes = [2, 32], strides = [1, 1]} : vector<2x128xf32> to vector<2x32xf32>
    %124 = arith.negf %123 : vector<2x32xf32>
    %125 = math.exp %124 : vector<2x32xf32>
    %cst_34 = arith.constant 1.000000e+00 : f32
    %126 = vector.broadcast %cst_34 : f32 to vector<2x32xf32>
    %127 = arith.addf %126, %125 : vector<2x32xf32>
    %128 = arith.divf %126, %127 : vector<2x32xf32>
    %129 = vector.extract_strided_slice %116 {offsets = [0, 64], sizes = [2, 32], strides = [1, 1]} : vector<2x128xf32> to vector<2x32xf32>
    %130 = math.tanh %129 : vector<2x32xf32>
    %131 = vector.extract_strided_slice %116 {offsets = [0, 96], sizes = [2, 32], strides = [1, 1]} : vector<2x128xf32> to vector<2x32xf32>
    %132 = arith.negf %131 : vector<2x32xf32>
    %133 = math.exp %132 : vector<2x32xf32>
    %cst_35 = arith.constant 1.000000e+00 : f32
    %134 = vector.broadcast %cst_35 : f32 to vector<2x32xf32>
    %135 = arith.addf %134, %133 : vector<2x32xf32>
    %136 = arith.divf %134, %135 : vector<2x32xf32>
    %137 = arith.mulf %128, %104 : vector<2x32xf32>
    %138 = arith.mulf %122, %130 : vector<2x32xf32>
    %139 = arith.addf %137, %138 : vector<2x32xf32>
    %140 = math.tanh %139 : vector<2x32xf32>
    %141 = arith.mulf %136, %140 : vector<2x32xf32>
    %142 = arith.index_cast %c3_i32 : i32 to index
    %c0_36 = arith.constant 0 : index
    %c0_37 = arith.constant 0 : index
    %143 = vector.load %arg3[%142, %c0_36, %c0_37] : memref<8x2x32xf32, #tpu.memory_space<vmem>>, vector<1x2x32xf32>
    %144 = vector.shape_cast %143 : vector<1x2x32xf32> to vector<2x32xf32>
    %145 = vector.shape_cast %141 : vector<2x32xf32> to vector<1x2x32xf32>
    tpu.vector_store %arg3[%142, %c0_36, %c0_37], %145 {strides = array<i32>} : memref<8x2x32xf32, #tpu.memory_space<vmem>>, vector<1x2x32xf32>,
    %c4_i32 = arith.constant 4 : i32
    %146 = arith.index_cast %c4_i32 : i32 to index
    %c0_38 = arith.constant 0 : index
    %c0_39 = arith.constant 0 : index
    %147 = vector.load %arg1[%146, %c0_38, %c0_39] : memref<8x2x128xf32, #tpu.memory_space<vmem>>, vector<1x2x128xf32>
    %148 = vector.shape_cast %147 : vector<1x2x128xf32> to vector<2x128xf32>
    %149 = arith.truncf %141 : vector<2x32xf32> to vector<2x32xbf16>
    %cst_40 = arith.constant dense<0.000000e+00> : vector<2x128xf32>
    %150 = tpu.matmul %149, %3, %cst_40 {dimension_numbers = #tpu.dot_dimension_numbers<[1], [0], [0], [1], [0, 0, 1, 1], [], []>} : vector<2x32xbf16>, vector<32x128xbf16>, vector<2x128xf32> -> vector<2x128xf32>
    %151 = arith.addf %148, %150 : vector<2x128xf32>
    %152 = vector.extract_strided_slice %151 {offsets = [0, 0], sizes = [2, 32], strides = [1, 1]} : vector<2x128xf32> to vector<2x32xf32>
    %153 = arith.negf %152 : vector<2x32xf32>
    %154 = math.exp %153 : vector<2x32xf32>
    %cst_41 = arith.constant 1.000000e+00 : f32
    %155 = vector.broadcast %cst_41 : f32 to vector<2x32xf32>
    %156 = arith.addf %155, %154 : vector<2x32xf32>
    %157 = arith.divf %155, %156 : vector<2x32xf32>
    %158 = vector.extract_strided_slice %151 {offsets = [0, 32], sizes = [2, 32], strides = [1, 1]} : vector<2x128xf32> to vector<2x32xf32>
    %159 = arith.negf %158 : vector<2x32xf32>
    %160 = math.exp %159 : vector<2x32xf32>
    %cst_42 = arith.constant 1.000000e+00 : f32
    %161 = vector.broadcast %cst_42 : f32 to vector<2x32xf32>
    %162 = arith.addf %161, %160 : vector<2x32xf32>
    %163 = arith.divf %161, %162 : vector<2x32xf32>
    %164 = vector.extract_strided_slice %151 {offsets = [0, 64], sizes = [2, 32], strides = [1, 1]} : vector<2x128xf32> to vector<2x32xf32>
    %165 = math.tanh %164 : vector<2x32xf32>
    %166 = vector.extract_strided_slice %151 {offsets = [0, 96], sizes = [2, 32], strides = [1, 1]} : vector<2x128xf32> to vector<2x32xf32>
    %167 = arith.negf %166 : vector<2x32xf32>
    %168 = math.exp %167 : vector<2x32xf32>
    %cst_43 = arith.constant 1.000000e+00 : f32
    %169 = vector.broadcast %cst_43 : f32 to vector<2x32xf32>
    %170 = arith.addf %169, %168 : vector<2x32xf32>
    %171 = arith.divf %169, %170 : vector<2x32xf32>
    %172 = arith.mulf %163, %139 : vector<2x32xf32>
    %173 = arith.mulf %157, %165 : vector<2x32xf32>
    %174 = arith.addf %172, %173 : vector<2x32xf32>
    %175 = math.tanh %174 : vector<2x32xf32>
    %176 = arith.mulf %171, %175 : vector<2x32xf32>
    %177 = arith.index_cast %c4_i32 : i32 to index
    %c0_44 = arith.constant 0 : index
    %c0_45 = arith.constant 0 : index
    %178 = vector.load %arg3[%177, %c0_44, %c0_45] : memref<8x2x32xf32, #tpu.memory_space<vmem>>, vector<1x2x32xf32>
    %179 = vector.shape_cast %178 : vector<1x2x32xf32> to vector<2x32xf32>
    %180 = vector.shape_cast %176 : vector<2x32xf32> to vector<1x2x32xf32>
    tpu.vector_store %arg3[%177, %c0_44, %c0_45], %180 {strides = array<i32>} : memref<8x2x32xf32, #tpu.memory_space<vmem>>, vector<1x2x32xf32>,
    %c5_i32 = arith.constant 5 : i32
    %181 = arith.index_cast %c5_i32 : i32 to index
    %c0_46 = arith.constant 0 : index
    %c0_47 = arith.constant 0 : index
    %182 = vector.load %arg1[%181, %c0_46, %c0_47] : memref<8x2x128xf32, #tpu.memory_space<vmem>>, vector<1x2x128xf32>
    %183 = vector.shape_cast %182 : vector<1x2x128xf32> to vector<2x128xf32>
    %184 = arith.truncf %176 : vector<2x32xf32> to vector<2x32xbf16>
    %cst_48 = arith.constant dense<0.000000e+00> : vector<2x128xf32>
    %185 = tpu.matmul %184, %3, %cst_48 {dimension_numbers = #tpu.dot_dimension_numbers<[1], [0], [0], [1], [0, 0, 1, 1], [], []>} : vector<2x32xbf16>, vector<32x128xbf16>, vector<2x128xf32> -> vector<2x128xf32>
    %186 = arith.addf %183, %185 : vector<2x128xf32>
    %187 = vector.extract_strided_slice %186 {offsets = [0, 0], sizes = [2, 32], strides = [1, 1]} : vector<2x128xf32> to vector<2x32xf32>
    %188 = arith.negf %187 : vector<2x32xf32>
    %189 = math.exp %188 : vector<2x32xf32>
    %cst_49 = arith.constant 1.000000e+00 : f32
    %190 = vector.broadcast %cst_49 : f32 to vector<2x32xf32>
    %191 = arith.addf %190, %189 : vector<2x32xf32>
    %192 = arith.divf %190, %191 : vector<2x32xf32>
    %193 = vector.extract_strided_slice %186 {offsets = [0, 32], sizes = [2, 32], strides = [1, 1]} : vector<2x128xf32> to vector<2x32xf32>
    %194 = arith.negf %193 : vector<2x32xf32>
    %195 = math.exp %194 : vector<2x32xf32>
    %cst_50 = arith.constant 1.000000e+00 : f32
    %196 = vector.broadcast %cst_50 : f32 to vector<2x32xf32>
    %197 = arith.addf %196, %195 : vector<2x32xf32>
    %198 = arith.divf %196, %197 : vector<2x32xf32>
    %199 = vector.extract_strided_slice %186 {offsets = [0, 64], sizes = [2, 32], strides = [1, 1]} : vector<2x128xf32> to vector<2x32xf32>
    %200 = math.tanh %199 : vector<2x32xf32>
    %201 = vector.extract_strided_slice %186 {offsets = [0, 96], sizes = [2, 32], strides = [1, 1]} : vector<2x128xf32> to vector<2x32xf32>
    %202 = arith.negf %201 : vector<2x32xf32>
    %203 = math.exp %202 : vector<2x32xf32>
    %cst_51 = arith.constant 1.000000e+00 : f32
    %204 = vector.broadcast %cst_51 : f32 to vector<2x32xf32>
    %205 = arith.addf %204, %203 : vector<2x32xf32>
    %206 = arith.divf %204, %205 : vector<2x32xf32>
    %207 = arith.mulf %198, %174 : vector<2x32xf32>
    %208 = arith.mulf %192, %200 : vector<2x32xf32>
    %209 = arith.addf %207, %208 : vector<2x32xf32>
    %210 = math.tanh %209 : vector<2x32xf32>
    %211 = arith.mulf %206, %210 : vector<2x32xf32>
    %212 = arith.index_cast %c5_i32 : i32 to index
    %c0_52 = arith.constant 0 : index
    %c0_53 = arith.constant 0 : index
    %213 = vector.load %arg3[%212, %c0_52, %c0_53] : memref<8x2x32xf32, #tpu.memory_space<vmem>>, vector<1x2x32xf32>
    %214 = vector.shape_cast %213 : vector<1x2x32xf32> to vector<2x32xf32>
    %215 = vector.shape_cast %211 : vector<2x32xf32> to vector<1x2x32xf32>
    tpu.vector_store %arg3[%212, %c0_52, %c0_53], %215 {strides = array<i32>} : memref<8x2x32xf32, #tpu.memory_space<vmem>>, vector<1x2x32xf32>,
    %c6_i32 = arith.constant 6 : i32
    %216 = arith.index_cast %c6_i32 : i32 to index
    %c0_54 = arith.constant 0 : index
    %c0_55 = arith.constant 0 : index
    %217 = vector.load %arg1[%216, %c0_54, %c0_55] : memref<8x2x128xf32, #tpu.memory_space<vmem>>, vector<1x2x128xf32>
    %218 = vector.shape_cast %217 : vector<1x2x128xf32> to vector<2x128xf32>
    %219 = arith.truncf %211 : vector<2x32xf32> to vector<2x32xbf16>
    %cst_56 = arith.constant dense<0.000000e+00> : vector<2x128xf32>
    %220 = tpu.matmul %219, %3, %cst_56 {dimension_numbers = #tpu.dot_dimension_numbers<[1], [0], [0], [1], [0, 0, 1, 1], [], []>} : vector<2x32xbf16>, vector<32x128xbf16>, vector<2x128xf32> -> vector<2x128xf32>
    %221 = arith.addf %218, %220 : vector<2x128xf32>
    %222 = vector.extract_strided_slice %221 {offsets = [0, 0], sizes = [2, 32], strides = [1, 1]} : vector<2x128xf32> to vector<2x32xf32>
    %223 = arith.negf %222 : vector<2x32xf32>
    %224 = math.exp %223 : vector<2x32xf32>
    %cst_57 = arith.constant 1.000000e+00 : f32
    %225 = vector.broadcast %cst_57 : f32 to vector<2x32xf32>
    %226 = arith.addf %225, %224 : vector<2x32xf32>
    %227 = arith.divf %225, %226 : vector<2x32xf32>
    %228 = vector.extract_strided_slice %221 {offsets = [0, 32], sizes = [2, 32], strides = [1, 1]} : vector<2x128xf32> to vector<2x32xf32>
    %229 = arith.negf %228 : vector<2x32xf32>
    %230 = math.exp %229 : vector<2x32xf32>
    %cst_58 = arith.constant 1.000000e+00 : f32
    %231 = vector.broadcast %cst_58 : f32 to vector<2x32xf32>
    %232 = arith.addf %231, %230 : vector<2x32xf32>
    %233 = arith.divf %231, %232 : vector<2x32xf32>
    %234 = vector.extract_strided_slice %221 {offsets = [0, 64], sizes = [2, 32], strides = [1, 1]} : vector<2x128xf32> to vector<2x32xf32>
    %235 = math.tanh %234 : vector<2x32xf32>
    %236 = vector.extract_strided_slice %221 {offsets = [0, 96], sizes = [2, 32], strides = [1, 1]} : vector<2x128xf32> to vector<2x32xf32>
    %237 = arith.negf %236 : vector<2x32xf32>
    %238 = math.exp %237 : vector<2x32xf32>
    %cst_59 = arith.constant 1.000000e+00 : f32
    %239 = vector.broadcast %cst_59 : f32 to vector<2x32xf32>
    %240 = arith.addf %239, %238 : vector<2x32xf32>
    %241 = arith.divf %239, %240 : vector<2x32xf32>
    %242 = arith.mulf %233, %209 : vector<2x32xf32>
    %243 = arith.mulf %227, %235 : vector<2x32xf32>
    %244 = arith.addf %242, %243 : vector<2x32xf32>
    %245 = math.tanh %244 : vector<2x32xf32>
    %246 = arith.mulf %241, %245 : vector<2x32xf32>
    %247 = arith.index_cast %c6_i32 : i32 to index
    %c0_60 = arith.constant 0 : index
    %c0_61 = arith.constant 0 : index
    %248 = vector.load %arg3[%247, %c0_60, %c0_61] : memref<8x2x32xf32, #tpu.memory_space<vmem>>, vector<1x2x32xf32>
    %249 = vector.shape_cast %248 : vector<1x2x32xf32> to vector<2x32xf32>
    %250 = vector.shape_cast %246 : vector<2x32xf32> to vector<1x2x32xf32>
    tpu.vector_store %arg3[%247, %c0_60, %c0_61], %250 {strides = array<i32>} : memref<8x2x32xf32, #tpu.memory_space<vmem>>, vector<1x2x32xf32>,
    %c7_i32 = arith.constant 7 : i32
    %251 = arith.index_cast %c7_i32 : i32 to index
    %c0_62 = arith.constant 0 : index
    %c0_63 = arith.constant 0 : index
    %252 = vector.load %arg1[%251, %c0_62, %c0_63] : memref<8x2x128xf32, #tpu.memory_space<vmem>>, vector<1x2x128xf32>
    %253 = vector.shape_cast %252 : vector<1x2x128xf32> to vector<2x128xf32>
    %254 = arith.truncf %246 : vector<2x32xf32> to vector<2x32xbf16>
    %cst_64 = arith.constant dense<0.000000e+00> : vector<2x128xf32>
    %255 = tpu.matmul %254, %3, %cst_64 {dimension_numbers = #tpu.dot_dimension_numbers<[1], [0], [0], [1], [0, 0, 1, 1], [], []>} : vector<2x32xbf16>, vector<32x128xbf16>, vector<2x128xf32> -> vector<2x128xf32>
    %256 = arith.addf %253, %255 : vector<2x128xf32>
    %257 = vector.extract_strided_slice %256 {offsets = [0, 0], sizes = [2, 32], strides = [1, 1]} : vector<2x128xf32> to vector<2x32xf32>
    %258 = arith.negf %257 : vector<2x32xf32>
    %259 = math.exp %258 : vector<2x32xf32>
    %cst_65 = arith.constant 1.000000e+00 : f32
    %260 = vector.broadcast %cst_65 : f32 to vector<2x32xf32>
    %261 = arith.addf %260, %259 : vector<2x32xf32>
    %262 = arith.divf %260, %261 : vector<2x32xf32>
    %263 = vector.extract_strided_slice %256 {offsets = [0, 32], sizes = [2, 32], strides = [1, 1]} : vector<2x128xf32> to vector<2x32xf32>
    %264 = arith.negf %263 : vector<2x32xf32>
    %265 = math.exp %264 : vector<2x32xf32>
    %cst_66 = arith.constant 1.000000e+00 : f32
    %266 = vector.broadcast %cst_66 : f32 to vector<2x32xf32>
    %267 = arith.addf %266, %265 : vector<2x32xf32>
    %268 = arith.divf %266, %267 : vector<2x32xf32>
    %269 = vector.extract_strided_slice %256 {offsets = [0, 64], sizes = [2, 32], strides = [1, 1]} : vector<2x128xf32> to vector<2x32xf32>
    %270 = math.tanh %269 : vector<2x32xf32>
    %271 = vector.extract_strided_slice %256 {offsets = [0, 96], sizes = [2, 32], strides = [1, 1]} : vector<2x128xf32> to vector<2x32xf32>
    %272 = arith.negf %271 : vector<2x32xf32>
    %273 = math.exp %272 : vector<2x32xf32>
    %cst_67 = arith.constant 1.000000e+00 : f32
    %274 = vector.broadcast %cst_67 : f32 to vector<2x32xf32>
    %275 = arith.addf %274, %273 : vector<2x32xf32>
    %276 = arith.divf %274, %275 : vector<2x32xf32>
    %277 = arith.mulf %268, %244 : vector<2x32xf32>
    %278 = arith.mulf %262, %270 : vector<2x32xf32>
    %279 = arith.addf %277, %278 : vector<2x32xf32>
    %280 = math.tanh %279 : vector<2x32xf32>
    %281 = arith.mulf %276, %280 : vector<2x32xf32>
    %282 = arith.index_cast %c7_i32 : i32 to index
    %c0_68 = arith.constant 0 : index
    %c0_69 = arith.constant 0 : index
    %283 = vector.load %arg3[%282, %c0_68, %c0_69] : memref<8x2x32xf32, #tpu.memory_space<vmem>>, vector<1x2x32xf32>
    %284 = vector.shape_cast %283 : vector<1x2x32xf32> to vector<2x32xf32>
    %285 = vector.shape_cast %281 : vector<2x32xf32> to vector<1x2x32xf32>
    tpu.vector_store %arg3[%282, %c0_68, %c0_69], %285 {strides = array<i32>} : memref<8x2x32xf32, #tpu.memory_space<vmem>>, vector<1x2x32xf32>,
    %c8_i32 = arith.constant 8 : i32
    %c0_70 = arith.constant 0 : index
    %c0_71 = arith.constant 0 : index
    %286 = vector.load %arg7[%c0_70, %c0_71] : memref<2x32xf32, #tpu.memory_space<vmem>>, vector<2x32xf32>
    tpu.vector_store %arg7[%c0_70, %c0_71], %281 {strides = array<i32>} : memref<2x32xf32, #tpu.memory_space<vmem>>, vector<2x32xf32>,
    %c0_72 = arith.constant 0 : index
    %c0_73 = arith.constant 0 : index
    %287 = vector.load %arg8[%c0_72, %c0_73] : memref<2x32xf32, #tpu.memory_space<vmem>>, vector<2x32xf32>
    tpu.vector_store %arg8[%c0_72, %c0_73], %279 {strides = array<i32>} : memref<2x32xf32, #tpu.memory_space<vmem>>, vector<2x32xf32>,
    %c0_i32_74 = arith.constant 0 : i32
    %288 = arith.cmpi eq, %arg0, %c0_i32_74 : i32
    %289 = arith.extui %288 : i1 to i32
    %c0_i32_75 = arith.constant 0 : i32
    %290 = arith.cmpi ne, %289, %c0_i32_75 : i32
    scf.if %290 {
      %c0_76 = arith.constant 0 : index
      %c0_77 = arith.constant 0 : index
      %291 = vector.load %arg4[%c0_76, %c0_77] : memref<2x32xf32, #tpu.memory_space<vmem>>, vector<2x32xf32>
      tpu.vector_store %arg4[%c0_76, %c0_77], %281 {strides = array<i32>} : memref<2x32xf32, #tpu.memory_space<vmem>>, vector<2x32xf32>,
      %c0_78 = arith.constant 0 : index
      %c0_79 = arith.constant 0 : index
      %292 = vector.load %arg5[%c0_78, %c0_79] : memref<2x32xf32, #tpu.memory_space<vmem>>, vector<2x32xf32>
      tpu.vector_store %arg5[%c0_78, %c0_79], %279 {strides = array<i32>} : memref<2x32xf32, #tpu.memory_space<vmem>>, vector<2x32xf32>,
    } else {
    }
    return
  }
  func.func @transform_0(%arg0: i32) -> (i32, i32, i32) {
    %c0_i32 = arith.constant 0 : i32
    %c0_i32_0 = arith.constant 0 : i32
    %c0_i32_1 = arith.constant 0 : i32
    return %arg0, %c0_i32, %c0_i32_0 : i32, i32, i32
  }
  func.func @transform_2(%arg0: i32) -> (i32, i32, i32) {
    %c0_i32 = arith.constant 0 : i32
    %c0_i32_0 = arith.constant 0 : i32
    %c0_i32_1 = arith.constant 0 : i32
    return %arg0, %c0_i32, %c0_i32_0 : i32, i32, i32
  }
  func.func @transform_3(%arg0: i32) -> (i32, i32) {
    %c0_i32 = arith.constant 0 : i32
    %c0_i32_0 = arith.constant 0 : i32
    %c0_i32_1 = arith.constant 0 : i32
    return %c0_i32, %c0_i32_0 : i32, i32
  }
  func.func @transform_4(%arg0: i32) -> (i32, i32) {
    %c0_i32 = arith.constant 0 : i32
    %c0_i32_0 = arith.constant 0 : i32
    %c0_i32_1 = arith.constant 0 : i32
    return %c0_i32, %c0_i32_0 : i32, i32
  }
}

</mosaic_0001>

<llo_original>
// kernel: encoder_forward.4
$region0: #{encoder_forward.4}
  #allocation0 [shape = 'u32[]', space=smem, size = 0x4, offset = 0x4, fixed_abs, tag = 'smem constant byte address 0x4 - core index']
  #allocation1 [shape = 'u32[144,128]{1,0:T(1,128)}', space=vmem, size = 0x12000, scoped, tag = 'internal scratch']
  %s0 = inlined_call_operand.vmem [shape: f32[16,16], index: 0, kind: input, shape index: {}]
  %s1 = inlined_call_operand.vmem [shape: bf16[16,32], index: 1, kind: input, shape index: {}]
  %s2 = inlined_call_operand.vmem [shape: f32[1,32], index: 2, kind: input, shape index: {}]
  %s3 = inlined_call_operand.vmem [shape: bf16[32,128], index: 3, kind: input, shape index: {}]
  %s4 = inlined_call_operand.vmem [shape: f32[1,128], index: 4, kind: input, shape index: {}]
  %s5 = inlined_call_operand.vmem [shape: f32[16,128], index: 5, kind: output, shape index: {}]
  %s6 = sld [smem:[#allocation0]]
  $region30: #{encoder_forward.4} parent=0
    _
  %s8 = ssub.s32 1, %s6
  %s9 = scalar_select 0, %s8, %s6
  // Predicated region
  $region2: #{encoder_forward.4} parent=0 // pred_check
    _
  $region3: #{encoder_forward.4} parent=0 // pred_check_branch
    %11 = sbr.rel (0) target = $region5
  $region4: #{encoder_forward.4} parent=0 // pred_region
    _
  $region5: #{encoder_forward.4} parent=0 // pred_fallthru
    _
  // Predicated region
  $region6: #{encoder_forward.4} parent=0 // pred_check
    _
  $region7: #{encoder_forward.4} parent=0 // pred_check_branch
    %13 = sbr.rel (0) target = $region9
  $region8: #{encoder_forward.4} parent=0 // pred_region
    _
  $region9: #{encoder_forward.4} parent=0 // pred_fallthru
    _
  // Predicated region
  $region10: #{encoder_forward.4} parent=0 // pred_check
    _
  $region11: #{encoder_forward.4} parent=0 // pred_check_branch
    %15 = sbr.rel (0) target = $region13
  $region12: #{encoder_forward.4} parent=0 // pred_region
    _
  $region13: #{encoder_forward.4} parent=0 // pred_fallthru
    _
  // Predicated region
  $region14: #{encoder_forward.4} parent=0 // pred_check
    _
  $region15: #{encoder_forward.4} parent=0 // pred_check_branch
    %17 = sbr.rel (0) target = $region17
  $region16: #{encoder_forward.4} parent=0 // pred_region
    _
  $region17: #{encoder_forward.4} parent=0 // pred_fallthru
    _
  // Predicated region
  $region18: #{encoder_forward.4} parent=0 // pred_check
    _
  $region19: #{encoder_forward.4} parent=0 // pred_check_branch
    %19 = sbr.rel (0) target = $region21
  $region20: #{encoder_forward.4} parent=0 // pred_region
    _
  $region21: #{encoder_forward.4} parent=0 // pred_fallthru
    _
  %v21 = vld [vmem:[%s0] sm:$0xff]
  %v22 = vld [vmem:[%s0 + $0x8] sm:$0xff]
  %v23 = vpack.c.bf16 %v22, %v21
  %v24 = vld [vmem:[%s1] sm:$0xf]
  %v25 = vld [vmem:[%s1 + $0x4] sm:$0xf]
  %v26 = vld [vmem:[%s2] sm:$0x1]
  %v28 = vlaneseq
  %v29 = vshrl.u32 %v28, 7
  %v30 = vsub.s32 0, %v29
  %v31 = vrot.slane %v26, %v30
  %v35 = vunpack.c.l.b16 %v24
  %v36 = vunpack.c.l.b16 %v25
  %v37 = vpack.c.b16 %v36, %v35
  %vm39 = vcmask 130048
  %v41 = vsel %vm39, %v23, 0
  %43 = vmatprep.subr.bf16.mxu0 0
  %44 = vmatpush1.bf16.msra.mxu0 0
  %45 = vmatprep.subr.bf16.mxu0 0
  %46 = vmatpush1.bf16.msra.mxu0 0
  %47 = vmatprep.subr.bf16.mxu0 0
  %48 = vmatpush1.bf16.msra.mxu0 0
  %49 = vmatprep.subr.bf16.mxu0 0
  %50 = vmatpush1.bf16.msra.mxu0 0
  %51 = vmatprep.subr.bf16.mxu0 0
  %52 = vmatpush1.bf16.msra.mxu0 0
  %53 = vmatprep.subr.bf16.mxu0 0
  %54 = vmatpush1.bf16.msra.mxu0 0
  %55 = vmatprep.subr.bf16.mxu0 0
  %56 = vmatpush1.bf16.msra.mxu0 0
  %57 = vmatprep.subr.bf16.mxu0 0
  %58 = vmatpush1.bf16.msra.mxu0 %v37
  %59 = vmatprep.subr.bf16.mxu0 0
  %60 = vmatpush2.bf16.msra.mxu0 0
  %61 = vmatprep.subr.bf16.mxu0 0
  %62 = vmatpush2.bf16.msra.mxu0 0
  %63 = vmatprep.subr.bf16.mxu0 0
  %64 = vmatpush2.bf16.msra.mxu0 0
  %65 = vmatprep.subr.bf16.mxu0 0
  %66 = vmatpush2.bf16.msra.mxu0 0
  %67 = vmatprep.subr.bf16.mxu0 0
  %68 = vmatpush2.bf16.msra.mxu0 0
  %69 = vmatprep.subr.bf16.mxu0 0
  %70 = vmatpush2.bf16.msra.mxu0 0
  %71 = vmatprep.subr.bf16.mxu0 0
  %72 = vmatpush2.bf16.msra.mxu0 0
  %73 = vmatprep.subr.bf16.mxu0 0
  %74 = vmatpush2.bf16.msra.mxu0 0
  %75 = vmatprep.mubr.bf16.mxu0 0
  %76 = vmatmul.mubr.bf16.gmra.mxu0 %v41
  %v77 = vpop.f32.mrf.mxu0
  %v78 = vadd.f32 %v31, %v77
  %v79 = vpop.f32.mrf.mxu0
  %v80 = vpop.f32.mrf.mxu0
  %v81 = vadd.f32 %v31, %v80
  %v82 = vpop.f32.mrf.mxu0
  %83 = vdwg.mxu0
  %v84 = vpack.c.bf16 %v81, %v78
  %v85 = vld [vmem:[%s3] sm:$0xf]
  %v86 = vld [vmem:[%s3 + $0x4] sm:$0xf]
  %v87 = vld [vmem:[%s3 + $0x8] sm:$0xf]
  %v88 = vld [vmem:[%s3 + $0xc] sm:$0xf]
  %v89 = vld [vmem:[%s4] sm:$0x1]
  %v91 = vlaneseq
  %v92 = vshrl.u32 %v91, 7
  %v93 = vsub.s32 0, %v92
  %v94 = vrot.slane %v89, %v93
  %v100 = vunpack.c.l.b16 %v85
  %v101 = vunpack.c.l.b16 %v86
  %v102 = vunpack.c.l.b16 %v87
  %v103 = vunpack.c.l.b16 %v88
  %v104 = vpack.c.b16 %v101, %v100
  %v105 = vpack.c.b16 %v103, %v102
  %vm108 = vcmask 261120
  %v110 = vsel %vm108, %v84, 0
  %112 = vmatprep.subr.bf16.mxu0 0
  %113 = vmatpush1.bf16.msra.mxu0 0
  %114 = vmatprep.subr.bf16.mxu0 0
  %115 = vmatpush1.bf16.msra.mxu0 0
  %116 = vmatprep.subr.bf16.mxu0 0
  %117 = vmatpush1.bf16.msra.mxu0 0
  %118 = vmatprep.subr.bf16.mxu0 0
  %119 = vmatpush1.bf16.msra.mxu0 0
  %120 = vmatprep.subr.bf16.mxu0 0
  %121 = vmatpush1.bf16.msra.mxu0 0
  %122 = vmatprep.subr.bf16.mxu0 0
  %123 = vmatpush1.bf16.msra.mxu0 0
  %124 = vmatprep.subr.bf16.mxu0 0
  %125 = vmatpush1.bf16.msra.mxu0 %v105
  %126 = vmatprep.subr.bf16.mxu0 0
  %127 = vmatpush1.bf16.msra.mxu0 %v104
  %128 = vmatprep.subr.bf16.mxu0 0
  %129 = vmatpush2.bf16.msra.mxu0 0
  %130 = vmatprep.subr.bf16.mxu0 0
  %131 = vmatpush2.bf16.msra.mxu0 0
  %132 = vmatprep.subr.bf16.mxu0 0
  %133 = vmatpush2.bf16.msra.mxu0 0
  %134 = vmatprep.subr.bf16.mxu0 0
  %135 = vmatpush2.bf16.msra.mxu0 0
  %136 = vmatprep.subr.bf16.mxu0 0
  %137 = vmatpush2.bf16.msra.mxu0 0
  %138 = vmatprep.subr.bf16.mxu0 0
  %139 = vmatpush2.bf16.msra.mxu0 0
  %140 = vmatprep.subr.bf16.mxu0 0
  %141 = vmatpush2.bf16.msra.mxu0 0
  %142 = vmatprep.subr.bf16.mxu0 0
  %143 = vmatpush2.bf16.msra.mxu0 0
  %144 = vmatprep.mubr.bf16.mxu0 0
  %145 = vmatmul.mubr.bf16.gmra.mxu0 %v110
  %v146 = vpop.f32.mrf.mxu0
  %v147 = vadd.f32 %v94, %v146
  %v148 = vpop.f32.mrf.mxu0
  %v149 = vpop.f32.mrf.mxu0
  %v150 = vadd.f32 %v94, %v149
  %v151 = vpop.f32.mrf.mxu0
  %152 = vdwg.mxu0
  %153 = vst [vmem:[%s5] sm:$0xff] %v147
  %154 = vst [vmem:[%s5 + $0x8] sm:$0xff] %v150
  // Predicated region
  $region22: #{encoder_forward.4} parent=0 // pred_check
    _
  $region23: #{encoder_forward.4} parent=0 // pred_check_branch
    %156 = sbr.rel (0) target = $region25
  $region24: #{encoder_forward.4} parent=0 // pred_region
    _
  $region25: #{encoder_forward.4} parent=0 // pred_fallthru
    _
  // Predicated region
  $region26: #{encoder_forward.4} parent=0 // pred_check
    _
  $region27: #{encoder_forward.4} parent=0 // pred_check_branch
    %158 = sbr.rel (0) target = $region29
  $region28: #{encoder_forward.4} parent=0 // pred_region
    _
  $region29: #{encoder_forward.4} parent=0 // pred_fallthru
    _

// kernel: encoder_forward.6
$region0: #{encoder_forward.6}
  #allocation0 [shape = 'u32[]', space=smem, size = 0x4, offset = 0x4, fixed_abs, tag = 'smem constant byte address 0x4 - core index']
  #allocation1 [shape = 'u32[144,128]{1,0:T(1,128)}', space=vmem, size = 0x12000, scoped, tag = 'internal scratch']
  %s0 = inlined_call_operand.vmem [shape: f32[16,32], index: 0, kind: input, shape index: {}]
  %s1 = inlined_call_operand.vmem [shape: bf16[32,128], index: 1, kind: input, shape index: {}]
  %s2 = inlined_call_operand.vmem [shape: f32[1,128], index: 2, kind: input, shape index: {}]
  %s3 = inlined_call_operand.vmem [shape: f32[16,128], index: 3, kind: output, shape index: {}]
  %s4 = sld [smem:[#allocation0]]
  $region22: #{encoder_forward.6} parent=0
    _
  %s6 = ssub.s32 1, %s4
  %s7 = scalar_select 0, %s6, %s4
  // Predicated region
  $region2: #{encoder_forward.6} parent=0 // pred_check
    _
  $region3: #{encoder_forward.6} parent=0 // pred_check_branch
    %9 = sbr.rel (0) target = $region5
  $region4: #{encoder_forward.6} parent=0 // pred_region
    _
  $region5: #{encoder_forward.6} parent=0 // pred_fallthru
    _
  // Predicated region
  $region6: #{encoder_forward.6} parent=0 // pred_check
    _
  $region7: #{encoder_forward.6} parent=0 // pred_check_branch
    %11 = sbr.rel (0) target = $region9
  $region8: #{encoder_forward.6} parent=0 // pred_region
    _
  $region9: #{encoder_forward.6} parent=0 // pred_fallthru
    _
  // Predicated region
  $region10: #{encoder_forward.6} parent=0 // pred_check
    _
  $region11: #{encoder_forward.6} parent=0 // pred_check_branch
    %13 = sbr.rel (0) target = $region13
  $region12: #{encoder_forward.6} parent=0 // pred_region
    _
  $region13: #{encoder_forward.6} parent=0 // pred_fallthru
    _
  %v15 = vld [vmem:[%s0] sm:$0xff]
  %v16 = vld [vmem:[%s0 + $0x8] sm:$0xff]
  %v17 = vpack.c.bf16 %v16, %v15
  %v18 = vld [vmem:[%s1] sm:$0xf]
  %v19 = vld [vmem:[%s1 + $0x4] sm:$0xf]
  %v20 = vld [vmem:[%s1 + $0x8] sm:$0xf]
  %v21 = vld [vmem:[%s1 + $0xc] sm:$0xf]
  %v22 = vld [vmem:[%s2] sm:$0x1]
  %v24 = vlaneseq
  %v25 = vshrl.u32 %v24, 7
  %v26 = vsub.s32 0, %v25
  %v27 = vrot.slane %v22, %v26
  %v33 = vunpack.c.l.b16 %v18
  %v34 = vunpack.c.l.b16 %v19
  %v35 = vunpack.c.l.b16 %v20
  %v36 = vunpack.c.l.b16 %v21
  %v37 = vpack.c.b16 %v34, %v33
  %v38 = vpack.c.b16 %v36, %v35
  %vm41 = vcmask 261120
  %v43 = vsel %vm41, %v17, 0
  %45 = vmatprep.subr.bf16.mxu0 0
  %46 = vmatpush1.bf16.msra.mxu0 0
  %47 = vmatprep.subr.bf16.mxu0 0
  %48 = vmatpush1.bf16.msra.mxu0 0
  %49 = vmatprep.subr.bf16.mxu0 0
  %50 = vmatpush1.bf16.msra.mxu0 0
  %51 = vmatprep.subr.bf16.mxu0 0
  %52 = vmatpush1.bf16.msra.mxu0 0
  %53 = vmatprep.subr.bf16.mxu0 0
  %54 = vmatpush1.bf16.msra.mxu0 0
  %55 = vmatprep.subr.bf16.mxu0 0
  %56 = vmatpush1.bf16.msra.mxu0 0
  %57 = vmatprep.subr.bf16.mxu0 0
  %58 = vmatpush1.bf16.msra.mxu0 %v38
  %59 = vmatprep.subr.bf16.mxu0 0
  %60 = vmatpush1.bf16.msra.mxu0 %v37
  %61 = vmatprep.subr.bf16.mxu0 0
  %62 = vmatpush2.bf16.msra.mxu0 0
  %63 = vmatprep.subr.bf16.mxu0 0
  %64 = vmatpush2.bf16.msra.mxu0 0
  %65 = vmatprep.subr.bf16.mxu0 0
  %66 = vmatpush2.bf16.msra.mxu0 0
  %67 = vmatprep.subr.bf16.mxu0 0
  %68 = vmatpush2.bf16.msra.mxu0 0
  %69 = vmatprep.subr.bf16.mxu0 0
  %70 = vmatpush2.bf16.msra.mxu0 0
  %71 = vmatprep.subr.bf16.mxu0 0
  %72 = vmatpush2.bf16.msra.mxu0 0
  %73 = vmatprep.subr.bf16.mxu0 0
  %74 = vmatpush2.bf16.msra.mxu0 0
  %75 = vmatprep.subr.bf16.mxu0 0
  %76 = vmatpush2.bf16.msra.mxu0 0
  %77 = vmatprep.mubr.bf16.mxu0 0
  %78 = vmatmul.mubr.bf16.gmra.mxu0 %v43
  %v79 = vpop.f32.mrf.mxu0
  %v80 = vadd.f32 %v27, %v79
  %v81 = vpop.f32.mrf.mxu0
  %v82 = vpop.f32.mrf.mxu0
  %v83 = vadd.f32 %v27, %v82
  %v84 = vpop.f32.mrf.mxu0
  %85 = vdwg.mxu0
  %86 = vst [vmem:[%s3] sm:$0xff] %v80
  %87 = vst [vmem:[%s3 + $0x8] sm:$0xff] %v83
  // Predicated region
  $region14: #{encoder_forward.6} parent=0 // pred_check
    _
  $region15: #{encoder_forward.6} parent=0 // pred_check_branch
    %89 = sbr.rel (0) target = $region17
  $region16: #{encoder_forward.6} parent=0 // pred_region
    _
  $region17: #{encoder_forward.6} parent=0 // pred_fallthru
    _
  // Predicated region
  $region18: #{encoder_forward.6} parent=0 // pred_check
    _
  $region19: #{encoder_forward.6} parent=0 // pred_check_branch
    %91 = sbr.rel (0) target = $region21
  $region20: #{encoder_forward.6} parent=0 // pred_region
    _
  $region21: #{encoder_forward.6} parent=0 // pred_fallthru
    _

// kernel: encoder_forward.7
$region0: #{encoder_forward.7}
  #allocation0 [shape = 'u32[]', space=smem, size = 0x4, offset = 0x4, fixed_abs, tag = 'smem constant byte address 0x4 - core index']
  #allocation1 [shape = 'u32[144,128]{1,0:T(1,128)}', space=vmem, size = 0x12000, scoped, tag = 'internal scratch']
  #allocation2 [shape = 'bf16[32,128]{1,0:T(8,128)(2,1)}', space=vmem, size = 0x2000, scoped, tag = 'scratch operand']
  #allocation3 [shape = 'f32[2,32]{1,0:T(2,128)}', space=vmem, size = 0x400, scoped, tag = 'scratch operand']
  #allocation4 [shape = 'f32[2,32]{1,0:T(2,128)}', space=vmem, size = 0x400, scoped, tag = 'scratch operand']
  #allocation5 [shape = 's32[1]{0}', space=sflag, size = 0x4, scoped, tag = 'scratch operand']
  #allocation8 [shape = 's32[]', space=sflag, size = 0x4, offset = 0, fixed_abs, tag = 'sflag constant byte address 0x0 - dummy sync flag']
  %s0 = inlined_call_operand.vmem [shape: f32[8,2,128], index: 0, kind: input, shape index: {}]
  %s1 = inlined_call_operand.vmem [shape: bf16[32,128], index: 1, kind: input, shape index: {}]
  %s2 = inlined_call_operand.hbm [shape: f32[8,2,32], index: 2, kind: output, shape index: {0}]
  %s3 = inlined_call_operand.vmem [shape: f32[2,32], index: 3, kind: output, shape index: {1}]
  %s4 = inlined_call_operand.vmem [shape: f32[2,32], index: 4, kind: output, shape index: {2}]
  %5 = xla_tuple %s2, %s3, %s4
  %s6 = sld [smem:[#allocation0]]
  $region72: #{encoder_forward.7} parent=0
    _
  %s8 = ssub.s32 1, %s6
  %s9 = scalar_select 0, %s8, %s6
  $region1: #{encoder_forward.7} parent=0
    #allocation6 [shape = 'u8[8192]{0}', space=vmem, size = 0x2000, scoped, tag = 'output window, operand 0, single buffered']
    #allocation7 [shape = 's32[1]{0}', space=sflag, size = 0x4, scoped, tag = 'scoped memory for encoder_forward.7']
    %10 = vsyncpa [#allocation7], 0
    // Predicated region
    $region2: #{encoder_forward.7} parent=1 // pred_check
      _
    $region3: #{encoder_forward.7} parent=1 // pred_check_branch
      %12 = sbr.rel (0) target = $region5
    $region4: #{encoder_forward.7} parent=1 // pred_region
      _
    $region5: #{encoder_forward.7} parent=1 // pred_fallthru
      _
    %p14 = scmp.eq.s32.totalorder 0, 0
    // Predicated region
    $region6: #{encoder_forward.7} parent=1 // pred_check
      %p15 = pneg %p14
    $region7: #{encoder_forward.7} parent=1 // pred_check_branch
      %17 = sbr.rel (%p15) target = $region9
    $region8: #{encoder_forward.7} parent=1 // pred_region
      %p19 = scmp.lt.u32.totalorder 16, 8
      %p20 = pneg %p19
      // Predicated region
      $region10: #{encoder_forward.7} parent=8 // pred_check
        _
      $region11: #{encoder_forward.7} parent=8 // pred_check_branch
        %22 = sbr.rel (%p19) target = $region13
      $region12: #{encoder_forward.7} parent=8 // pred_region
        %s38 = sand.u32 16, 7
        %p39 = scmp.eq.s32.totalorder %s38, 0
        // Predicated region
        $region25: #{encoder_forward.7} parent=12 // pred_check
          %p40 = pneg %p39
        $region26: #{encoder_forward.7} parent=12 // pred_check_branch
          %42 = sbr.rel (%p40) target = $region28
        $region27: #{encoder_forward.7} parent=12 // pred_region
          loop: start=0, step=1, limit=1
          $region29: #{encoder_forward.7} parent=27 // loop_pre_header
            _
          $region30: #{encoder_forward.7} parent=27 // loop_header
            %s44 = sphi 0, %s48
            %p45 = scmp.ge.s32.totalorder %s44, 1
            %s49 = sphi %s1, %s1
            %s50 = sphi [#allocation2], [#allocation2]
          $region31: #{encoder_forward.7} parent=27 // loop_header_branch
            %47 = sbr.rel (%p45) target = $region35
          $region32: #{encoder_forward.7} parent=27 // loop_body
            %v51 = vld [vmem:[%s49] sm:$0xff]
            %52 = vst [vmem:[%s50] sm:$0xff] %v51
            %v53 = vld [vmem:[%s49 + $0x8] sm:$0xff]
            %54 = vst [vmem:[%s50 + $0x8] sm:$0xff] %v53
          $region33: #{encoder_forward.7} parent=27 // loop_footer
            %s48 = sadd.s32 1, %s44
          $region34: #{encoder_forward.7} parent=27 // loop_footer_branch
            %43 = sbr.rel target = $region30
          $region35: #{encoder_forward.7} parent=27 // loop_exit
            _
        $region28: #{encoder_forward.7} parent=12 // pred_fallthru
          _
        %p55 = pneg %p39
        // Predicated region
        $region36: #{encoder_forward.7} parent=12 // pred_check
          _
        $region37: #{encoder_forward.7} parent=12 // pred_check_branch
          %57 = sbr.rel (%p39) target = $region39
        $region38: #{encoder_forward.7} parent=12 // pred_region
          %s58 = sand.u32 16, 7
        $region39: #{encoder_forward.7} parent=12 // pred_fallthru
          _
      $region13: #{encoder_forward.7} parent=8 // pred_fallthru
        _
      // Predicated region
      $region14: #{encoder_forward.7} parent=8 // pred_check
        %p23 = pneg %p19
      $region15: #{encoder_forward.7} parent=8 // pred_check_branch
        %25 = sbr.rel (%p23) target = $region17
      $region16: #{encoder_forward.7} parent=8 // pred_region
        %s26 = sshll.u32 1, 16
        %s27 = ssub.s32 %s26, 1
        loop: start=0, step=1, limit=1
        $region18: #{encoder_forward.7} parent=16 // loop_pre_header
          _
        $region19: #{encoder_forward.7} parent=16 // loop_header
          %s29 = sphi 0, %s33
          %p30 = scmp.ge.s32.totalorder %s29, 1
          %s34 = sphi %s1, %s1
          %s35 = sphi [#allocation2], [#allocation2]
        $region20: #{encoder_forward.7} parent=16 // loop_header_branch
          %32 = sbr.rel (%p30) target = $region24
        $region21: #{encoder_forward.7} parent=16 // loop_body
          %v36 = vld [vmem:[%s34] sm:%s27]
          %37 = vst [vmem:[%s35] sm:%s27] %v36
        $region22: #{encoder_forward.7} parent=16 // loop_footer
          %s33 = sadd.s32 1, %s29
        $region23: #{encoder_forward.7} parent=16 // loop_footer_branch
          %28 = sbr.rel target = $region19
        $region24: #{encoder_forward.7} parent=16 // loop_exit
          _
      $region17: #{encoder_forward.7} parent=8 // pred_fallthru
        _
      // Predicated region
      $region40: #{encoder_forward.7} parent=8 // pred_check
        _
      $region41: #{encoder_forward.7} parent=8 // pred_check_branch
        %61 = sbr.rel (0) target = $region43
      $region42: #{encoder_forward.7} parent=8 // pred_region
        %62 = vsyncadd [#allocation5], 256
      $region43: #{encoder_forward.7} parent=8 // pred_fallthru
        _
      %s63 = smul.u32 4, 4
      %s64 = smul.u32 %s63, 1
      %s65 = sshll.u32 %s64, 4
      %66 = dma.done [#allocation5], %s65
      %vm67 = vcmask 254976
      %68 = vst.msk [vmem:[#allocation3] sm:$0x3] %vm67, 0.0
      %69 = vst.msk [vmem:[#allocation4] sm:$0x3] %vm67, 0.0
    $region9: #{encoder_forward.7} parent=1 // pred_fallthru
      _
    %v70 = vld [vmem:[#allocation2] sm:$0xf]
    %v71 = vld [vmem:[#allocation2 + $0x4] sm:$0xf]
    %v72 = vld [vmem:[#allocation2 + $0x8] sm:$0xf]
    %v73 = vld [vmem:[#allocation2 + $0xc] sm:$0xf]
    %v74 = vld [vmem:[#allocation3] sm:$0x3]
    %v75 = vld [vmem:[#allocation4] sm:$0x3]
    %v76 = vld [vmem:[%s0] sm:$0x3]
    %v77 = vpack.c.bf16 %v74, %v74
    %v82 = vunpack.c.l.b16 %v70
    %v83 = vunpack.c.l.b16 %v71
    %v84 = vunpack.c.l.b16 %v72
    %v85 = vunpack.c.l.b16 %v73
    %v86 = vpack.c.b16 %v83, %v82
    %v87 = vpack.c.b16 %v85, %v84
    %vm90 = vcmask 261120
    %v92 = vsel %vm90, %v77, 0
    %94 = vmatprep.subr.bf16.mxu0 0
    %95 = vmatpush1.bf16.msra.mxu0 0
    %96 = vmatprep.subr.bf16.mxu0 0
    %97 = vmatpush1.bf16.msra.mxu0 0
    %98 = vmatprep.subr.bf16.mxu0 0
    %99 = vmatpush1.bf16.msra.mxu0 0
    %100 = vmatprep.subr.bf16.mxu0 0
    %101 = vmatpush1.bf16.msra.mxu0 0
    %102 = vmatprep.subr.bf16.mxu0 0
    %103 = vmatpush1.bf16.msra.mxu0 0
    %104 = vmatprep.subr.bf16.mxu0 0
    %105 = vmatpush1.bf16.msra.mxu0 0
    %106 = vmatprep.subr.bf16.mxu0 0
    %107 = vmatpush1.bf16.msra.mxu0 %v87
    %108 = vmatprep.subr.bf16.mxu0 0
    %109 = vmatpush1.bf16.msra.mxu0 %v86
    %110 = vmatprep.subr.bf16.mxu0 0
    %111 = vmatpush2.bf16.msra.mxu0 0
    %112 = vmatprep.subr.bf16.mxu0 0
    %113 = vmatpush2.bf16.msra.mxu0 0
    %114 = vmatprep.subr.bf16.mxu0 0
    %115 = vmatpush2.bf16.msra.mxu0 0
    %116 = vmatprep.subr.bf16.mxu0 0
    %117 = vmatpush2.bf16.msra.mxu0 0
    %118 = vmatprep.subr.bf16.mxu0 0
    %119 = vmatpush2.bf16.msra.mxu0 0
    %120 = vmatprep.subr.bf16.mxu0 0
    %121 = vmatpush2.bf16.msra.mxu0 0
    %122 = vmatprep.subr.bf16.mxu0 0
    %123 = vmatpush2.bf16.msra.mxu0 0
    %124 = vmatprep.subr.bf16.mxu0 0
    %125 = vmatpush2.bf16.msra.mxu0 0
    %126 = vmatprep.mubr.bf16.mxu0 0
    %127 = vmatmul.mubr.bf16.gmra.mxu0 %v92
    %v128 = vpop.f32.mrf.mxu0
    %v129 = vadd.f32 0.0, %v128
    %v130 = vpop.f32.mrf.mxu0
    %v131 = vpop.f32.mrf.mxu0
    %v132 = vpop.f32.mrf.mxu0
    %133 = vdwg.mxu0
    %v134 = vadd.f32 %v76, %v129
    %v135 = vxor.u32 %v134, 2147483648
    %v136 = vmul.f32 %v135, 1.442695
    %v137 = vpow.pop %v136
    %v138 = vadd.f32 %v137, 1.0
    %v139 = vrcp.pop %v138
    %v140 = vmul.f32 1.0, %v139
    %v141 = vtanh.pop %v134
    %143 = vrot.lane.b32.xlu0 %v75, 32
    %v144 = vpop.permute.xlu0 %143
    %v146 = vmul.f32 %v140, %v144
    %148 = vrot.lane.b32.xlu0 %v141, 64
    %v149 = vpop.permute.xlu0 %148
    %v151 = vmul.f32 %v140, %v149
    %153 = vrot.lane.b32.xlu0 %v151, 32
    %v154 = vpop.permute.xlu0 %153
    %v156 = vadd.f32 %v146, %v154
    %v157 = vtanh.pop %v156
    %159 = vrot.lane.b32.xlu0 %v157, 64
    %v160 = vpop.permute.xlu0 %159
    %v162 = vmul.f32 %v140, %v160
    %164 = vrot.lane.b32.xlu0 %v162, 32
    %v165 = vpop.permute.xlu0 %164
    %vm167 = vcmask 254976
    %168 = vst.msk [vmem:[#allocation6] sm:$0x3] %vm167, %v165
    %s169 = scalar_lea.vmem %s0, 2
    %v170 = vld [vmem:[%s169] sm:$0x3]
    %v171 = vpack.c.bf16 %v162, %v162
    %173 = vrot.lane.b32.xlu0 %v171, 32
    %v174 = vpop.permute.xlu0 %173
    %v176 = vsel %vm90, %v174, 0
    %178 = vmatprep.subr.bf16.mxu0 0
    %179 = vmatpush1.bf16.msra.mxu0 0
    %180 = vmatprep.subr.bf16.mxu0 0
    %181 = vmatpush1.bf16.msra.mxu0 0
    %182 = vmatprep.subr.bf16.mxu0 0
    %183 = vmatpush1.bf16.msra.mxu0 0
    %184 = vmatprep.subr.bf16.mxu0 0
    %185 = vmatpush1.bf16.msra.mxu0 0
    %186 = vmatprep.subr.bf16.mxu0 0
    %187 = vmatpush1.bf16.msra.mxu0 0
    %188 = vmatprep.subr.bf16.mxu0 0
    %189 = vmatpush1.bf16.msra.mxu0 0
    %190 = vmatprep.subr.bf16.mxu0 0
    %191 = vmatpush1.bf16.msra.mxu0 %v87
    %192 = vmatprep.subr.bf16.mxu0 0
    %193 = vmatpush1.bf16.msra.mxu0 %v86
    %194 = vmatprep.subr.bf16.mxu0 0
    %195 = vmatpush2.bf16.msra.mxu0 0
    %196 = vmatprep.subr.bf16.mxu0 0
    %197 = vmatpush2.bf16.msra.mxu0 0
    %198 = vmatprep.subr.bf16.mxu0 0
    %199 = vmatpush2.bf16.msra.mxu0 0
    %200 = vmatprep.subr.bf16.mxu0 0
    %201 = vmatpush2.bf16.msra.mxu0 0
    %202 = vmatprep.subr.bf16.mxu0 0
    %203 = vmatpush2.bf16.msra.mxu0 0
    %204 = vmatprep.subr.bf16.mxu0 0
    %205 = vmatpush2.bf16.msra.mxu0 0
    %206 = vmatprep.subr.bf16.mxu0 0
    %207 = vmatpush2.bf16.msra.mxu0 0
    %208 = vmatprep.subr.bf16.mxu0 0
    %209 = vmatpush2.bf16.msra.mxu0 0
    %210 = vmatprep.mubr.bf16.mxu0 0
    %211 = vmatmul.mubr.bf16.gmra.mxu0 %v176
    %v212 = vpop.f32.mrf.mxu0
    %v213 = vadd.f32 0.0, %v212
    %v214 = vpop.f32.mrf.mxu0
    %v215 = vpop.f32.mrf.mxu0
    %v216 = vpop.f32.mrf.mxu0
    %217 = vdwg.mxu0
    %v218 = vadd.f32 %v170, %v213
    %v219 = vxor.u32 %v218, 2147483648
    %v220 = vmul.f32 %v219, 1.442695
    %v221 = vpow.pop %v220
    %v222 = vadd.f32 %v221, 1.0
    %v223 = vrcp.pop %v222
    %v224 = vmul.f32 1.0, %v223
    %v225 = vtanh.pop %v218
    %v226 = vmul.f32 %v224, %v156
    %228 = vrot.lane.b32.xlu0 %v225, 64
    %v229 = vpop.permute.xlu0 %228
    %v231 = vmul.f32 %v224, %v229
    %233 = vrot.lane.b32.xlu0 %v231, 32
    %v234 = vpop.permute.xlu0 %233
    %v236 = vadd.f32 %v226, %v234
    %v237 = vtanh.pop %v236
    %239 = vrot.lane.b32.xlu0 %v237, 64
    %v240 = vpop.permute.xlu0 %239
    %v242 = vmul.f32 %v224, %v240
    %244 = vrot.lane.b32.xlu0 %v242, 32
    %v245 = vpop.permute.xlu0 %244
    %s247 = scalar_lea.vmem [#allocation6], 2
    %248 = vst.msk [vmem:[%s247] sm:$0x3] %vm167, %v245
    %s249 = scalar_lea.vmem %s0, 4
    %v250 = vld [vmem:[%s249] sm:$0x3]
    %v251 = vpack.c.bf16 %v242, %v242
    %253 = vrot.lane.b32.xlu0 %v251, 32
    %v254 = vpop.permute.xlu0 %253
    %v256 = vsel %vm90, %v254, 0
    %258 = vmatprep.subr.bf16.mxu0 0
    %259 = vmatpush1.bf16.msra.mxu0 0
    %260 = vmatprep.subr.bf16.mxu0 0
    %261 = vmatpush1.bf16.msra.mxu0 0
    %262 = vmatprep.subr.bf16.mxu0 0
    %263 = vmatpush1.bf16.msra.mxu0 0
    %264 = vmatprep.subr.bf16.mxu0 0
    %265 = vmatpush1.bf16.msra.mxu0 0
    %266 = vmatprep.subr.bf16.mxu0 0
    %267 = vmatpush1.bf16.msra.mxu0 0
    %268 = vmatprep.subr.bf16.mxu0 0
    %269 = vmatpush1.bf16.msra.mxu0 0
    %270 = vmatprep.subr.bf16.mxu0 0
    %271 = vmatpush1.bf16.msra.mxu0 %v87
    %272 = vmatprep.subr.bf16.mxu0 0
    %273 = vmatpush1.bf16.msra.mxu0 %v86
    %274 = vmatprep.subr.bf16.mxu0 0
    %275 = vmatpush2.bf16.msra.mxu0 0
    %276 = vmatprep.subr.bf16.mxu0 0
    %277 = vmatpush2.bf16.msra.mxu0 0
    %278 = vmatprep.subr.bf16.mxu0 0
    %279 = vmatpush2.bf16.msra.mxu0 0
    %280 = vmatprep.subr.bf16.mxu0 0
    %281 = vmatpush2.bf16.msra.mxu0 0
    %282 = vmatprep.subr.bf16.mxu0 0
    %283 = vmatpush2.bf16.msra.mxu0 0
    %284 = vmatprep.subr.bf16.mxu0 0
    %285 = vmatpush2.bf16.msra.mxu0 0
    %286 = vmatprep.subr.bf16.mxu0 0
    %287 = vmatpush2.bf16.msra.mxu0 0
    %288 = vmatprep.subr.bf16.mxu0 0
    %289 = vmatpush2.bf16.msra.mxu0 0
    %290 = vmatprep.mubr.bf16.mxu0 0
    %291 = vmatmul.mubr.bf16.gmra.mxu0 %v256
    %v292 = vpop.f32.mrf.mxu0
    %v293 = vadd.f32 0.0, %v292
    %v294 = vpop.f32.mrf.mxu0
    %v295 = vpop.f32.mrf.mxu0
    %v296 = vpop.f32.mrf.mxu0
    %297 = vdwg.mxu0
    %v298 = vadd.f32 %v250, %v293
    %v299 = vxor.u32 %v298, 2147483648
    %v300 = vmul.f32 %v299, 1.442695
    %v301 = vpow.pop %v300
    %v302 = vadd.f32 %v301, 1.0
    %v303 = vrcp.pop %v302
    %v304 = vmul.f32 1.0, %v303
    %v305 = vtanh.pop %v298
    %v306 = vmul.f32 %v304, %v236
    %308 = vrot.lane.b32.xlu0 %v305, 64
    %v309 = vpop.permute.xlu0 %308
    %v311 = vmul.f32 %v304, %v309
    %313 = vrot.lane.b32.xlu0 %v311, 32
    %v314 = vpop.permute.xlu0 %313
    %v316 = vadd.f32 %v306, %v314
    %v317 = vtanh.pop %v316
    %319 = vrot.lane.b32.xlu0 %v317, 64
    %v320 = vpop.permute.xlu0 %319
    %v322 = vmul.f32 %v304, %v320
    %324 = vrot.lane.b32.xlu0 %v322, 32
    %v325 = vpop.permute.xlu0 %324
    %s327 = scalar_lea.vmem [#allocation6], 4
    %328 = vst.msk [vmem:[%s327] sm:$0x3] %vm167, %v325
    %s329 = scalar_lea.vmem %s0, 6
    %v330 = vld [vmem:[%s329] sm:$0x3]
    %v331 = vpack.c.bf16 %v322, %v322
    %333 = vrot.lane.b32.xlu0 %v331, 32
    %v334 = vpop.permute.xlu0 %333
    %v336 = vsel %vm90, %v334, 0
    %338 = vmatprep.subr.bf16.mxu0 0
    %339 = vmatpush1.bf16.msra.mxu0 0
    %340 = vmatprep.subr.bf16.mxu0 0
    %341 = vmatpush1.bf16.msra.mxu0 0
    %342 = vmatprep.subr.bf16.mxu0 0
    %343 = vmatpush1.bf16.msra.mxu0 0
    %344 = vmatprep.subr.bf16.mxu0 0
    %345 = vmatpush1.bf16.msra.mxu0 0
    %346 = vmatprep.subr.bf16.mxu0 0
    %347 = vmatpush1.bf16.msra.mxu0 0
    %348 = vmatprep.subr.bf16.mxu0 0
    %349 = vmatpush1.bf16.msra.mxu0 0
    %350 = vmatprep.subr.bf16.mxu0 0
    %351 = vmatpush1.bf16.msra.mxu0 %v87
    %352 = vmatprep.subr.bf16.mxu0 0
    %353 = vmatpush1.bf16.msra.mxu0 %v86
    %354 = vmatprep.subr.bf16.mxu0 0
    %355 = vmatpush2.bf16.msra.mxu0 0
    %356 = vmatprep.subr.bf16.mxu0 0
    %357 = vmatpush2.bf16.msra.mxu0 0
    %358 = vmatprep.subr.bf16.mxu0 0
    %359 = vmatpush2.bf16.msra.mxu0 0
    %360 = vmatprep.subr.bf16.mxu0 0
    %361 = vmatpush2.bf16.msra.mxu0 0
    %362 = vmatprep.subr.bf16.mxu0 0
    %363 = vmatpush2.bf16.msra.mxu0 0
    %364 = vmatprep.subr.bf16.mxu0 0
    %365 = vmatpush2.bf16.msra.mxu0 0
    %366 = vmatprep.subr.bf16.mxu0 0
    %367 = vmatpush2.bf16.msra.mxu0 0
    %368 = vmatprep.subr.bf16.mxu0 0
    %369 = vmatpush2.bf16.msra.mxu0 0
    %370 = vmatprep.mubr.bf16.mxu0 0
    %371 = vmatmul.mubr.bf16.gmra.mxu0 %v336
    %v372 = vpop.f32.mrf.mxu0
    %v373 = vadd.f32 0.0, %v372
    %v374 = vpop.f32.mrf.mxu0
    %v375 = vpop.f32.mrf.mxu0
    %v376 = vpop.f32.mrf.mxu0
    %377 = vdwg.mxu0
    %v378 = vadd.f32 %v330, %v373
    %v379 = vxor.u32 %v378, 2147483648
    %v380 = vmul.f32 %v379, 1.442695
    %v381 = vpow.pop %v380
    %v382 = vadd.f32 %v381, 1.0
    %v383 = vrcp.pop %v382
    %v384 = vmul.f32 1.0, %v383
    %v385 = vtanh.pop %v378
    %v386 = vmul.f32 %v384, %v316
    %388 = vrot.lane.b32.xlu0 %v385, 64
    %v389 = vpop.permute.xlu0 %388
    %v391 = vmul.f32 %v384, %v389
    %393 = vrot.lane.b32.xlu0 %v391, 32
    %v394 = vpop.permute.xlu0 %393
    %v396 = vadd.f32 %v386, %v394
    %v397 = vtanh.pop %v396
    %399 = vrot.lane.b32.xlu0 %v397, 64
    %v400 = vpop.permute.xlu0 %399
    %v402 = vmul.f32 %v384, %v400
    %404 = vrot.lane.b32.xlu0 %v402, 32
    %v405 = vpop.permute.xlu0 %404
    %s407 = scalar_lea.vmem [#allocation6], 6
    %408 = vst.msk [vmem:[%s407] sm:$0x3] %vm167, %v405
    %s409 = scalar_lea.vmem %s0, 8
    %v410 = vld [vmem:[%s409] sm:$0x3]
    %v411 = vpack.c.bf16 %v402, %v402
    %413 = vrot.lane.b32.xlu0 %v411, 32
    %v414 = vpop.permute.xlu0 %413
    %v416 = vsel %vm90, %v414, 0
    %418 = vmatprep.subr.bf16.mxu0 0
    %419 = vmatpush1.bf16.msra.mxu0 0
    %420 = vmatprep.subr.bf16.mxu0 0
    %421 = vmatpush1.bf16.msra.mxu0 0
    %422 = vmatprep.subr.bf16.mxu0 0
    %423 = vmatpush1.bf16.msra.mxu0 0
    %424 = vmatprep.subr.bf16.mxu0 0
    %425 = vmatpush1.bf16.msra.mxu0 0
    %426 = vmatprep.subr.bf16.mxu0 0
    %427 = vmatpush1.bf16.msra.mxu0 0
    %428 = vmatprep.subr.bf16.mxu0 0
    %429 = vmatpush1.bf16.msra.mxu0 0
    %430 = vmatprep.subr.bf16.mxu0 0
    %431 = vmatpush1.bf16.msra.mxu0 %v87
    %432 = vmatprep.subr.bf16.mxu0 0
    %433 = vmatpush1.bf16.msra.mxu0 %v86
    %434 = vmatprep.subr.bf16.mxu0 0
    %435 = vmatpush2.bf16.msra.mxu0 0
    %436 = vmatprep.subr.bf16.mxu0 0
    %437 = vmatpush2.bf16.msra.mxu0 0
    %438 = vmatprep.subr.bf16.mxu0 0
    %439 = vmatpush2.bf16.msra.mxu0 0
    %440 = vmatprep.subr.bf16.mxu0 0
    %441 = vmatpush2.bf16.msra.mxu0 0
    %442 = vmatprep.subr.bf16.mxu0 0
    %443 = vmatpush2.bf16.msra.mxu0 0
    %444 = vmatprep.subr.bf16.mxu0 0
    %445 = vmatpush2.bf16.msra.mxu0 0
    %446 = vmatprep.subr.bf16.mxu0 0
    %447 = vmatpush2.bf16.msra.mxu0 0
    %448 = vmatprep.subr.bf16.mxu0 0
    %449 = vmatpush2.bf16.msra.mxu0 0
    %450 = vmatprep.mubr.bf16.mxu0 0
    %451 = vmatmul.mubr.bf16.gmra.mxu0 %v416
    %v452 = vpop.f32.mrf.mxu0
    %v453 = vadd.f32 0.0, %v452
    %v454 = vpop.f32.mrf.mxu0
    %v455 = vpop.f32.mrf.mxu0
    %v456 = vpop.f32.mrf.mxu0
    %457 = vdwg.mxu0
    %v458 = vadd.f32 %v410, %v453
    %v459 = vxor.u32 %v458, 2147483648
    %v460 = vmul.f32 %v459, 1.442695
    %v461 = vpow.pop %v460
    %v462 = vadd.f32 %v461, 1.0
    %v463 = vrcp.pop %v462
    %v464 = vmul.f32 1.0, %v463
    %v465 = vtanh.pop %v458
    %v466 = vmul.f32 %v464, %v396
    %468 = vrot.lane.b32.xlu0 %v465, 64
    %v469 = vpop.permute.xlu0 %468
    %v471 = vmul.f32 %v464, %v469
    %473 = vrot.lane.b32.xlu0 %v471, 32
    %v474 = vpop.permute.xlu0 %473
    %v476 = vadd.f32 %v466, %v474
    %v477 = vtanh.pop %v476
    %479 = vrot.lane.b32.xlu0 %v477, 64
    %v480 = vpop.permute.xlu0 %479
    %v482 = vmul.f32 %v464, %v480
    %484 = vrot.lane.b32.xlu0 %v482, 32
    %v485 = vpop.permute.xlu0 %484
    %s487 = scalar_lea.vmem [#allocation6], 8
    %488 = vst.msk [vmem:[%s487] sm:$0x3] %vm167, %v485
    %s489 = scalar_lea.vmem %s0, 10
    %v490 = vld [vmem:[%s489] sm:$0x3]
    %v491 = vpack.c.bf16 %v482, %v482
    %493 = vrot.lane.b32.xlu0 %v491, 32
    %v494 = vpop.permute.xlu0 %493
    %v496 = vsel %vm90, %v494, 0
    %498 = vmatprep.subr.bf16.mxu0 0
    %499 = vmatpush1.bf16.msra.mxu0 0
    %500 = vmatprep.subr.bf16.mxu0 0
    %501 = vmatpush1.bf16.msra.mxu0 0
    %502 = vmatprep.subr.bf16.mxu0 0
    %503 = vmatpush1.bf16.msra.mxu0 0
    %504 = vmatprep.subr.bf16.mxu0 0
    %505 = vmatpush1.bf16.msra.mxu0 0
    %506 = vmatprep.subr.bf16.mxu0 0
    %507 = vmatpush1.bf16.msra.mxu0 0
    %508 = vmatprep.subr.bf16.mxu0 0
    %509 = vmatpush1.bf16.msra.mxu0 0
    %510 = vmatprep.subr.bf16.mxu0 0
    %511 = vmatpush1.bf16.msra.mxu0 %v87
    %512 = vmatprep.subr.bf16.mxu0 0
    %513 = vmatpush1.bf16.msra.mxu0 %v86
    %514 = vmatprep.subr.bf16.mxu0 0
    %515 = vmatpush2.bf16.msra.mxu0 0
    %516 = vmatprep.subr.bf16.mxu0 0
    %517 = vmatpush2.bf16.msra.mxu0 0
    %518 = vmatprep.subr.bf16.mxu0 0
    %519 = vmatpush2.bf16.msra.mxu0 0
    %520 = vmatprep.subr.bf16.mxu0 0
    %521 = vmatpush2.bf16.msra.mxu0 0
    %522 = vmatprep.subr.bf16.mxu0 0
    %523 = vmatpush2.bf16.msra.mxu0 0
    %524 = vmatprep.subr.bf16.mxu0 0
    %525 = vmatpush2.bf16.msra.mxu0 0
    %526 = vmatprep.subr.bf16.mxu0 0
    %527 = vmatpush2.bf16.msra.mxu0 0
    %528 = vmatprep.subr.bf16.mxu0 0
    %529 = vmatpush2.bf16.msra.mxu0 0
    %530 = vmatprep.mubr.bf16.mxu0 0
    %531 = vmatmul.mubr.bf16.gmra.mxu0 %v496
    %v532 = vpop.f32.mrf.mxu0
    %v533 = vadd.f32 0.0, %v532
    %v534 = vpop.f32.mrf.mxu0
    %v535 = vpop.f32.mrf.mxu0
    %v536 = vpop.f32.mrf.mxu0
    %537 = vdwg.mxu0
    %v538 = vadd.f32 %v490, %v533
    %v539 = vxor.u32 %v538, 2147483648
    %v540 = vmul.f32 %v539, 1.442695
    %v541 = vpow.pop %v540
    %v542 = vadd.f32 %v541, 1.0
    %v543 = vrcp.pop %v542
    %v544 = vmul.f32 1.0, %v543
    %v545 = vtanh.pop %v538
    %v546 = vmul.f32 %v544, %v476
    %548 = vrot.lane.b32.xlu0 %v545, 64
    %v549 = vpop.permute.xlu0 %548
    %v551 = vmul.f32 %v544, %v549
    %553 = vrot.lane.b32.xlu0 %v551, 32
    %v554 = vpop.permute.xlu0 %553
    %v556 = vadd.f32 %v546, %v554
    %v557 = vtanh.pop %v556
    %559 = vrot.lane.b32.xlu0 %v557, 64
    %v560 = vpop.permute.xlu0 %559
    %v562 = vmul.f32 %v544, %v560
    %564 = vrot.lane.b32.xlu0 %v562, 32
    %v565 = vpop.permute.xlu0 %564
    %s567 = scalar_lea.vmem [#allocation6], 10
    %568 = vst.msk [vmem:[%s567] sm:$0x3] %vm167, %v565
    %s569 = scalar_lea.vmem %s0, 12
    %v570 = vld [vmem:[%s569] sm:$0x3]
    %v571 = vpack.c.bf16 %v562, %v562
    %573 = vrot.lane.b32.xlu0 %v571, 32
    %v574 = vpop.permute.xlu0 %573
    %v576 = vsel %vm90, %v574, 0
    %578 = vmatprep.subr.bf16.mxu0 0
    %579 = vmatpush1.bf16.msra.mxu0 0
    %580 = vmatprep.subr.bf16.mxu0 0
    %581 = vmatpush1.bf16.msra.mxu0 0
    %582 = vmatprep.subr.bf16.mxu0 0
    %583 = vmatpush1.bf16.msra.mxu0 0
    %584 = vmatprep.subr.bf16.mxu0 0
    %585 = vmatpush1.bf16.msra.mxu0 0
    %586 = vmatprep.subr.bf16.mxu0 0
    %587 = vmatpush1.bf16.msra.mxu0 0
    %588 = vmatprep.subr.bf16.mxu0 0
    %589 = vmatpush1.bf16.msra.mxu0 0
    %590 = vmatprep.subr.bf16.mxu0 0
    %591 = vmatpush1.bf16.msra.mxu0 %v87
    %592 = vmatprep.subr.bf16.mxu0 0
    %593 = vmatpush1.bf16.msra.mxu0 %v86
    %594 = vmatprep.subr.bf16.mxu0 0
    %595 = vmatpush2.bf16.msra.mxu0 0
    %596 = vmatprep.subr.bf16.mxu0 0
    %597 = vmatpush2.bf16.msra.mxu0 0
    %598 = vmatprep.subr.bf16.mxu0 0
    %599 = vmatpush2.bf16.msra.mxu0 0
    %600 = vmatprep.subr.bf16.mxu0 0
    %601 = vmatpush2.bf16.msra.mxu0 0
    %602 = vmatprep.subr.bf16.mxu0 0
    %603 = vmatpush2.bf16.msra.mxu0 0
    %604 = vmatprep.subr.bf16.mxu0 0
    %605 = vmatpush2.bf16.msra.mxu0 0
    %606 = vmatprep.subr.bf16.mxu0 0
    %607 = vmatpush2.bf16.msra.mxu0 0
    %608 = vmatprep.subr.bf16.mxu0 0
    %609 = vmatpush2.bf16.msra.mxu0 0
    %610 = vmatprep.mubr.bf16.mxu0 0
    %611 = vmatmul.mubr.bf16.gmra.mxu0 %v576
    %v612 = vpop.f32.mrf.mxu0
    %v613 = vadd.f32 0.0, %v612
    %v614 = vpop.f32.mrf.mxu0
    %v615 = vpop.f32.mrf.mxu0
    %v616 = vpop.f32.mrf.mxu0
    %617 = vdwg.mxu0
    %v618 = vadd.f32 %v570, %v613
    %v619 = vxor.u32 %v618, 2147483648
    %v620 = vmul.f32 %v619, 1.442695
    %v621 = vpow.pop %v620
    %v622 = vadd.f32 %v621, 1.0
    %v623 = vrcp.pop %v622
    %v624 = vmul.f32 1.0, %v623
    %v625 = vtanh.pop %v618
    %v626 = vmul.f32 %v624, %v556
    %628 = vrot.lane.b32.xlu0 %v625, 64
    %v629 = vpop.permute.xlu0 %628
    %v631 = vmul.f32 %v624, %v629
    %633 = vrot.lane.b32.xlu0 %v631, 32
    %v634 = vpop.permute.xlu0 %633
    %v636 = vadd.f32 %v626, %v634
    %v637 = vtanh.pop %v636
    %639 = vrot.lane.b32.xlu0 %v637, 64
    %v640 = vpop.permute.xlu0 %639
    %v642 = vmul.f32 %v624, %v640
    %644 = vrot.lane.b32.xlu0 %v642, 32
    %v645 = vpop.permute.xlu0 %644
    %s647 = scalar_lea.vmem [#allocation6], 12
    %648 = vst.msk [vmem:[%s647] sm:$0x3] %vm167, %v645
    %s649 = scalar_lea.vmem %s0, 14
    %v650 = vld [vmem:[%s649] sm:$0x3]
    %v651 = vpack.c.bf16 %v642, %v642
    %653 = vrot.lane.b32.xlu0 %v651, 32
    %v654 = vpop.permute.xlu0 %653
    %v656 = vsel %vm90, %v654, 0
    %658 = vmatprep.subr.bf16.mxu0 0
    %659 = vmatpush1.bf16.msra.mxu0 0
    %660 = vmatprep.subr.bf16.mxu0 0
    %661 = vmatpush1.bf16.msra.mxu0 0
    %662 = vmatprep.subr.bf16.mxu0 0
    %663 = vmatpush1.bf16.msra.mxu0 0
    %664 = vmatprep.subr.bf16.mxu0 0
    %665 = vmatpush1.bf16.msra.mxu0 0
    %666 = vmatprep.subr.bf16.mxu0 0
    %667 = vmatpush1.bf16.msra.mxu0 0
    %668 = vmatprep.subr.bf16.mxu0 0
    %669 = vmatpush1.bf16.msra.mxu0 0
    %670 = vmatprep.subr.bf16.mxu0 0
    %671 = vmatpush1.bf16.msra.mxu0 %v87
    %672 = vmatprep.subr.bf16.mxu0 0
    %673 = vmatpush1.bf16.msra.mxu0 %v86
    %674 = vmatprep.subr.bf16.mxu0 0
    %675 = vmatpush2.bf16.msra.mxu0 0
    %676 = vmatprep.subr.bf16.mxu0 0
    %677 = vmatpush2.bf16.msra.mxu0 0
    %678 = vmatprep.subr.bf16.mxu0 0
    %679 = vmatpush2.bf16.msra.mxu0 0
    %680 = vmatprep.subr.bf16.mxu0 0
    %681 = vmatpush2.bf16.msra.mxu0 0
    %682 = vmatprep.subr.bf16.mxu0 0
    %683 = vmatpush2.bf16.msra.mxu0 0
    %684 = vmatprep.subr.bf16.mxu0 0
    %685 = vmatpush2.bf16.msra.mxu0 0
    %686 = vmatprep.subr.bf16.mxu0 0
    %687 = vmatpush2.bf16.msra.mxu0 0
    %688 = vmatprep.subr.bf16.mxu0 0
    %689 = vmatpush2.bf16.msra.mxu0 0
    %690 = vmatprep.mubr.bf16.mxu0 0
    %691 = vmatmul.mubr.bf16.gmra.mxu0 %v656
    %v692 = vpop.f32.mrf.mxu0
    %v693 = vadd.f32 0.0, %v692
    %v694 = vpop.f32.mrf.mxu0
    %v695 = vpop.f32.mrf.mxu0
    %v696 = vpop.f32.mrf.mxu0
    %697 = vdwg.mxu0
    %v698 = vadd.f32 %v650, %v693
    %v699 = vxor.u32 %v698, 2147483648
    %v700 = vmul.f32 %v699, 1.442695
    %v701 = vpow.pop %v700
    %v702 = vadd.f32 %v701, 1.0
    %v703 = vrcp.pop %v702
    %v704 = vmul.f32 1.0, %v703
    %v705 = vtanh.pop %v698
    %v706 = vmul.f32 %v704, %v636
    %708 = vrot.lane.b32.xlu0 %v705, 64
    %v709 = vpop.permute.xlu0 %708
    %v711 = vmul.f32 %v704, %v709
    %713 = vrot.lane.b32.xlu0 %v711, 32
    %v714 = vpop.permute.xlu0 %713
    %v716 = vadd.f32 %v706, %v714
    %v717 = vtanh.pop %v716
    %719 = vrot.lane.b32.xlu0 %v717, 64
    %v720 = vpop.permute.xlu0 %719
    %v722 = vmul.f32 %v704, %v720
    %724 = vrot.lane.b32.xlu0 %v722, 32
    %v725 = vpop.permute.xlu0 %724
    %s727 = scalar_lea.vmem [#allocation6], 14
    %728 = vst.msk [vmem:[%s727] sm:$0x3] %vm167, %v725
    %729 = vst.msk [vmem:[#allocation3] sm:$0x3] %vm167, %v725
    %731 = vrot.lane.b32.xlu0 %v716, 96
    %v732 = vpop.permute.xlu0 %731
    %734 = vst.msk [vmem:[#allocation4] sm:$0x3] %vm167, %v732
    // Predicated region
    $region44: #{encoder_forward.7} parent=1 // pred_check
      %p735 = pneg %p14
    $region45: #{encoder_forward.7} parent=1 // pred_check_branch
      %737 = sbr.rel (%p735) target = $region47
    $region46: #{encoder_forward.7} parent=1 // pred_region
      %738 = vst.msk [vmem:[%s3] sm:$0x3] %vm167, %v725
      %739 = vst.msk [vmem:[%s4] sm:$0x3] %vm167, %v732
    $region47: #{encoder_forward.7} parent=1 // pred_fallthru
      _
    // Predicated region
    $region48: #{encoder_forward.7} parent=1 // pred_check
      _
    $region49: #{encoder_forward.7} parent=1 // pred_check_branch
      %741 = sbr.rel (0) target = $region51
    $region50: #{encoder_forward.7} parent=1 // pred_region
      %s743 = ssub.s32 256, 256
      %744 = vsyncadd [#allocation7], %s743
      %s745 = sshll.u32 [#allocation6], 4
      %s746 = int_to_ptr.vmem [resolvable:$true] %s745
      %751 = dma.vmem_to_hbm [thread:$0]  %s746, 256, %s2, [#allocation7], 32, 32, 2
    $region51: #{encoder_forward.7} parent=1 // pred_fallthru
      _
    // Predicated region
    $region52: #{encoder_forward.7} parent=1 // pred_check
      _
    $region53: #{encoder_forward.7} parent=1 // pred_check_branch
      %753 = sbr.rel (0) target = $region55
    $region54: #{encoder_forward.7} parent=1 // pred_region
      _
    $region55: #{encoder_forward.7} parent=1 // pred_fallthru
      _
    // Predicated region
    $region56: #{encoder_forward.7} parent=1 // pred_check
      _
    $region57: #{encoder_forward.7} parent=1 // pred_check_branch
      %755 = sbr.rel (0) target = $region59
    $region58: #{encoder_forward.7} parent=1 // pred_region
      _
    $region59: #{encoder_forward.7} parent=1 // pred_fallthru
      _
    // Predicated region
    $region60: #{encoder_forward.7} parent=1 // pred_check
      _
    $region61: #{encoder_forward.7} parent=1 // pred_check_branch
      %757 = sbr.rel (0) target = $region63
    $region62: #{encoder_forward.7} parent=1 // pred_region
      %758 = dma.done [#allocation7], 256
    $region63: #{encoder_forward.7} parent=1 // pred_fallthru
      _
    // Predicated region
    $region64: #{encoder_forward.7} parent=1 // pred_check
      _
    $region65: #{encoder_forward.7} parent=1 // pred_check_branch
      %760 = sbr.rel (0) target = $region67
    $region66: #{encoder_forward.7} parent=1 // pred_region
      _
    $region67: #{encoder_forward.7} parent=1 // pred_fallthru
      _
    // Predicated region
    $region68: #{encoder_forward.7} parent=1 // pred_check
      _
    $region69: #{encoder_forward.7} parent=1 // pred_check_branch
      %762 = sbr.rel (0) target = $region71
    $region70: #{encoder_forward.7} parent=1 // pred_region
      _
    $region71: #{encoder_forward.7} parent=1 // pred_fallthru
      _
    %763 = vsyncpa [#allocation7], 1
  %764 = vsyncmov [#allocation5]
  %s765 = vpop.sfrf %764
  %p766 = scmp.eq.s32.totalorder %s765, 0
  %p767 = pneg %p766
  %769 = shalt.err (%p767)

// kernel: encoder_forward.5
$region0: #{encoder_forward.5}
  #allocation0 [shape = 'u32[]', space=smem, size = 0x4, offset = 0x4, fixed_abs, tag = 'smem constant byte address 0x4 - core index']
  #allocation1 [shape = 'u32[144,128]{1,0:T(1,128)}', space=vmem, size = 0x12000, scoped, tag = 'internal scratch']
  #allocation2 [shape = 'bf16[32,128]{1,0:T(8,128)(2,1)}', space=vmem, size = 0x2000, scoped, tag = 'scratch operand']
  #allocation3 [shape = 'f32[2,32]{1,0:T(2,128)}', space=vmem, size = 0x400, scoped, tag = 'scratch operand']
  #allocation4 [shape = 'f32[2,32]{1,0:T(2,128)}', space=vmem, size = 0x400, scoped, tag = 'scratch operand']
  #allocation5 [shape = 's32[1]{0}', space=sflag, size = 0x4, scoped, tag = 'scratch operand']
  #allocation6 [shape = 's32[]', space=sflag, size = 0x4, offset = 0, fixed_abs, tag = 'sflag constant byte address 0x0 - dummy sync flag']
  %s0 = inlined_call_operand.vmem [shape: f32[8,2,128], index: 0, kind: input, shape index: {}]
  %s1 = inlined_call_operand.vmem [shape: bf16[32,128], index: 1, kind: input, shape index: {}]
  %s2 = inlined_call_operand.vmem [shape: f32[8,2,32], index: 2, kind: output, shape index: {0}]
  %s3 = inlined_call_operand.vmem [shape: f32[2,32], index: 3, kind: output, shape index: {1}]
  %s4 = inlined_call_operand.vmem [shape: f32[2,32], index: 4, kind: output, shape index: {2}]
  %5 = xla_tuple %s2, %s3, %s4
  %s6 = sld [smem:[#allocation0]]
  $region72: #{encoder_forward.5} parent=0
    _
  %s8 = ssub.s32 1, %s6
  %s9 = scalar_select 0, %s8, %s6
  // Predicated region
  $region2: #{encoder_forward.5} parent=0 // pred_check
    _
  $region3: #{encoder_forward.5} parent=0 // pred_check_branch
    %11 = sbr.rel (0) target = $region5
  $region4: #{encoder_forward.5} parent=0 // pred_region
    _
  $region5: #{encoder_forward.5} parent=0 // pred_fallthru
    _
  %p13 = scmp.eq.s32.totalorder 0, 0
  // Predicated region
  $region6: #{encoder_forward.5} parent=0 // pred_check
    %p14 = pneg %p13
  $region7: #{encoder_forward.5} parent=0 // pred_check_branch
    %16 = sbr.rel (%p14) target = $region9
  $region8: #{encoder_forward.5} parent=0 // pred_region
    %p18 = scmp.lt.u32.totalorder 16, 8
    %p19 = pneg %p18
    // Predicated region
    $region10: #{encoder_forward.5} parent=8 // pred_check
      _
    $region11: #{encoder_forward.5} parent=8 // pred_check_branch
      %21 = sbr.rel (%p18) target = $region13
    $region12: #{encoder_forward.5} parent=8 // pred_region
      %s37 = sand.u32 16, 7
      %p38 = scmp.eq.s32.totalorder %s37, 0
      // Predicated region
      $region25: #{encoder_forward.5} parent=12 // pred_check
        %p39 = pneg %p38
      $region26: #{encoder_forward.5} parent=12 // pred_check_branch
        %41 = sbr.rel (%p39) target = $region28
      $region27: #{encoder_forward.5} parent=12 // pred_region
        loop: start=0, step=1, limit=1
        $region29: #{encoder_forward.5} parent=27 // loop_pre_header
          _
        $region30: #{encoder_forward.5} parent=27 // loop_header
          %s43 = sphi 0, %s47
          %p44 = scmp.ge.s32.totalorder %s43, 1
          %s48 = sphi %s1, %s1
          %s49 = sphi [#allocation2], [#allocation2]
        $region31: #{encoder_forward.5} parent=27 // loop_header_branch
          %46 = sbr.rel (%p44) target = $region35
        $region32: #{encoder_forward.5} parent=27 // loop_body
          %v50 = vld [vmem:[%s48] sm:$0xff]
          %51 = vst [vmem:[%s49] sm:$0xff] %v50
          %v52 = vld [vmem:[%s48 + $0x8] sm:$0xff]
          %53 = vst [vmem:[%s49 + $0x8] sm:$0xff] %v52
        $region33: #{encoder_forward.5} parent=27 // loop_footer
          %s47 = sadd.s32 1, %s43
        $region34: #{encoder_forward.5} parent=27 // loop_footer_branch
          %42 = sbr.rel target = $region30
        $region35: #{encoder_forward.5} parent=27 // loop_exit
          _
      $region28: #{encoder_forward.5} parent=12 // pred_fallthru
        _
      %p54 = pneg %p38
      // Predicated region
      $region36: #{encoder_forward.5} parent=12 // pred_check
        _
      $region37: #{encoder_forward.5} parent=12 // pred_check_branch
        %56 = sbr.rel (%p38) target = $region39
      $region38: #{encoder_forward.5} parent=12 // pred_region
        %s57 = sand.u32 16, 7
      $region39: #{encoder_forward.5} parent=12 // pred_fallthru
        _
    $region13: #{encoder_forward.5} parent=8 // pred_fallthru
      _
    // Predicated region
    $region14: #{encoder_forward.5} parent=8 // pred_check
      %p22 = pneg %p18
    $region15: #{encoder_forward.5} parent=8 // pred_check_branch
      %24 = sbr.rel (%p22) target = $region17
    $region16: #{encoder_forward.5} parent=8 // pred_region
      %s25 = sshll.u32 1, 16
      %s26 = ssub.s32 %s25, 1
      loop: start=0, step=1, limit=1
      $region18: #{encoder_forward.5} parent=16 // loop_pre_header
        _
      $region19: #{encoder_forward.5} parent=16 // loop_header
        %s28 = sphi 0, %s32
        %p29 = scmp.ge.s32.totalorder %s28, 1
        %s33 = sphi %s1, %s1
        %s34 = sphi [#allocation2], [#allocation2]
      $region20: #{encoder_forward.5} parent=16 // loop_header_branch
        %31 = sbr.rel (%p29) target = $region24
      $region21: #{encoder_forward.5} parent=16 // loop_body
        %v35 = vld [vmem:[%s33] sm:%s26]
        %36 = vst [vmem:[%s34] sm:%s26] %v35
      $region22: #{encoder_forward.5} parent=16 // loop_footer
        %s32 = sadd.s32 1, %s28
      $region23: #{encoder_forward.5} parent=16 // loop_footer_branch
        %27 = sbr.rel target = $region19
      $region24: #{encoder_forward.5} parent=16 // loop_exit
        _
    $region17: #{encoder_forward.5} parent=8 // pred_fallthru
      _
    // Predicated region
    $region40: #{encoder_forward.5} parent=8 // pred_check
      _
    $region41: #{encoder_forward.5} parent=8 // pred_check_branch
      %60 = sbr.rel (0) target = $region43
    $region42: #{encoder_forward.5} parent=8 // pred_region
      %61 = vsyncadd [#allocation5], 256
    $region43: #{encoder_forward.5} parent=8 // pred_fallthru
      _
    %s62 = smul.u32 4, 4
    %s63 = smul.u32 %s62, 1
    %s64 = sshll.u32 %s63, 4
    %65 = dma.done [#allocation5], %s64
    %vm66 = vcmask 254976
    %67 = vst.msk [vmem:[#allocation3] sm:$0x3] %vm66, 0.0
    %68 = vst.msk [vmem:[#allocation4] sm:$0x3] %vm66, 0.0
  $region9: #{encoder_forward.5} parent=0 // pred_fallthru
    _
  %v69 = vld [vmem:[#allocation2] sm:$0xf]
  %v70 = vld [vmem:[#allocation2 + $0x4] sm:$0xf]
  %v71 = vld [vmem:[#allocation2 + $0x8] sm:$0xf]
  %v72 = vld [vmem:[#allocation2 + $0xc] sm:$0xf]
  %v73 = vld [vmem:[#allocation3] sm:$0x3]
  %v74 = vld [vmem:[#allocation4] sm:$0x3]
  %v75 = vld [vmem:[%s0] sm:$0x3]
  %v76 = vpack.c.bf16 %v73, %v73
  %v81 = vunpack.c.l.b16 %v69
  %v82 = vunpack.c.l.b16 %v70
  %v83 = vunpack.c.l.b16 %v71
  %v84 = vunpack.c.l.b16 %v72
  %v85 = vpack.c.b16 %v82, %v81
  %v86 = vpack.c.b16 %v84, %v83
  %vm89 = vcmask 261120
  %v91 = vsel %vm89, %v76, 0
  %93 = vmatprep.subr.bf16.mxu0 0
  %94 = vmatpush1.bf16.msra.mxu0 0
  %95 = vmatprep.subr.bf16.mxu0 0
  %96 = vmatpush1.bf16.msra.mxu0 0
  %97 = vmatprep.subr.bf16.mxu0 0
  %98 = vmatpush1.bf16.msra.mxu0 0
  %99 = vmatprep.subr.bf16.mxu0 0
  %100 = vmatpush1.bf16.msra.mxu0 0
  %101 = vmatprep.subr.bf16.mxu0 0
  %102 = vmatpush1.bf16.msra.mxu0 0
  %103 = vmatprep.subr.bf16.mxu0 0
  %104 = vmatpush1.bf16.msra.mxu0 0
  %105 = vmatprep.subr.bf16.mxu0 0
  %106 = vmatpush1.bf16.msra.mxu0 %v86
  %107 = vmatprep.subr.bf16.mxu0 0
  %108 = vmatpush1.bf16.msra.mxu0 %v85
  %109 = vmatprep.subr.bf16.mxu0 0
  %110 = vmatpush2.bf16.msra.mxu0 0
  %111 = vmatprep.subr.bf16.mxu0 0
  %112 = vmatpush2.bf16.msra.mxu0 0
  %113 = vmatprep.subr.bf16.mxu0 0
  %114 = vmatpush2.bf16.msra.mxu0 0
  %115 = vmatprep.subr.bf16.mxu0 0
  %116 = vmatpush2.bf16.msra.mxu0 0
  %117 = vmatprep.subr.bf16.mxu0 0
  %118 = vmatpush2.bf16.msra.mxu0 0
  %119 = vmatprep.subr.bf16.mxu0 0
  %120 = vmatpush2.bf16.msra.mxu0 0
  %121 = vmatprep.subr.bf16.mxu0 0
  %122 = vmatpush2.bf16.msra.mxu0 0
  %123 = vmatprep.subr.bf16.mxu0 0
  %124 = vmatpush2.bf16.msra.mxu0 0
  %125 = vmatprep.mubr.bf16.mxu0 0
  %126 = vmatmul.mubr.bf16.gmra.mxu0 %v91
  %v127 = vpop.f32.mrf.mxu0
  %v128 = vadd.f32 0.0, %v127
  %v129 = vpop.f32.mrf.mxu0
  %v130 = vpop.f32.mrf.mxu0
  %v131 = vpop.f32.mrf.mxu0
  %132 = vdwg.mxu0
  %v133 = vadd.f32 %v75, %v128
  %v134 = vxor.u32 %v133, 2147483648
  %v135 = vmul.f32 %v134, 1.442695
  %v136 = vpow.pop %v135
  %v137 = vadd.f32 %v136, 1.0
  %v138 = vrcp.pop %v137
  %v139 = vmul.f32 1.0, %v138
  %v140 = vtanh.pop %v133
  %142 = vrot.lane.b32.xlu0 %v74, 32
  %v143 = vpop.permute.xlu0 %142
  %v145 = vmul.f32 %v139, %v143
  %147 = vrot.lane.b32.xlu0 %v140, 64
  %v148 = vpop.permute.xlu0 %147
  %v150 = vmul.f32 %v139, %v148
  %152 = vrot.lane.b32.xlu0 %v150, 32
  %v153 = vpop.permute.xlu0 %152
  %v155 = vadd.f32 %v145, %v153
  %v156 = vtanh.pop %v155
  %158 = vrot.lane.b32.xlu0 %v156, 64
  %v159 = vpop.permute.xlu0 %158
  %v161 = vmul.f32 %v139, %v159
  %163 = vrot.lane.b32.xlu0 %v161, 32
  %v164 = vpop.permute.xlu0 %163
  %vm166 = vcmask 254976
  %167 = vst.msk [vmem:[%s2] sm:$0x3] %vm166, %v164
  %s168 = scalar_lea.vmem %s0, 2
  %v169 = vld [vmem:[%s168] sm:$0x3]
  %v170 = vpack.c.bf16 %v161, %v161
  %172 = vrot.lane.b32.xlu0 %v170, 32
  %v173 = vpop.permute.xlu0 %172
  %v175 = vsel %vm89, %v173, 0
  %177 = vmatprep.subr.bf16.mxu0 0
  %178 = vmatpush1.bf16.msra.mxu0 0
  %179 = vmatprep.subr.bf16.mxu0 0
  %180 = vmatpush1.bf16.msra.mxu0 0
  %181 = vmatprep.subr.bf16.mxu0 0
  %182 = vmatpush1.bf16.msra.mxu0 0
  %183 = vmatprep.subr.bf16.mxu0 0
  %184 = vmatpush1.bf16.msra.mxu0 0
  %185 = vmatprep.subr.bf16.mxu0 0
  %186 = vmatpush1.bf16.msra.mxu0 0
  %187 = vmatprep.subr.bf16.mxu0 0
  %188 = vmatpush1.bf16.msra.mxu0 0
  %189 = vmatprep.subr.bf16.mxu0 0
  %190 = vmatpush1.bf16.msra.mxu0 %v86
  %191 = vmatprep.subr.bf16.mxu0 0
  %192 = vmatpush1.bf16.msra.mxu0 %v85
  %193 = vmatprep.subr.bf16.mxu0 0
  %194 = vmatpush2.bf16.msra.mxu0 0
  %195 = vmatprep.subr.bf16.mxu0 0
  %196 = vmatpush2.bf16.msra.mxu0 0
  %197 = vmatprep.subr.bf16.mxu0 0
  %198 = vmatpush2.bf16.msra.mxu0 0
  %199 = vmatprep.subr.bf16.mxu0 0
  %200 = vmatpush2.bf16.msra.mxu0 0
  %201 = vmatprep.subr.bf16.mxu0 0
  %202 = vmatpush2.bf16.msra.mxu0 0
  %203 = vmatprep.subr.bf16.mxu0 0
  %204 = vmatpush2.bf16.msra.mxu0 0
  %205 = vmatprep.subr.bf16.mxu0 0
  %206 = vmatpush2.bf16.msra.mxu0 0
  %207 = vmatprep.subr.bf16.mxu0 0
  %208 = vmatpush2.bf16.msra.mxu0 0
  %209 = vmatprep.mubr.bf16.mxu0 0
  %210 = vmatmul.mubr.bf16.gmra.mxu0 %v175
  %v211 = vpop.f32.mrf.mxu0
  %v212 = vadd.f32 0.0, %v211
  %v213 = vpop.f32.mrf.mxu0
  %v214 = vpop.f32.mrf.mxu0
  %v215 = vpop.f32.mrf.mxu0
  %216 = vdwg.mxu0
  %v217 = vadd.f32 %v169, %v212
  %v218 = vxor.u32 %v217, 2147483648
  %v219 = vmul.f32 %v218, 1.442695
  %v220 = vpow.pop %v219
  %v221 = vadd.f32 %v220, 1.0
  %v222 = vrcp.pop %v221
  %v223 = vmul.f32 1.0, %v222
  %v224 = vtanh.pop %v217
  %v225 = vmul.f32 %v223, %v155
  %227 = vrot.lane.b32.xlu0 %v224, 64
  %v228 = vpop.permute.xlu0 %227
  %v230 = vmul.f32 %v223, %v228
  %232 = vrot.lane.b32.xlu0 %v230, 32
  %v233 = vpop.permute.xlu0 %232
  %v235 = vadd.f32 %v225, %v233
  %v236 = vtanh.pop %v235
  %238 = vrot.lane.b32.xlu0 %v236, 64
  %v239 = vpop.permute.xlu0 %238
  %v241 = vmul.f32 %v223, %v239
  %243 = vrot.lane.b32.xlu0 %v241, 32
  %v244 = vpop.permute.xlu0 %243
  %s246 = scalar_lea.vmem %s2, 2
  %247 = vst.msk [vmem:[%s246] sm:$0x3] %vm166, %v244
  %s248 = scalar_lea.vmem %s0, 4
  %v249 = vld [vmem:[%s248] sm:$0x3]
  %v250 = vpack.c.bf16 %v241, %v241
  %252 = vrot.lane.b32.xlu0 %v250, 32
  %v253 = vpop.permute.xlu0 %252
  %v255 = vsel %vm89, %v253, 0
  %257 = vmatprep.subr.bf16.mxu0 0
  %258 = vmatpush1.bf16.msra.mxu0 0
  %259 = vmatprep.subr.bf16.mxu0 0
  %260 = vmatpush1.bf16.msra.mxu0 0
  %261 = vmatprep.subr.bf16.mxu0 0
  %262 = vmatpush1.bf16.msra.mxu0 0
  %263 = vmatprep.subr.bf16.mxu0 0
  %264 = vmatpush1.bf16.msra.mxu0 0
  %265 = vmatprep.subr.bf16.mxu0 0
  %266 = vmatpush1.bf16.msra.mxu0 0
  %267 = vmatprep.subr.bf16.mxu0 0
  %268 = vmatpush1.bf16.msra.mxu0 0
  %269 = vmatprep.subr.bf16.mxu0 0
  %270 = vmatpush1.bf16.msra.mxu0 %v86
  %271 = vmatprep.subr.bf16.mxu0 0
  %272 = vmatpush1.bf16.msra.mxu0 %v85
  %273 = vmatprep.subr.bf16.mxu0 0
  %274 = vmatpush2.bf16.msra.mxu0 0
  %275 = vmatprep.subr.bf16.mxu0 0
  %276 = vmatpush2.bf16.msra.mxu0 0
  %277 = vmatprep.subr.bf16.mxu0 0
  %278 = vmatpush2.bf16.msra.mxu0 0
  %279 = vmatprep.subr.bf16.mxu0 0
  %280 = vmatpush2.bf16.msra.mxu0 0
  %281 = vmatprep.subr.bf16.mxu0 0
  %282 = vmatpush2.bf16.msra.mxu0 0
  %283 = vmatprep.subr.bf16.mxu0 0
  %284 = vmatpush2.bf16.msra.mxu0 0
  %285 = vmatprep.subr.bf16.mxu0 0
  %286 = vmatpush2.bf16.msra.mxu0 0
  %287 = vmatprep.subr.bf16.mxu0 0
  %288 = vmatpush2.bf16.msra.mxu0 0
  %289 = vmatprep.mubr.bf16.mxu0 0
  %290 = vmatmul.mubr.bf16.gmra.mxu0 %v255
  %v291 = vpop.f32.mrf.mxu0
  %v292 = vadd.f32 0.0, %v291
  %v293 = vpop.f32.mrf.mxu0
  %v294 = vpop.f32.mrf.mxu0
  %v295 = vpop.f32.mrf.mxu0
  %296 = vdwg.mxu0
  %v297 = vadd.f32 %v249, %v292
  %v298 = vxor.u32 %v297, 2147483648
  %v299 = vmul.f32 %v298, 1.442695
  %v300 = vpow.pop %v299
  %v301 = vadd.f32 %v300, 1.0
  %v302 = vrcp.pop %v301
  %v303 = vmul.f32 1.0, %v302
  %v304 = vtanh.pop %v297
  %v305 = vmul.f32 %v303, %v235
  %307 = vrot.lane.b32.xlu0 %v304, 64
  %v308 = vpop.permute.xlu0 %307
  %v310 = vmul.f32 %v303, %v308
  %312 = vrot.lane.b32.xlu0 %v310, 32
  %v313 = vpop.permute.xlu0 %312
  %v315 = vadd.f32 %v305, %v313
  %v316 = vtanh.pop %v315
  %318 = vrot.lane.b32.xlu0 %v316, 64
  %v319 = vpop.permute.xlu0 %318
  %v321 = vmul.f32 %v303, %v319
  %323 = vrot.lane.b32.xlu0 %v321, 32
  %v324 = vpop.permute.xlu0 %323
  %s326 = scalar_lea.vmem %s2, 4
  %327 = vst.msk [vmem:[%s326] sm:$0x3] %vm166, %v324
  %s328 = scalar_lea.vmem %s0, 6
  %v329 = vld [vmem:[%s328] sm:$0x3]
  %v330 = vpack.c.bf16 %v321, %v321
  %332 = vrot.lane.b32.xlu0 %v330, 32
  %v333 = vpop.permute.xlu0 %332
  %v335 = vsel %vm89, %v333, 0
  %337 = vmatprep.subr.bf16.mxu0 0
  %338 = vmatpush1.bf16.msra.mxu0 0
  %339 = vmatprep.subr.bf16.mxu0 0
  %340 = vmatpush1.bf16.msra.mxu0 0
  %341 = vmatprep.subr.bf16.mxu0 0
  %342 = vmatpush1.bf16.msra.mxu0 0
  %343 = vmatprep.subr.bf16.mxu0 0
  %344 = vmatpush1.bf16.msra.mxu0 0
  %345 = vmatprep.subr.bf16.mxu0 0
  %346 = vmatpush1.bf16.msra.mxu0 0
  %347 = vmatprep.subr.bf16.mxu0 0
  %348 = vmatpush1.bf16.msra.mxu0 0
  %349 = vmatprep.subr.bf16.mxu0 0
  %350 = vmatpush1.bf16.msra.mxu0 %v86
  %351 = vmatprep.subr.bf16.mxu0 0
  %352 = vmatpush1.bf16.msra.mxu0 %v85
  %353 = vmatprep.subr.bf16.mxu0 0
  %354 = vmatpush2.bf16.msra.mxu0 0
  %355 = vmatprep.subr.bf16.mxu0 0
  %356 = vmatpush2.bf16.msra.mxu0 0
  %357 = vmatprep.subr.bf16.mxu0 0
  %358 = vmatpush2.bf16.msra.mxu0 0
  %359 = vmatprep.subr.bf16.mxu0 0
  %360 = vmatpush2.bf16.msra.mxu0 0
  %361 = vmatprep.subr.bf16.mxu0 0
  %362 = vmatpush2.bf16.msra.mxu0 0
  %363 = vmatprep.subr.bf16.mxu0 0
  %364 = vmatpush2.bf16.msra.mxu0 0
  %365 = vmatprep.subr.bf16.mxu0 0
  %366 = vmatpush2.bf16.msra.mxu0 0
  %367 = vmatprep.subr.bf16.mxu0 0
  %368 = vmatpush2.bf16.msra.mxu0 0
  %369 = vmatprep.mubr.bf16.mxu0 0
  %370 = vmatmul.mubr.bf16.gmra.mxu0 %v335
  %v371 = vpop.f32.mrf.mxu0
  %v372 = vadd.f32 0.0, %v371
  %v373 = vpop.f32.mrf.mxu0
  %v374 = vpop.f32.mrf.mxu0
  %v375 = vpop.f32.mrf.mxu0
  %376 = vdwg.mxu0
  %v377 = vadd.f32 %v329, %v372
  %v378 = vxor.u32 %v377, 2147483648
  %v379 = vmul.f32 %v378, 1.442695
  %v380 = vpow.pop %v379
  %v381 = vadd.f32 %v380, 1.0
  %v382 = vrcp.pop %v381
  %v383 = vmul.f32 1.0, %v382
  %v384 = vtanh.pop %v377
  %v385 = vmul.f32 %v383, %v315
  %387 = vrot.lane.b32.xlu0 %v384, 64
  %v388 = vpop.permute.xlu0 %387
  %v390 = vmul.f32 %v383, %v388
  %392 = vrot.lane.b32.xlu0 %v390, 32
  %v393 = vpop.permute.xlu0 %392
  %v395 = vadd.f32 %v385, %v393
  %v396 = vtanh.pop %v395
  %398 = vrot.lane.b32.xlu0 %v396, 64
  %v399 = vpop.permute.xlu0 %398
  %v401 = vmul.f32 %v383, %v399
  %403 = vrot.lane.b32.xlu0 %v401, 32
  %v404 = vpop.permute.xlu0 %403
  %s406 = scalar_lea.vmem %s2, 6
  %407 = vst.msk [vmem:[%s406] sm:$0x3] %vm166, %v404
  %s408 = scalar_lea.vmem %s0, 8
  %v409 = vld [vmem:[%s408] sm:$0x3]
  %v410 = vpack.c.bf16 %v401, %v401
  %412 = vrot.lane.b32.xlu0 %v410, 32
  %v413 = vpop.permute.xlu0 %412
  %v415 = vsel %vm89, %v413, 0
  %417 = vmatprep.subr.bf16.mxu0 0
  %418 = vmatpush1.bf16.msra.mxu0 0
  %419 = vmatprep.subr.bf16.mxu0 0
  %420 = vmatpush1.bf16.msra.mxu0 0
  %421 = vmatprep.subr.bf16.mxu0 0
  %422 = vmatpush1.bf16.msra.mxu0 0
  %423 = vmatprep.subr.bf16.mxu0 0
  %424 = vmatpush1.bf16.msra.mxu0 0
  %425 = vmatprep.subr.bf16.mxu0 0
  %426 = vmatpush1.bf16.msra.mxu0 0
  %427 = vmatprep.subr.bf16.mxu0 0
  %428 = vmatpush1.bf16.msra.mxu0 0
  %429 = vmatprep.subr.bf16.mxu0 0
  %430 = vmatpush1.bf16.msra.mxu0 %v86
  %431 = vmatprep.subr.bf16.mxu0 0
  %432 = vmatpush1.bf16.msra.mxu0 %v85
  %433 = vmatprep.subr.bf16.mxu0 0
  %434 = vmatpush2.bf16.msra.mxu0 0
  %435 = vmatprep.subr.bf16.mxu0 0
  %436 = vmatpush2.bf16.msra.mxu0 0
  %437 = vmatprep.subr.bf16.mxu0 0
  %438 = vmatpush2.bf16.msra.mxu0 0
  %439 = vmatprep.subr.bf16.mxu0 0
  %440 = vmatpush2.bf16.msra.mxu0 0
  %441 = vmatprep.subr.bf16.mxu0 0
  %442 = vmatpush2.bf16.msra.mxu0 0
  %443 = vmatprep.subr.bf16.mxu0 0
  %444 = vmatpush2.bf16.msra.mxu0 0
  %445 = vmatprep.subr.bf16.mxu0 0
  %446 = vmatpush2.bf16.msra.mxu0 0
  %447 = vmatprep.subr.bf16.mxu0 0
  %448 = vmatpush2.bf16.msra.mxu0 0
  %449 = vmatprep.mubr.bf16.mxu0 0
  %450 = vmatmul.mubr.bf16.gmra.mxu0 %v415
  %v451 = vpop.f32.mrf.mxu0
  %v452 = vadd.f32 0.0, %v451
  %v453 = vpop.f32.mrf.mxu0
  %v454 = vpop.f32.mrf.mxu0
  %v455 = vpop.f32.mrf.mxu0
  %456 = vdwg.mxu0
  %v457 = vadd.f32 %v409, %v452
  %v458 = vxor.u32 %v457, 2147483648
  %v459 = vmul.f32 %v458, 1.442695
  %v460 = vpow.pop %v459
  %v461 = vadd.f32 %v460, 1.0
  %v462 = vrcp.pop %v461
  %v463 = vmul.f32 1.0, %v462
  %v464 = vtanh.pop %v457
  %v465 = vmul.f32 %v463, %v395
  %467 = vrot.lane.b32.xlu0 %v464, 64
  %v468 = vpop.permute.xlu0 %467
  %v470 = vmul.f32 %v463, %v468
  %472 = vrot.lane.b32.xlu0 %v470, 32
  %v473 = vpop.permute.xlu0 %472
  %v475 = vadd.f32 %v465, %v473
  %v476 = vtanh.pop %v475
  %478 = vrot.lane.b32.xlu0 %v476, 64
  %v479 = vpop.permute.xlu0 %478
  %v481 = vmul.f32 %v463, %v479
  %483 = vrot.lane.b32.xlu0 %v481, 32
  %v484 = vpop.permute.xlu0 %483
  %s486 = scalar_lea.vmem %s2, 8
  %487 = vst.msk [vmem:[%s486] sm:$0x3] %vm166, %v484
  %s488 = scalar_lea.vmem %s0, 10
  %v489 = vld [vmem:[%s488] sm:$0x3]
  %v490 = vpack.c.bf16 %v481, %v481
  %492 = vrot.lane.b32.xlu0 %v490, 32
  %v493 = vpop.permute.xlu0 %492
  %v495 = vsel %vm89, %v493, 0
  %497 = vmatprep.subr.bf16.mxu0 0
  %498 = vmatpush1.bf16.msra.mxu0 0
  %499 = vmatprep.subr.bf16.mxu0 0
  %500 = vmatpush1.bf16.msra.mxu0 0
  %501 = vmatprep.subr.bf16.mxu0 0
  %502 = vmatpush1.bf16.msra.mxu0 0
  %503 = vmatprep.subr.bf16.mxu0 0
  %504 = vmatpush1.bf16.msra.mxu0 0
  %505 = vmatprep.subr.bf16.mxu0 0
  %506 = vmatpush1.bf16.msra.mxu0 0
  %507 = vmatprep.subr.bf16.mxu0 0
  %508 = vmatpush1.bf16.msra.mxu0 0
  %509 = vmatprep.subr.bf16.mxu0 0
  %510 = vmatpush1.bf16.msra.mxu0 %v86
  %511 = vmatprep.subr.bf16.mxu0 0
  %512 = vmatpush1.bf16.msra.mxu0 %v85
  %513 = vmatprep.subr.bf16.mxu0 0
  %514 = vmatpush2.bf16.msra.mxu0 0
  %515 = vmatprep.subr.bf16.mxu0 0
  %516 = vmatpush2.bf16.msra.mxu0 0
  %517 = vmatprep.subr.bf16.mxu0 0
  %518 = vmatpush2.bf16.msra.mxu0 0
  %519 = vmatprep.subr.bf16.mxu0 0
  %520 = vmatpush2.bf16.msra.mxu0 0
  %521 = vmatprep.subr.bf16.mxu0 0
  %522 = vmatpush2.bf16.msra.mxu0 0
  %523 = vmatprep.subr.bf16.mxu0 0
  %524 = vmatpush2.bf16.msra.mxu0 0
  %525 = vmatprep.subr.bf16.mxu0 0
  %526 = vmatpush2.bf16.msra.mxu0 0
  %527 = vmatprep.subr.bf16.mxu0 0
  %528 = vmatpush2.bf16.msra.mxu0 0
  %529 = vmatprep.mubr.bf16.mxu0 0
  %530 = vmatmul.mubr.bf16.gmra.mxu0 %v495
  %v531 = vpop.f32.mrf.mxu0
  %v532 = vadd.f32 0.0, %v531
  %v533 = vpop.f32.mrf.mxu0
  %v534 = vpop.f32.mrf.mxu0
  %v535 = vpop.f32.mrf.mxu0
  %536 = vdwg.mxu0
  %v537 = vadd.f32 %v489, %v532
  %v538 = vxor.u32 %v537, 2147483648
  %v539 = vmul.f32 %v538, 1.442695
  %v540 = vpow.pop %v539
  %v541 = vadd.f32 %v540, 1.0
  %v542 = vrcp.pop %v541
  %v543 = vmul.f32 1.0, %v542
  %v544 = vtanh.pop %v537
  %v545 = vmul.f32 %v543, %v475
  %547 = vrot.lane.b32.xlu0 %v544, 64
  %v548 = vpop.permute.xlu0 %547
  %v550 = vmul.f32 %v543, %v548
  %552 = vrot.lane.b32.xlu0 %v550, 32
  %v553 = vpop.permute.xlu0 %552
  %v555 = vadd.f32 %v545, %v553
  %v556 = vtanh.pop %v555
  %558 = vrot.lane.b32.xlu0 %v556, 64
  %v559 = vpop.permute.xlu0 %558
  %v561 = vmul.f32 %v543, %v559
  %563 = vrot.lane.b32.xlu0 %v561, 32
  %v564 = vpop.permute.xlu0 %563
  %s566 = scalar_lea.vmem %s2, 10
  %567 = vst.msk [vmem:[%s566] sm:$0x3] %vm166, %v564
  %s568 = scalar_lea.vmem %s0, 12
  %v569 = vld [vmem:[%s568] sm:$0x3]
  %v570 = vpack.c.bf16 %v561, %v561
  %572 = vrot.lane.b32.xlu0 %v570, 32
  %v573 = vpop.permute.xlu0 %572
  %v575 = vsel %vm89, %v573, 0
  %577 = vmatprep.subr.bf16.mxu0 0
  %578 = vmatpush1.bf16.msra.mxu0 0
  %579 = vmatprep.subr.bf16.mxu0 0
  %580 = vmatpush1.bf16.msra.mxu0 0
  %581 = vmatprep.subr.bf16.mxu0 0
  %582 = vmatpush1.bf16.msra.mxu0 0
  %583 = vmatprep.subr.bf16.mxu0 0
  %584 = vmatpush1.bf16.msra.mxu0 0
  %585 = vmatprep.subr.bf16.mxu0 0
  %586 = vmatpush1.bf16.msra.mxu0 0
  %587 = vmatprep.subr.bf16.mxu0 0
  %588 = vmatpush1.bf16.msra.mxu0 0
  %589 = vmatprep.subr.bf16.mxu0 0
  %590 = vmatpush1.bf16.msra.mxu0 %v86
  %591 = vmatprep.subr.bf16.mxu0 0
  %592 = vmatpush1.bf16.msra.mxu0 %v85
  %593 = vmatprep.subr.bf16.mxu0 0
  %594 = vmatpush2.bf16.msra.mxu0 0
  %595 = vmatprep.subr.bf16.mxu0 0
  %596 = vmatpush2.bf16.msra.mxu0 0
  %597 = vmatprep.subr.bf16.mxu0 0
  %598 = vmatpush2.bf16.msra.mxu0 0
  %599 = vmatprep.subr.bf16.mxu0 0
  %600 = vmatpush2.bf16.msra.mxu0 0
  %601 = vmatprep.subr.bf16.mxu0 0
  %602 = vmatpush2.bf16.msra.mxu0 0
  %603 = vmatprep.subr.bf16.mxu0 0
  %604 = vmatpush2.bf16.msra.mxu0 0
  %605 = vmatprep.subr.bf16.mxu0 0
  %606 = vmatpush2.bf16.msra.mxu0 0
  %607 = vmatprep.subr.bf16.mxu0 0
  %608 = vmatpush2.bf16.msra.mxu0 0
  %609 = vmatprep.mubr.bf16.mxu0 0
  %610 = vmatmul.mubr.bf16.gmra.mxu0 %v575
  %v611 = vpop.f32.mrf.mxu0
  %v612 = vadd.f32 0.0, %v611
  %v613 = vpop.f32.mrf.mxu0
  %v614 = vpop.f32.mrf.mxu0
  %v615 = vpop.f32.mrf.mxu0
  %616 = vdwg.mxu0
  %v617 = vadd.f32 %v569, %v612
  %v618 = vxor.u32 %v617, 2147483648
  %v619 = vmul.f32 %v618, 1.442695
  %v620 = vpow.pop %v619
  %v621 = vadd.f32 %v620, 1.0
  %v622 = vrcp.pop %v621
  %v623 = vmul.f32 1.0, %v622
  %v624 = vtanh.pop %v617
  %v625 = vmul.f32 %v623, %v555
  %627 = vrot.lane.b32.xlu0 %v624, 64
  %v628 = vpop.permute.xlu0 %627
  %v630 = vmul.f32 %v623, %v628
  %632 = vrot.lane.b32.xlu0 %v630, 32
  %v633 = vpop.permute.xlu0 %632
  %v635 = vadd.f32 %v625, %v633
  %v636 = vtanh.pop %v635
  %638 = vrot.lane.b32.xlu0 %v636, 64
  %v639 = vpop.permute.xlu0 %638
  %v641 = vmul.f32 %v623, %v639
  %643 = vrot.lane.b32.xlu0 %v641, 32
  %v644 = vpop.permute.xlu0 %643
  %s646 = scalar_lea.vmem %s2, 12
  %647 = vst.msk [vmem:[%s646] sm:$0x3] %vm166, %v644
  %s648 = scalar_lea.vmem %s0, 14
  %v649 = vld [vmem:[%s648] sm:$0x3]
  %v650 = vpack.c.bf16 %v641, %v641
  %652 = vrot.lane.b32.xlu0 %v650, 32
  %v653 = vpop.permute.xlu0 %652
  %v655 = vsel %vm89, %v653, 0
  %657 = vmatprep.subr.bf16.mxu0 0
  %658 = vmatpush1.bf16.msra.mxu0 0
  %659 = vmatprep.subr.bf16.mxu0 0
  %660 = vmatpush1.bf16.msra.mxu0 0
  %661 = vmatprep.subr.bf16.mxu0 0
  %662 = vmatpush1.bf16.msra.mxu0 0
  %663 = vmatprep.subr.bf16.mxu0 0
  %664 = vmatpush1.bf16.msra.mxu0 0
  %665 = vmatprep.subr.bf16.mxu0 0
  %666 = vmatpush1.bf16.msra.mxu0 0
  %667 = vmatprep.subr.bf16.mxu0 0
  %668 = vmatpush1.bf16.msra.mxu0 0
  %669 = vmatprep.subr.bf16.mxu0 0
  %670 = vmatpush1.bf16.msra.mxu0 %v86
  %671 = vmatprep.subr.bf16.mxu0 0
  %672 = vmatpush1.bf16.msra.mxu0 %v85
  %673 = vmatprep.subr.bf16.mxu0 0
  %674 = vmatpush2.bf16.msra.mxu0 0
  %675 = vmatprep.subr.bf16.mxu0 0
  %676 = vmatpush2.bf16.msra.mxu0 0
  %677 = vmatprep.subr.bf16.mxu0 0
  %678 = vmatpush2.bf16.msra.mxu0 0
  %679 = vmatprep.subr.bf16.mxu0 0
  %680 = vmatpush2.bf16.msra.mxu0 0
  %681 = vmatprep.subr.bf16.mxu0 0
  %682 = vmatpush2.bf16.msra.mxu0 0
  %683 = vmatprep.subr.bf16.mxu0 0
  %684 = vmatpush2.bf16.msra.mxu0 0
  %685 = vmatprep.subr.bf16.mxu0 0
  %686 = vmatpush2.bf16.msra.mxu0 0
  %687 = vmatprep.subr.bf16.mxu0 0
  %688 = vmatpush2.bf16.msra.mxu0 0
  %689 = vmatprep.mubr.bf16.mxu0 0
  %690 = vmatmul.mubr.bf16.gmra.mxu0 %v655
  %v691 = vpop.f32.mrf.mxu0
  %v692 = vadd.f32 0.0, %v691
  %v693 = vpop.f32.mrf.mxu0
  %v694 = vpop.f32.mrf.mxu0
  %v695 = vpop.f32.mrf.mxu0
  %696 = vdwg.mxu0
  %v697 = vadd.f32 %v649, %v692
  %v698 = vxor.u32 %v697, 2147483648
  %v699 = vmul.f32 %v698, 1.442695
  %v700 = vpow.pop %v699
  %v701 = vadd.f32 %v700, 1.0
  %v702 = vrcp.pop %v701
  %v703 = vmul.f32 1.0, %v702
  %v704 = vtanh.pop %v697
  %v705 = vmul.f32 %v703, %v635
  %707 = vrot.lane.b32.xlu0 %v704, 64
  %v708 = vpop.permute.xlu0 %707
  %v710 = vmul.f32 %v703, %v708
  %712 = vrot.lane.b32.xlu0 %v710, 32
  %v713 = vpop.permute.xlu0 %712
  %v715 = vadd.f32 %v705, %v713
  %v716 = vtanh.pop %v715
  %718 = vrot.lane.b32.xlu0 %v716, 64
  %v719 = vpop.permute.xlu0 %718
  %v721 = vmul.f32 %v703, %v719
  %723 = vrot.lane.b32.xlu0 %v721, 32
  %v724 = vpop.permute.xlu0 %723
  %s726 = scalar_lea.vmem %s2, 14
  %727 = vst.msk [vmem:[%s726] sm:$0x3] %vm166, %v724
  %728 = vst.msk [vmem:[#allocation3] sm:$0x3] %vm166, %v724
  %730 = vrot.lane.b32.xlu0 %v715, 96
  %v731 = vpop.permute.xlu0 %730
  %733 = vst.msk [vmem:[#allocation4] sm:$0x3] %vm166, %v731
  // Predicated region
  $region44: #{encoder_forward.5} parent=0 // pred_check
    %p734 = pneg %p13
  $region45: #{encoder_forward.5} parent=0 // pred_check_branch
    %736 = sbr.rel (%p734) target = $region47
  $region46: #{encoder_forward.5} parent=0 // pred_region
    %737 = vst.msk [vmem:[%s3] sm:$0x3] %vm166, %v724
    %738 = vst.msk [vmem:[%s4] sm:$0x3] %vm166, %v731
  $region47: #{encoder_forward.5} parent=0 // pred_fallthru
    _
  // Predicated region
  $region48: #{encoder_forward.5} parent=0 // pred_check
    _
  $region49: #{encoder_forward.5} parent=0 // pred_check_branch
    %740 = sbr.rel (0) target = $region51
  $region50: #{encoder_forward.5} parent=0 // pred_region
    _
  $region51: #{encoder_forward.5} parent=0 // pred_fallthru
    _
  // Predicated region
  $region52: #{encoder_forward.5} parent=0 // pred_check
    _
  $region53: #{encoder_forward.5} parent=0 // pred_check_branch
    %742 = sbr.rel (0) target = $region55
  $region54: #{encoder_forward.5} parent=0 // pred_region
    _
  $region55: #{encoder_forward.5} parent=0 // pred_fallthru
    _
  // Predicated region
  $region56: #{encoder_forward.5} parent=0 // pred_check
    _
  $region57: #{encoder_forward.5} parent=0 // pred_check_branch
    %744 = sbr.rel (0) target = $region59
  $region58: #{encoder_forward.5} parent=0 // pred_region
    _
  $region59: #{encoder_forward.5} parent=0 // pred_fallthru
    _
  // Predicated region
  $region60: #{encoder_forward.5} parent=0 // pred_check
    _
  $region61: #{encoder_forward.5} parent=0 // pred_check_branch
    %746 = sbr.rel (0) target = $region63
  $region62: #{encoder_forward.5} parent=0 // pred_region
    _
  $region63: #{encoder_forward.5} parent=0 // pred_fallthru
    _
  // Predicated region
  $region64: #{encoder_forward.5} parent=0 // pred_check
    _
  $region65: #{encoder_forward.5} parent=0 // pred_check_branch
    %748 = sbr.rel (0) target = $region67
  $region66: #{encoder_forward.5} parent=0 // pred_region
    _
  $region67: #{encoder_forward.5} parent=0 // pred_fallthru
    _
  // Predicated region
  $region68: #{encoder_forward.5} parent=0 // pred_check
    _
  $region69: #{encoder_forward.5} parent=0 // pred_check_branch
    %750 = sbr.rel (0) target = $region71
  $region70: #{encoder_forward.5} parent=0 // pred_region
    _
  $region71: #{encoder_forward.5} parent=0 // pred_fallthru
    _
  %751 = vsyncmov [#allocation5]
  %s752 = vpop.sfrf %751
  %p753 = scmp.eq.s32.totalorder %s752, 0
  %p754 = pneg %p753
  %756 = shalt.err (%p754)

</llo_original>
